<compile_context>
chip_gen: v7x
topology: tpu7x:2x2x1
jax: 0.10.0
libtpu: 0.0.40
codegen_flags: <defaults>
</compile_context>

<pallas_src>
import jax
import jax.numpy as jnp
from jax import lax
from jax.experimental import pallas as pl
from jax.experimental.pallas import tpu as pltpu


# -----------------------------------------------------------------------------
# Fused kernel: stacked LSTM (all layers) + final Linear, all VMEM-resident.
#
# refs layout (all in VMEM, full arrays, no grid):
#   refs[0]                      : x      (T*B, F)      time-major rows: row = t*B + b
#   refs[1 + 3l .. 3 + 3l]       : layer l: w_ih_t (F_in_l, 4H), w_hh_t (H, 4H), bias (1, 4H)
#   refs[-3], refs[-2]           : w_c_t  (H, C), b_c (1, C)
#   refs[-1]                     : out    (B, C)
# -----------------------------------------------------------------------------
def fused_lstm_classifier_kernel(*refs):
    n_layers = (len(refs) - 4) // 3
    x_ref = refs[0]
    wc_ref, bc_ref, out_ref = refs[-3], refs[-2], refs[-1]

    B, _ = out_ref.shape
    H = wc_ref.shape[0]
    G = 4 * H
    TB = x_ref.shape[0]
    T = TB // B

    # Gate-selection mask, hoisted once: lanes [2H, 3H) are the g gate (tanh),
    # everything else (i, f, o) uses sigmoid. Operates on the full 4H-lane vreg.
    lane = lax.broadcasted_iota(jnp.int32, (B, G), 1)
    g_lane = jnp.logical_and(lane >= 2 * H, lane < 3 * H)

    seq = x_ref[...]  # (T*B, F_in) current layer input, time-major
    h = None
    for layer in range(n_layers):
        wih_t = refs[1 + 3 * layer][...]   # (F_in_l, 4H)  pre-transposed
        whh_t = refs[2 + 3 * layer][...]   # (H, 4H)       pre-transposed
        bias = refs[3 + 3 * layer][...]    # (1, 4H)       b_ih + b_hh

        # Hoisted input projection + bias for ALL timesteps: one MXU matmul.
        gx = jnp.dot(seq, wih_t, preferred_element_type=jnp.float32) + bias  # (T*B, 4H)

        h = jnp.zeros((B, H), jnp.float32)
        c = jnp.zeros((B, H), jnp.float32)
        hs = []
        for t in range(T):  # fully unrolled; static, sublane-aligned slices
            gates = gx[t * B:(t + 1) * B, :] + jnp.dot(
                h, whh_t, preferred_element_type=jnp.float32)               # (B, 4H)
            sig = jax.nn.sigmoid(gates)     # full-vreg EUP op
            th = jnp.tanh(gates)            # full-vreg EUP op
            act = jnp.where(g_lane, th, sig)
            i_g = act[:, 0 * H:1 * H]
            f_g = act[:, 1 * H:2 * H]
            g_g = act[:, 2 * H:3 * H]
            o_g = act[:, 3 * H:4 * H]
            c = f_g * c + i_g * g_g
            h = o_g * jnp.tanh(c)
            if layer + 1 < n_layers:
                hs.append(h)
        if layer + 1 < n_layers:
            # Hidden sequence for the next layer, kept on-chip (never hits HBM).
            # NOTE: nn.LSTM dropout between layers is train-only; omitted (inference).
            seq = jnp.concatenate(hs, axis=0)  # (T*B, H), time-major

    # Classifier on hidden[-1] (top layer, last timestep); only (B, C) goes to HBM.
    out_ref[...] = (
        jnp.dot(h, wc_ref[...], preferred_element_type=jnp.float32) + bc_ref[...]
    ).astype(out_ref.dtype)


# -----------------------------------------------------------------------------
# Host wrapper: pad batch, flatten to time-major, single pallas_call.
# -----------------------------------------------------------------------------
def sequence_model_forward(x_btf, params):
    """x_btf: (B, T, F) batch_first input (like the PyTorch module). Returns (B, C) logits."""
    x_btf = x_btf.astype(jnp.float32)
    B, T, F = x_btf.shape
    B_pad = ((B + 7) // 8) * 8  # sublane-align the batch; padded rows are dropped.

    x_p = jnp.zeros((B_pad, T, F), jnp.float32).at[:B, :, :].set(x_btf)
    # One-time time-major flatten (tiny; fuses into the surrounding XLA graph).
    x_tm = jnp.transpose(x_p, (1, 0, 2)).reshape(T * B_pad, F)

    flat_args = [x_tm]
    for (w_ih_t, w_hh_t, b) in params["lstm"]:
        flat_args += [w_ih_t, w_hh_t, b]
    w_c_t, b_c = params["cls"]
    flat_args += [w_c_t, b_c]
    C = w_c_t.shape[1]

    vmem = pl.BlockSpec(memory_space=pltpu.MemorySpace.VMEM)
    out_padded = pl.pallas_call(
        fused_lstm_classifier_kernel,
        out_shape=jax.ShapeDtypeStruct((B_pad, C), jnp.float32),
        in_specs=[vmem] * len(flat_args),
        out_specs=vmem,
    )(*flat_args)
    return out_padded[:B]


# -----------------------------------------------------------------------------
# Parameter construction: PyTorch-style uniform(-k, k), k = 1/sqrt(H),
# stored PRE-TRANSPOSED for the kernel (w_ih: (F_in,4H), w_hh: (H,4H), w_c: (H,C)),
# with the two LSTM biases combined into one (1, 4H) vector.
# -----------------------------------------------------------------------------
def init_params(key, n_features, n_classes, n_hidden, n_layers):
    params = {"lstm": [], "cls": None}
    k_lstm = 1.0 / jnp.sqrt(jnp.float32(n_hidden))
    for layer in range(n_layers):
        f_in = n_features if layer == 0 else n_hidden
        key, k1, k2, k3, k4 = jax.random.split(key, 5)
        w_ih_t = jax.random.uniform(k1, (f_in, 4 * n_hidden), jnp.float32, -k_lstm, k_lstm)
        w_hh_t = jax.random.uniform(k2, (n_hidden, 4 * n_hidden), jnp.float32, -k_lstm, k_lstm)
        b_ih = jax.random.uniform(k3, (4 * n_hidden,), jnp.float32, -k_lstm, k_lstm)
        b_hh = jax.random.uniform(k4, (4 * n_hidden,), jnp.float32, -k_lstm, k_lstm)
        b = (b_ih + b_hh).reshape(1, 4 * n_hidden)
        params["lstm"].append((w_ih_t, w_hh_t, b))
    k_cls = 1.0 / jnp.sqrt(jnp.float32(n_hidden))
    key, k1, k2 = jax.random.split(key, 3)
    w_c_t = jax.random.uniform(k1, (n_hidden, n_classes), jnp.float32, -k_cls, k_cls)
    b_c = jax.random.uniform(k2, (1, n_classes), jnp.float32, -k_cls, k_cls)
    params["cls"] = (w_c_t, b_c)
    return params


if __name__ == "__main__":
    B, T, F = 2, 8, 16          # batch, seq len, n_features
    H, L, C = 32, 3, 4          # n_hidden, n_layers, n_classes

    key = jax.random.PRNGKey(0)
    key, kx, kp = jax.random.split(key, 3)
    x = jax.random.normal(kx, (B, T, F), jnp.float32)
    params = init_params(kp, n_features=F, n_classes=C, n_hidden=H, n_layers=L)

    fwd = jax.jit(sequence_model_forward)
    out = fwd(x, params)
    jax.block_until_ready(out)
    assert out.shape == (B, C), out.shape
    print("KERNEL_OK")
</pallas_src>

<mosaic_0001>
module attributes {stable_mosaic.version = 11 : i64} {
  func.func @fused_lstm_classifier_kernel(%arg0: memref<64x16xf32, #tpu.memory_space<vmem>>, %arg1: memref<16x128xf32, #tpu.memory_space<vmem>>, %arg2: memref<32x128xf32, #tpu.memory_space<vmem>>, %arg3: memref<1x128xf32, #tpu.memory_space<vmem>>, %arg4: memref<32x128xf32, #tpu.memory_space<vmem>>, %arg5: memref<32x128xf32, #tpu.memory_space<vmem>>, %arg6: memref<1x128xf32, #tpu.memory_space<vmem>>, %arg7: memref<32x128xf32, #tpu.memory_space<vmem>>, %arg8: memref<32x128xf32, #tpu.memory_space<vmem>>, %arg9: memref<1x128xf32, #tpu.memory_space<vmem>>, %arg10: memref<32x4xf32, #tpu.memory_space<vmem>>, %arg11: memref<1x4xf32, #tpu.memory_space<vmem>>, %arg12: memref<8x4xf32, #tpu.memory_space<vmem>>) attributes {dimension_semantics = [], scalar_prefetch = 0 : i64, scratch_operands = 0 : i64, tpu.core_type = #tpu.core_type<tc>} {
    %0 = tpu.iota {dimensions = array<i32: 1>} : vector<8x128xi32>
    %c64_i32 = arith.constant 64 : i32
    %1 = vector.broadcast %c64_i32 : i32 to vector<8x128xi32>
    %2 = arith.cmpi sge, %0, %1 : vector<8x128xi32>
    %c96_i32 = arith.constant 96 : i32
    %3 = vector.broadcast %c96_i32 : i32 to vector<8x128xi32>
    %4 = arith.cmpi slt, %0, %3 : vector<8x128xi32>
    %5 = arith.andi %2, %4 : vector<8x128xi1>
    %c0 = arith.constant 0 : index
    %c0_0 = arith.constant 0 : index
    %6 = vector.load %arg0[%c0, %c0_0] : memref<64x16xf32, #tpu.memory_space<vmem>>, vector<64x16xf32>
    %c0_1 = arith.constant 0 : index
    %c0_2 = arith.constant 0 : index
    %7 = vector.load %arg1[%c0_1, %c0_2] : memref<16x128xf32, #tpu.memory_space<vmem>>, vector<16x128xf32>
    %c0_3 = arith.constant 0 : index
    %c0_4 = arith.constant 0 : index
    %8 = vector.load %arg2[%c0_3, %c0_4] : memref<32x128xf32, #tpu.memory_space<vmem>>, vector<32x128xf32>
    %c0_5 = arith.constant 0 : index
    %c0_6 = arith.constant 0 : index
    %9 = vector.load %arg3[%c0_5, %c0_6] : memref<1x128xf32, #tpu.memory_space<vmem>>, vector<1x128xf32>
    %cst = arith.constant dense<0.000000e+00> : vector<64x128xf32>
    %10 = tpu.matmul %6, %7, %cst {dimension_numbers = #tpu.dot_dimension_numbers<[1], [0], [0], [1], [0, 0, 1, 1], [], []>} : vector<64x16xf32>, vector<16x128xf32>, vector<64x128xf32> -> vector<64x128xf32>
    %11 = vector.broadcast %9 : vector<1x128xf32> to vector<64x128xf32>
    %12 = arith.addf %10, %11 : vector<64x128xf32>
    %cst_7 = arith.constant 0.000000e+00 : f32
    %13 = vector.broadcast %cst_7 : f32 to vector<8x32xf32>
    %cst_8 = arith.constant 0.000000e+00 : f32
    %14 = vector.broadcast %cst_8 : f32 to vector<8x32xf32>
    %15 = vector.extract_strided_slice %12 {offsets = [0, 0], sizes = [8, 128], strides = [1, 1]} : vector<64x128xf32> to vector<8x128xf32>
    %cst_9 = arith.constant dense<0.000000e+00> : vector<8x128xf32>
    %16 = tpu.matmul %13, %8, %cst_9 {dimension_numbers = #tpu.dot_dimension_numbers<[1], [0], [0], [1], [0, 0, 1, 1], [], []>} : vector<8x32xf32>, vector<32x128xf32>, vector<8x128xf32> -> vector<8x128xf32>
    %17 = arith.addf %15, %16 : vector<8x128xf32>
    %18 = arith.negf %17 : vector<8x128xf32>
    %19 = math.exp %18 : vector<8x128xf32>
    %cst_10 = arith.constant 1.000000e+00 : f32
    %20 = vector.broadcast %cst_10 : f32 to vector<8x128xf32>
    %21 = arith.addf %20, %19 : vector<8x128xf32>
    %22 = arith.divf %20, %21 : vector<8x128xf32>
    %23 = math.tanh %17 : vector<8x128xf32>
    %24 = arith.select %5, %23, %22 : vector<8x128xi1>, vector<8x128xf32>
    %25 = vector.extract_strided_slice %24 {offsets = [0, 0], sizes = [8, 32], strides = [1, 1]} : vector<8x128xf32> to vector<8x32xf32>
    %26 = vector.extract_strided_slice %24 {offsets = [0, 32], sizes = [8, 32], strides = [1, 1]} : vector<8x128xf32> to vector<8x32xf32>
    %27 = vector.extract_strided_slice %24 {offsets = [0, 64], sizes = [8, 32], strides = [1, 1]} : vector<8x128xf32> to vector<8x32xf32>
    %28 = vector.extract_strided_slice %24 {offsets = [0, 96], sizes = [8, 32], strides = [1, 1]} : vector<8x128xf32> to vector<8x32xf32>
    %29 = arith.mulf %26, %14 : vector<8x32xf32>
    %30 = arith.mulf %25, %27 : vector<8x32xf32>
    %31 = arith.addf %29, %30 : vector<8x32xf32>
    %32 = math.tanh %31 : vector<8x32xf32>
    %33 = arith.mulf %28, %32 : vector<8x32xf32>
    %34 = vector.extract_strided_slice %12 {offsets = [8, 0], sizes = [8, 128], strides = [1, 1]} : vector<64x128xf32> to vector<8x128xf32>
    %cst_11 = arith.constant dense<0.000000e+00> : vector<8x128xf32>
    %35 = tpu.matmul %33, %8, %cst_11 {dimension_numbers = #tpu.dot_dimension_numbers<[1], [0], [0], [1], [0, 0, 1, 1], [], []>} : vector<8x32xf32>, vector<32x128xf32>, vector<8x128xf32> -> vector<8x128xf32>
    %36 = arith.addf %34, %35 : vector<8x128xf32>
    %37 = arith.negf %36 : vector<8x128xf32>
    %38 = math.exp %37 : vector<8x128xf32>
    %cst_12 = arith.constant 1.000000e+00 : f32
    %39 = vector.broadcast %cst_12 : f32 to vector<8x128xf32>
    %40 = arith.addf %39, %38 : vector<8x128xf32>
    %41 = arith.divf %39, %40 : vector<8x128xf32>
    %42 = math.tanh %36 : vector<8x128xf32>
    %43 = arith.select %5, %42, %41 : vector<8x128xi1>, vector<8x128xf32>
    %44 = vector.extract_strided_slice %43 {offsets = [0, 0], sizes = [8, 32], strides = [1, 1]} : vector<8x128xf32> to vector<8x32xf32>
    %45 = vector.extract_strided_slice %43 {offsets = [0, 32], sizes = [8, 32], strides = [1, 1]} : vector<8x128xf32> to vector<8x32xf32>
    %46 = vector.extract_strided_slice %43 {offsets = [0, 64], sizes = [8, 32], strides = [1, 1]} : vector<8x128xf32> to vector<8x32xf32>
    %47 = vector.extract_strided_slice %43 {offsets = [0, 96], sizes = [8, 32], strides = [1, 1]} : vector<8x128xf32> to vector<8x32xf32>
    %48 = arith.mulf %45, %31 : vector<8x32xf32>
    %49 = arith.mulf %44, %46 : vector<8x32xf32>
    %50 = arith.addf %48, %49 : vector<8x32xf32>
    %51 = math.tanh %50 : vector<8x32xf32>
    %52 = arith.mulf %47, %51 : vector<8x32xf32>
    %53 = vector.extract_strided_slice %12 {offsets = [16, 0], sizes = [8, 128], strides = [1, 1]} : vector<64x128xf32> to vector<8x128xf32>
    %cst_13 = arith.constant dense<0.000000e+00> : vector<8x128xf32>
    %54 = tpu.matmul %52, %8, %cst_13 {dimension_numbers = #tpu.dot_dimension_numbers<[1], [0], [0], [1], [0, 0, 1, 1], [], []>} : vector<8x32xf32>, vector<32x128xf32>, vector<8x128xf32> -> vector<8x128xf32>
    %55 = arith.addf %53, %54 : vector<8x128xf32>
    %56 = arith.negf %55 : vector<8x128xf32>
    %57 = math.exp %56 : vector<8x128xf32>
    %cst_14 = arith.constant 1.000000e+00 : f32
    %58 = vector.broadcast %cst_14 : f32 to vector<8x128xf32>
    %59 = arith.addf %58, %57 : vector<8x128xf32>
    %60 = arith.divf %58, %59 : vector<8x128xf32>
    %61 = math.tanh %55 : vector<8x128xf32>
    %62 = arith.select %5, %61, %60 : vector<8x128xi1>, vector<8x128xf32>
    %63 = vector.extract_strided_slice %62 {offsets = [0, 0], sizes = [8, 32], strides = [1, 1]} : vector<8x128xf32> to vector<8x32xf32>
    %64 = vector.extract_strided_slice %62 {offsets = [0, 32], sizes = [8, 32], strides = [1, 1]} : vector<8x128xf32> to vector<8x32xf32>
    %65 = vector.extract_strided_slice %62 {offsets = [0, 64], sizes = [8, 32], strides = [1, 1]} : vector<8x128xf32> to vector<8x32xf32>
    %66 = vector.extract_strided_slice %62 {offsets = [0, 96], sizes = [8, 32], strides = [1, 1]} : vector<8x128xf32> to vector<8x32xf32>
    %67 = arith.mulf %64, %50 : vector<8x32xf32>
    %68 = arith.mulf %63, %65 : vector<8x32xf32>
    %69 = arith.addf %67, %68 : vector<8x32xf32>
    %70 = math.tanh %69 : vector<8x32xf32>
    %71 = arith.mulf %66, %70 : vector<8x32xf32>
    %72 = vector.extract_strided_slice %12 {offsets = [24, 0], sizes = [8, 128], strides = [1, 1]} : vector<64x128xf32> to vector<8x128xf32>
    %cst_15 = arith.constant dense<0.000000e+00> : vector<8x128xf32>
    %73 = tpu.matmul %71, %8, %cst_15 {dimension_numbers = #tpu.dot_dimension_numbers<[1], [0], [0], [1], [0, 0, 1, 1], [], []>} : vector<8x32xf32>, vector<32x128xf32>, vector<8x128xf32> -> vector<8x128xf32>
    %74 = arith.addf %72, %73 : vector<8x128xf32>
    %75 = arith.negf %74 : vector<8x128xf32>
    %76 = math.exp %75 : vector<8x128xf32>
    %cst_16 = arith.constant 1.000000e+00 : f32
    %77 = vector.broadcast %cst_16 : f32 to vector<8x128xf32>
    %78 = arith.addf %77, %76 : vector<8x128xf32>
    %79 = arith.divf %77, %78 : vector<8x128xf32>
    %80 = math.tanh %74 : vector<8x128xf32>
    %81 = arith.select %5, %80, %79 : vector<8x128xi1>, vector<8x128xf32>
    %82 = vector.extract_strided_slice %81 {offsets = [0, 0], sizes = [8, 32], strides = [1, 1]} : vector<8x128xf32> to vector<8x32xf32>
    %83 = vector.extract_strided_slice %81 {offsets = [0, 32], sizes = [8, 32], strides = [1, 1]} : vector<8x128xf32> to vector<8x32xf32>
    %84 = vector.extract_strided_slice %81 {offsets = [0, 64], sizes = [8, 32], strides = [1, 1]} : vector<8x128xf32> to vector<8x32xf32>
    %85 = vector.extract_strided_slice %81 {offsets = [0, 96], sizes = [8, 32], strides = [1, 1]} : vector<8x128xf32> to vector<8x32xf32>
    %86 = arith.mulf %83, %69 : vector<8x32xf32>
    %87 = arith.mulf %82, %84 : vector<8x32xf32>
    %88 = arith.addf %86, %87 : vector<8x32xf32>
    %89 = math.tanh %88 : vector<8x32xf32>
    %90 = arith.mulf %85, %89 : vector<8x32xf32>
    %91 = vector.extract_strided_slice %12 {offsets = [32, 0], sizes = [8, 128], strides = [1, 1]} : vector<64x128xf32> to vector<8x128xf32>
    %cst_17 = arith.constant dense<0.000000e+00> : vector<8x128xf32>
    %92 = tpu.matmul %90, %8, %cst_17 {dimension_numbers = #tpu.dot_dimension_numbers<[1], [0], [0], [1], [0, 0, 1, 1], [], []>} : vector<8x32xf32>, vector<32x128xf32>, vector<8x128xf32> -> vector<8x128xf32>
    %93 = arith.addf %91, %92 : vector<8x128xf32>
    %94 = arith.negf %93 : vector<8x128xf32>
    %95 = math.exp %94 : vector<8x128xf32>
    %cst_18 = arith.constant 1.000000e+00 : f32
    %96 = vector.broadcast %cst_18 : f32 to vector<8x128xf32>
    %97 = arith.addf %96, %95 : vector<8x128xf32>
    %98 = arith.divf %96, %97 : vector<8x128xf32>
    %99 = math.tanh %93 : vector<8x128xf32>
    %100 = arith.select %5, %99, %98 : vector<8x128xi1>, vector<8x128xf32>
    %101 = vector.extract_strided_slice %100 {offsets = [0, 0], sizes = [8, 32], strides = [1, 1]} : vector<8x128xf32> to vector<8x32xf32>
    %102 = vector.extract_strided_slice %100 {offsets = [0, 32], sizes = [8, 32], strides = [1, 1]} : vector<8x128xf32> to vector<8x32xf32>
    %103 = vector.extract_strided_slice %100 {offsets = [0, 64], sizes = [8, 32], strides = [1, 1]} : vector<8x128xf32> to vector<8x32xf32>
    %104 = vector.extract_strided_slice %100 {offsets = [0, 96], sizes = [8, 32], strides = [1, 1]} : vector<8x128xf32> to vector<8x32xf32>
    %105 = arith.mulf %102, %88 : vector<8x32xf32>
    %106 = arith.mulf %101, %103 : vector<8x32xf32>
    %107 = arith.addf %105, %106 : vector<8x32xf32>
    %108 = math.tanh %107 : vector<8x32xf32>
    %109 = arith.mulf %104, %108 : vector<8x32xf32>
    %110 = vector.extract_strided_slice %12 {offsets = [40, 0], sizes = [8, 128], strides = [1, 1]} : vector<64x128xf32> to vector<8x128xf32>
    %cst_19 = arith.constant dense<0.000000e+00> : vector<8x128xf32>
    %111 = tpu.matmul %109, %8, %cst_19 {dimension_numbers = #tpu.dot_dimension_numbers<[1], [0], [0], [1], [0, 0, 1, 1], [], []>} : vector<8x32xf32>, vector<32x128xf32>, vector<8x128xf32> -> vector<8x128xf32>
    %112 = arith.addf %110, %111 : vector<8x128xf32>
    %113 = arith.negf %112 : vector<8x128xf32>
    %114 = math.exp %113 : vector<8x128xf32>
    %cst_20 = arith.constant 1.000000e+00 : f32
    %115 = vector.broadcast %cst_20 : f32 to vector<8x128xf32>
    %116 = arith.addf %115, %114 : vector<8x128xf32>
    %117 = arith.divf %115, %116 : vector<8x128xf32>
    %118 = math.tanh %112 : vector<8x128xf32>
    %119 = arith.select %5, %118, %117 : vector<8x128xi1>, vector<8x128xf32>
    %120 = vector.extract_strided_slice %119 {offsets = [0, 0], sizes = [8, 32], strides = [1, 1]} : vector<8x128xf32> to vector<8x32xf32>
    %121 = vector.extract_strided_slice %119 {offsets = [0, 32], sizes = [8, 32], strides = [1, 1]} : vector<8x128xf32> to vector<8x32xf32>
    %122 = vector.extract_strided_slice %119 {offsets = [0, 64], sizes = [8, 32], strides = [1, 1]} : vector<8x128xf32> to vector<8x32xf32>
    %123 = vector.extract_strided_slice %119 {offsets = [0, 96], sizes = [8, 32], strides = [1, 1]} : vector<8x128xf32> to vector<8x32xf32>
    %124 = arith.mulf %121, %107 : vector<8x32xf32>
    %125 = arith.mulf %120, %122 : vector<8x32xf32>
    %126 = arith.addf %124, %125 : vector<8x32xf32>
    %127 = math.tanh %126 : vector<8x32xf32>
    %128 = arith.mulf %123, %127 : vector<8x32xf32>
    %129 = vector.extract_strided_slice %12 {offsets = [48, 0], sizes = [8, 128], strides = [1, 1]} : vector<64x128xf32> to vector<8x128xf32>
    %cst_21 = arith.constant dense<0.000000e+00> : vector<8x128xf32>
    %130 = tpu.matmul %128, %8, %cst_21 {dimension_numbers = #tpu.dot_dimension_numbers<[1], [0], [0], [1], [0, 0, 1, 1], [], []>} : vector<8x32xf32>, vector<32x128xf32>, vector<8x128xf32> -> vector<8x128xf32>
    %131 = arith.addf %129, %130 : vector<8x128xf32>
    %132 = arith.negf %131 : vector<8x128xf32>
    %133 = math.exp %132 : vector<8x128xf32>
    %cst_22 = arith.constant 1.000000e+00 : f32
    %134 = vector.broadcast %cst_22 : f32 to vector<8x128xf32>
    %135 = arith.addf %134, %133 : vector<8x128xf32>
    %136 = arith.divf %134, %135 : vector<8x128xf32>
    %137 = math.tanh %131 : vector<8x128xf32>
    %138 = arith.select %5, %137, %136 : vector<8x128xi1>, vector<8x128xf32>
    %139 = vector.extract_strided_slice %138 {offsets = [0, 0], sizes = [8, 32], strides = [1, 1]} : vector<8x128xf32> to vector<8x32xf32>
    %140 = vector.extract_strided_slice %138 {offsets = [0, 32], sizes = [8, 32], strides = [1, 1]} : vector<8x128xf32> to vector<8x32xf32>
    %141 = vector.extract_strided_slice %138 {offsets = [0, 64], sizes = [8, 32], strides = [1, 1]} : vector<8x128xf32> to vector<8x32xf32>
    %142 = vector.extract_strided_slice %138 {offsets = [0, 96], sizes = [8, 32], strides = [1, 1]} : vector<8x128xf32> to vector<8x32xf32>
    %143 = arith.mulf %140, %126 : vector<8x32xf32>
    %144 = arith.mulf %139, %141 : vector<8x32xf32>
    %145 = arith.addf %143, %144 : vector<8x32xf32>
    %146 = math.tanh %145 : vector<8x32xf32>
    %147 = arith.mulf %142, %146 : vector<8x32xf32>
    %148 = vector.extract_strided_slice %12 {offsets = [56, 0], sizes = [8, 128], strides = [1, 1]} : vector<64x128xf32> to vector<8x128xf32>
    %cst_23 = arith.constant dense<0.000000e+00> : vector<8x128xf32>
    %149 = tpu.matmul %147, %8, %cst_23 {dimension_numbers = #tpu.dot_dimension_numbers<[1], [0], [0], [1], [0, 0, 1, 1], [], []>} : vector<8x32xf32>, vector<32x128xf32>, vector<8x128xf32> -> vector<8x128xf32>
    %150 = arith.addf %148, %149 : vector<8x128xf32>
    %151 = arith.negf %150 : vector<8x128xf32>
    %152 = math.exp %151 : vector<8x128xf32>
    %cst_24 = arith.constant 1.000000e+00 : f32
    %153 = vector.broadcast %cst_24 : f32 to vector<8x128xf32>
    %154 = arith.addf %153, %152 : vector<8x128xf32>
    %155 = arith.divf %153, %154 : vector<8x128xf32>
    %156 = math.tanh %150 : vector<8x128xf32>
    %157 = arith.select %5, %156, %155 : vector<8x128xi1>, vector<8x128xf32>
    %158 = vector.extract_strided_slice %157 {offsets = [0, 0], sizes = [8, 32], strides = [1, 1]} : vector<8x128xf32> to vector<8x32xf32>
    %159 = vector.extract_strided_slice %157 {offsets = [0, 32], sizes = [8, 32], strides = [1, 1]} : vector<8x128xf32> to vector<8x32xf32>
    %160 = vector.extract_strided_slice %157 {offsets = [0, 64], sizes = [8, 32], strides = [1, 1]} : vector<8x128xf32> to vector<8x32xf32>
    %161 = vector.extract_strided_slice %157 {offsets = [0, 96], sizes = [8, 32], strides = [1, 1]} : vector<8x128xf32> to vector<8x32xf32>
    %162 = arith.mulf %159, %145 : vector<8x32xf32>
    %163 = arith.mulf %158, %160 : vector<8x32xf32>
    %164 = arith.addf %162, %163 : vector<8x32xf32>
    %165 = math.tanh %164 : vector<8x32xf32>
    %166 = arith.mulf %161, %165 : vector<8x32xf32>
    %167 = tpu.concatenate %33, %52, %71, %90, %109, %128, %147, %166 in 0 : vector<8x32xf32>, vector<8x32xf32>, vector<8x32xf32>, vector<8x32xf32>, vector<8x32xf32>, vector<8x32xf32>, vector<8x32xf32>, vector<8x32xf32> -> vector<64x32xf32>
    %c0_25 = arith.constant 0 : index
    %c0_26 = arith.constant 0 : index
    %168 = vector.load %arg4[%c0_25, %c0_26] : memref<32x128xf32, #tpu.memory_space<vmem>>, vector<32x128xf32>
    %c0_27 = arith.constant 0 : index
    %c0_28 = arith.constant 0 : index
    %169 = vector.load %arg5[%c0_27, %c0_28] : memref<32x128xf32, #tpu.memory_space<vmem>>, vector<32x128xf32>
    %c0_29 = arith.constant 0 : index
    %c0_30 = arith.constant 0 : index
    %170 = vector.load %arg6[%c0_29, %c0_30] : memref<1x128xf32, #tpu.memory_space<vmem>>, vector<1x128xf32>
    %cst_31 = arith.constant dense<0.000000e+00> : vector<64x128xf32>
    %171 = tpu.matmul %167, %168, %cst_31 {dimension_numbers = #tpu.dot_dimension_numbers<[1], [0], [0], [1], [0, 0, 1, 1], [], []>} : vector<64x32xf32>, vector<32x128xf32>, vector<64x128xf32> -> vector<64x128xf32>
    %172 = vector.broadcast %170 : vector<1x128xf32> to vector<64x128xf32>
    %173 = arith.addf %171, %172 : vector<64x128xf32>
    %cst_32 = arith.constant 0.000000e+00 : f32
    %174 = vector.broadcast %cst_32 : f32 to vector<8x32xf32>
    %cst_33 = arith.constant 0.000000e+00 : f32
    %175 = vector.broadcast %cst_33 : f32 to vector<8x32xf32>
    %176 = vector.extract_strided_slice %173 {offsets = [0, 0], sizes = [8, 128], strides = [1, 1]} : vector<64x128xf32> to vector<8x128xf32>
    %cst_34 = arith.constant dense<0.000000e+00> : vector<8x128xf32>
    %177 = tpu.matmul %174, %169, %cst_34 {dimension_numbers = #tpu.dot_dimension_numbers<[1], [0], [0], [1], [0, 0, 1, 1], [], []>} : vector<8x32xf32>, vector<32x128xf32>, vector<8x128xf32> -> vector<8x128xf32>
    %178 = arith.addf %176, %177 : vector<8x128xf32>
    %179 = arith.negf %178 : vector<8x128xf32>
    %180 = math.exp %179 : vector<8x128xf32>
    %cst_35 = arith.constant 1.000000e+00 : f32
    %181 = vector.broadcast %cst_35 : f32 to vector<8x128xf32>
    %182 = arith.addf %181, %180 : vector<8x128xf32>
    %183 = arith.divf %181, %182 : vector<8x128xf32>
    %184 = math.tanh %178 : vector<8x128xf32>
    %185 = arith.select %5, %184, %183 : vector<8x128xi1>, vector<8x128xf32>
    %186 = vector.extract_strided_slice %185 {offsets = [0, 0], sizes = [8, 32], strides = [1, 1]} : vector<8x128xf32> to vector<8x32xf32>
    %187 = vector.extract_strided_slice %185 {offsets = [0, 32], sizes = [8, 32], strides = [1, 1]} : vector<8x128xf32> to vector<8x32xf32>
    %188 = vector.extract_strided_slice %185 {offsets = [0, 64], sizes = [8, 32], strides = [1, 1]} : vector<8x128xf32> to vector<8x32xf32>
    %189 = vector.extract_strided_slice %185 {offsets = [0, 96], sizes = [8, 32], strides = [1, 1]} : vector<8x128xf32> to vector<8x32xf32>
    %190 = arith.mulf %187, %175 : vector<8x32xf32>
    %191 = arith.mulf %186, %188 : vector<8x32xf32>
    %192 = arith.addf %190, %191 : vector<8x32xf32>
    %193 = math.tanh %192 : vector<8x32xf32>
    %194 = arith.mulf %189, %193 : vector<8x32xf32>
    %195 = vector.extract_strided_slice %173 {offsets = [8, 0], sizes = [8, 128], strides = [1, 1]} : vector<64x128xf32> to vector<8x128xf32>
    %cst_36 = arith.constant dense<0.000000e+00> : vector<8x128xf32>
    %196 = tpu.matmul %194, %169, %cst_36 {dimension_numbers = #tpu.dot_dimension_numbers<[1], [0], [0], [1], [0, 0, 1, 1], [], []>} : vector<8x32xf32>, vector<32x128xf32>, vector<8x128xf32> -> vector<8x128xf32>
    %197 = arith.addf %195, %196 : vector<8x128xf32>
    %198 = arith.negf %197 : vector<8x128xf32>
    %199 = math.exp %198 : vector<8x128xf32>
    %cst_37 = arith.constant 1.000000e+00 : f32
    %200 = vector.broadcast %cst_37 : f32 to vector<8x128xf32>
    %201 = arith.addf %200, %199 : vector<8x128xf32>
    %202 = arith.divf %200, %201 : vector<8x128xf32>
    %203 = math.tanh %197 : vector<8x128xf32>
    %204 = arith.select %5, %203, %202 : vector<8x128xi1>, vector<8x128xf32>
    %205 = vector.extract_strided_slice %204 {offsets = [0, 0], sizes = [8, 32], strides = [1, 1]} : vector<8x128xf32> to vector<8x32xf32>
    %206 = vector.extract_strided_slice %204 {offsets = [0, 32], sizes = [8, 32], strides = [1, 1]} : vector<8x128xf32> to vector<8x32xf32>
    %207 = vector.extract_strided_slice %204 {offsets = [0, 64], sizes = [8, 32], strides = [1, 1]} : vector<8x128xf32> to vector<8x32xf32>
    %208 = vector.extract_strided_slice %204 {offsets = [0, 96], sizes = [8, 32], strides = [1, 1]} : vector<8x128xf32> to vector<8x32xf32>
    %209 = arith.mulf %206, %192 : vector<8x32xf32>
    %210 = arith.mulf %205, %207 : vector<8x32xf32>
    %211 = arith.addf %209, %210 : vector<8x32xf32>
    %212 = math.tanh %211 : vector<8x32xf32>
    %213 = arith.mulf %208, %212 : vector<8x32xf32>
    %214 = vector.extract_strided_slice %173 {offsets = [16, 0], sizes = [8, 128], strides = [1, 1]} : vector<64x128xf32> to vector<8x128xf32>
    %cst_38 = arith.constant dense<0.000000e+00> : vector<8x128xf32>
    %215 = tpu.matmul %213, %169, %cst_38 {dimension_numbers = #tpu.dot_dimension_numbers<[1], [0], [0], [1], [0, 0, 1, 1], [], []>} : vector<8x32xf32>, vector<32x128xf32>, vector<8x128xf32> -> vector<8x128xf32>
    %216 = arith.addf %214, %215 : vector<8x128xf32>
    %217 = arith.negf %216 : vector<8x128xf32>
    %218 = math.exp %217 : vector<8x128xf32>
    %cst_39 = arith.constant 1.000000e+00 : f32
    %219 = vector.broadcast %cst_39 : f32 to vector<8x128xf32>
    %220 = arith.addf %219, %218 : vector<8x128xf32>
    %221 = arith.divf %219, %220 : vector<8x128xf32>
    %222 = math.tanh %216 : vector<8x128xf32>
    %223 = arith.select %5, %222, %221 : vector<8x128xi1>, vector<8x128xf32>
    %224 = vector.extract_strided_slice %223 {offsets = [0, 0], sizes = [8, 32], strides = [1, 1]} : vector<8x128xf32> to vector<8x32xf32>
    %225 = vector.extract_strided_slice %223 {offsets = [0, 32], sizes = [8, 32], strides = [1, 1]} : vector<8x128xf32> to vector<8x32xf32>
    %226 = vector.extract_strided_slice %223 {offsets = [0, 64], sizes = [8, 32], strides = [1, 1]} : vector<8x128xf32> to vector<8x32xf32>
    %227 = vector.extract_strided_slice %223 {offsets = [0, 96], sizes = [8, 32], strides = [1, 1]} : vector<8x128xf32> to vector<8x32xf32>
    %228 = arith.mulf %225, %211 : vector<8x32xf32>
    %229 = arith.mulf %224, %226 : vector<8x32xf32>
    %230 = arith.addf %228, %229 : vector<8x32xf32>
    %231 = math.tanh %230 : vector<8x32xf32>
    %232 = arith.mulf %227, %231 : vector<8x32xf32>
    %233 = vector.extract_strided_slice %173 {offsets = [24, 0], sizes = [8, 128], strides = [1, 1]} : vector<64x128xf32> to vector<8x128xf32>
    %cst_40 = arith.constant dense<0.000000e+00> : vector<8x128xf32>
    %234 = tpu.matmul %232, %169, %cst_40 {dimension_numbers = #tpu.dot_dimension_numbers<[1], [0], [0], [1], [0, 0, 1, 1], [], []>} : vector<8x32xf32>, vector<32x128xf32>, vector<8x128xf32> -> vector<8x128xf32>
    %235 = arith.addf %233, %234 : vector<8x128xf32>
    %236 = arith.negf %235 : vector<8x128xf32>
    %237 = math.exp %236 : vector<8x128xf32>
    %cst_41 = arith.constant 1.000000e+00 : f32
    %238 = vector.broadcast %cst_41 : f32 to vector<8x128xf32>
    %239 = arith.addf %238, %237 : vector<8x128xf32>
    %240 = arith.divf %238, %239 : vector<8x128xf32>
    %241 = math.tanh %235 : vector<8x128xf32>
    %242 = arith.select %5, %241, %240 : vector<8x128xi1>, vector<8x128xf32>
    %243 = vector.extract_strided_slice %242 {offsets = [0, 0], sizes = [8, 32], strides = [1, 1]} : vector<8x128xf32> to vector<8x32xf32>
    %244 = vector.extract_strided_slice %242 {offsets = [0, 32], sizes = [8, 32], strides = [1, 1]} : vector<8x128xf32> to vector<8x32xf32>
    %245 = vector.extract_strided_slice %242 {offsets = [0, 64], sizes = [8, 32], strides = [1, 1]} : vector<8x128xf32> to vector<8x32xf32>
    %246 = vector.extract_strided_slice %242 {offsets = [0, 96], sizes = [8, 32], strides = [1, 1]} : vector<8x128xf32> to vector<8x32xf32>
    %247 = arith.mulf %244, %230 : vector<8x32xf32>
    %248 = arith.mulf %243, %245 : vector<8x32xf32>
    %249 = arith.addf %247, %248 : vector<8x32xf32>
    %250 = math.tanh %249 : vector<8x32xf32>
    %251 = arith.mulf %246, %250 : vector<8x32xf32>
    %252 = vector.extract_strided_slice %173 {offsets = [32, 0], sizes = [8, 128], strides = [1, 1]} : vector<64x128xf32> to vector<8x128xf32>
    %cst_42 = arith.constant dense<0.000000e+00> : vector<8x128xf32>
    %253 = tpu.matmul %251, %169, %cst_42 {dimension_numbers = #tpu.dot_dimension_numbers<[1], [0], [0], [1], [0, 0, 1, 1], [], []>} : vector<8x32xf32>, vector<32x128xf32>, vector<8x128xf32> -> vector<8x128xf32>
    %254 = arith.addf %252, %253 : vector<8x128xf32>
    %255 = arith.negf %254 : vector<8x128xf32>
    %256 = math.exp %255 : vector<8x128xf32>
    %cst_43 = arith.constant 1.000000e+00 : f32
    %257 = vector.broadcast %cst_43 : f32 to vector<8x128xf32>
    %258 = arith.addf %257, %256 : vector<8x128xf32>
    %259 = arith.divf %257, %258 : vector<8x128xf32>
    %260 = math.tanh %254 : vector<8x128xf32>
    %261 = arith.select %5, %260, %259 : vector<8x128xi1>, vector<8x128xf32>
    %262 = vector.extract_strided_slice %261 {offsets = [0, 0], sizes = [8, 32], strides = [1, 1]} : vector<8x128xf32> to vector<8x32xf32>
    %263 = vector.extract_strided_slice %261 {offsets = [0, 32], sizes = [8, 32], strides = [1, 1]} : vector<8x128xf32> to vector<8x32xf32>
    %264 = vector.extract_strided_slice %261 {offsets = [0, 64], sizes = [8, 32], strides = [1, 1]} : vector<8x128xf32> to vector<8x32xf32>
    %265 = vector.extract_strided_slice %261 {offsets = [0, 96], sizes = [8, 32], strides = [1, 1]} : vector<8x128xf32> to vector<8x32xf32>
    %266 = arith.mulf %263, %249 : vector<8x32xf32>
    %267 = arith.mulf %262, %264 : vector<8x32xf32>
    %268 = arith.addf %266, %267 : vector<8x32xf32>
    %269 = math.tanh %268 : vector<8x32xf32>
    %270 = arith.mulf %265, %269 : vector<8x32xf32>
    %271 = vector.extract_strided_slice %173 {offsets = [40, 0], sizes = [8, 128], strides = [1, 1]} : vector<64x128xf32> to vector<8x128xf32>
    %cst_44 = arith.constant dense<0.000000e+00> : vector<8x128xf32>
    %272 = tpu.matmul %270, %169, %cst_44 {dimension_numbers = #tpu.dot_dimension_numbers<[1], [0], [0], [1], [0, 0, 1, 1], [], []>} : vector<8x32xf32>, vector<32x128xf32>, vector<8x128xf32> -> vector<8x128xf32>
    %273 = arith.addf %271, %272 : vector<8x128xf32>
    %274 = arith.negf %273 : vector<8x128xf32>
    %275 = math.exp %274 : vector<8x128xf32>
    %cst_45 = arith.constant 1.000000e+00 : f32
    %276 = vector.broadcast %cst_45 : f32 to vector<8x128xf32>
    %277 = arith.addf %276, %275 : vector<8x128xf32>
    %278 = arith.divf %276, %277 : vector<8x128xf32>
    %279 = math.tanh %273 : vector<8x128xf32>
    %280 = arith.select %5, %279, %278 : vector<8x128xi1>, vector<8x128xf32>
    %281 = vector.extract_strided_slice %280 {offsets = [0, 0], sizes = [8, 32], strides = [1, 1]} : vector<8x128xf32> to vector<8x32xf32>
    %282 = vector.extract_strided_slice %280 {offsets = [0, 32], sizes = [8, 32], strides = [1, 1]} : vector<8x128xf32> to vector<8x32xf32>
    %283 = vector.extract_strided_slice %280 {offsets = [0, 64], sizes = [8, 32], strides = [1, 1]} : vector<8x128xf32> to vector<8x32xf32>
    %284 = vector.extract_strided_slice %280 {offsets = [0, 96], sizes = [8, 32], strides = [1, 1]} : vector<8x128xf32> to vector<8x32xf32>
    %285 = arith.mulf %282, %268 : vector<8x32xf32>
    %286 = arith.mulf %281, %283 : vector<8x32xf32>
    %287 = arith.addf %285, %286 : vector<8x32xf32>
    %288 = math.tanh %287 : vector<8x32xf32>
    %289 = arith.mulf %284, %288 : vector<8x32xf32>
    %290 = vector.extract_strided_slice %173 {offsets = [48, 0], sizes = [8, 128], strides = [1, 1]} : vector<64x128xf32> to vector<8x128xf32>
    %cst_46 = arith.constant dense<0.000000e+00> : vector<8x128xf32>
    %291 = tpu.matmul %289, %169, %cst_46 {dimension_numbers = #tpu.dot_dimension_numbers<[1], [0], [0], [1], [0, 0, 1, 1], [], []>} : vector<8x32xf32>, vector<32x128xf32>, vector<8x128xf32> -> vector<8x128xf32>
    %292 = arith.addf %290, %291 : vector<8x128xf32>
    %293 = arith.negf %292 : vector<8x128xf32>
    %294 = math.exp %293 : vector<8x128xf32>
    %cst_47 = arith.constant 1.000000e+00 : f32
    %295 = vector.broadcast %cst_47 : f32 to vector<8x128xf32>
    %296 = arith.addf %295, %294 : vector<8x128xf32>
    %297 = arith.divf %295, %296 : vector<8x128xf32>
    %298 = math.tanh %292 : vector<8x128xf32>
    %299 = arith.select %5, %298, %297 : vector<8x128xi1>, vector<8x128xf32>
    %300 = vector.extract_strided_slice %299 {offsets = [0, 0], sizes = [8, 32], strides = [1, 1]} : vector<8x128xf32> to vector<8x32xf32>
    %301 = vector.extract_strided_slice %299 {offsets = [0, 32], sizes = [8, 32], strides = [1, 1]} : vector<8x128xf32> to vector<8x32xf32>
    %302 = vector.extract_strided_slice %299 {offsets = [0, 64], sizes = [8, 32], strides = [1, 1]} : vector<8x128xf32> to vector<8x32xf32>
    %303 = vector.extract_strided_slice %299 {offsets = [0, 96], sizes = [8, 32], strides = [1, 1]} : vector<8x128xf32> to vector<8x32xf32>
    %304 = arith.mulf %301, %287 : vector<8x32xf32>
    %305 = arith.mulf %300, %302 : vector<8x32xf32>
    %306 = arith.addf %304, %305 : vector<8x32xf32>
    %307 = math.tanh %306 : vector<8x32xf32>
    %308 = arith.mulf %303, %307 : vector<8x32xf32>
    %309 = vector.extract_strided_slice %173 {offsets = [56, 0], sizes = [8, 128], strides = [1, 1]} : vector<64x128xf32> to vector<8x128xf32>
    %cst_48 = arith.constant dense<0.000000e+00> : vector<8x128xf32>
    %310 = tpu.matmul %308, %169, %cst_48 {dimension_numbers = #tpu.dot_dimension_numbers<[1], [0], [0], [1], [0, 0, 1, 1], [], []>} : vector<8x32xf32>, vector<32x128xf32>, vector<8x128xf32> -> vector<8x128xf32>
    %311 = arith.addf %309, %310 : vector<8x128xf32>
    %312 = arith.negf %311 : vector<8x128xf32>
    %313 = math.exp %312 : vector<8x128xf32>
    %cst_49 = arith.constant 1.000000e+00 : f32
    %314 = vector.broadcast %cst_49 : f32 to vector<8x128xf32>
    %315 = arith.addf %314, %313 : vector<8x128xf32>
    %316 = arith.divf %314, %315 : vector<8x128xf32>
    %317 = math.tanh %311 : vector<8x128xf32>
    %318 = arith.select %5, %317, %316 : vector<8x128xi1>, vector<8x128xf32>
    %319 = vector.extract_strided_slice %318 {offsets = [0, 0], sizes = [8, 32], strides = [1, 1]} : vector<8x128xf32> to vector<8x32xf32>
    %320 = vector.extract_strided_slice %318 {offsets = [0, 32], sizes = [8, 32], strides = [1, 1]} : vector<8x128xf32> to vector<8x32xf32>
    %321 = vector.extract_strided_slice %318 {offsets = [0, 64], sizes = [8, 32], strides = [1, 1]} : vector<8x128xf32> to vector<8x32xf32>
    %322 = vector.extract_strided_slice %318 {offsets = [0, 96], sizes = [8, 32], strides = [1, 1]} : vector<8x128xf32> to vector<8x32xf32>
    %323 = arith.mulf %320, %306 : vector<8x32xf32>
    %324 = arith.mulf %319, %321 : vector<8x32xf32>
    %325 = arith.addf %323, %324 : vector<8x32xf32>
    %326 = math.tanh %325 : vector<8x32xf32>
    %327 = arith.mulf %322, %326 : vector<8x32xf32>
    %328 = tpu.concatenate %194, %213, %232, %251, %270, %289, %308, %327 in 0 : vector<8x32xf32>, vector<8x32xf32>, vector<8x32xf32>, vector<8x32xf32>, vector<8x32xf32>, vector<8x32xf32>, vector<8x32xf32>, vector<8x32xf32> -> vector<64x32xf32>
    %c0_50 = arith.constant 0 : index
    %c0_51 = arith.constant 0 : index
    %329 = vector.load %arg7[%c0_50, %c0_51] : memref<32x128xf32, #tpu.memory_space<vmem>>, vector<32x128xf32>
    %c0_52 = arith.constant 0 : index
    %c0_53 = arith.constant 0 : index
    %330 = vector.load %arg8[%c0_52, %c0_53] : memref<32x128xf32, #tpu.memory_space<vmem>>, vector<32x128xf32>
    %c0_54 = arith.constant 0 : index
    %c0_55 = arith.constant 0 : index
    %331 = vector.load %arg9[%c0_54, %c0_55] : memref<1x128xf32, #tpu.memory_space<vmem>>, vector<1x128xf32>
    %cst_56 = arith.constant dense<0.000000e+00> : vector<64x128xf32>
    %332 = tpu.matmul %328, %329, %cst_56 {dimension_numbers = #tpu.dot_dimension_numbers<[1], [0], [0], [1], [0, 0, 1, 1], [], []>} : vector<64x32xf32>, vector<32x128xf32>, vector<64x128xf32> -> vector<64x128xf32>
    %333 = vector.broadcast %331 : vector<1x128xf32> to vector<64x128xf32>
    %334 = arith.addf %332, %333 : vector<64x128xf32>
    %cst_57 = arith.constant 0.000000e+00 : f32
    %335 = vector.broadcast %cst_57 : f32 to vector<8x32xf32>
    %cst_58 = arith.constant 0.000000e+00 : f32
    %336 = vector.broadcast %cst_58 : f32 to vector<8x32xf32>
    %337 = vector.extract_strided_slice %334 {offsets = [0, 0], sizes = [8, 128], strides = [1, 1]} : vector<64x128xf32> to vector<8x128xf32>
    %cst_59 = arith.constant dense<0.000000e+00> : vector<8x128xf32>
    %338 = tpu.matmul %335, %330, %cst_59 {dimension_numbers = #tpu.dot_dimension_numbers<[1], [0], [0], [1], [0, 0, 1, 1], [], []>} : vector<8x32xf32>, vector<32x128xf32>, vector<8x128xf32> -> vector<8x128xf32>
    %339 = arith.addf %337, %338 : vector<8x128xf32>
    %340 = arith.negf %339 : vector<8x128xf32>
    %341 = math.exp %340 : vector<8x128xf32>
    %cst_60 = arith.constant 1.000000e+00 : f32
    %342 = vector.broadcast %cst_60 : f32 to vector<8x128xf32>
    %343 = arith.addf %342, %341 : vector<8x128xf32>
    %344 = arith.divf %342, %343 : vector<8x128xf32>
    %345 = math.tanh %339 : vector<8x128xf32>
    %346 = arith.select %5, %345, %344 : vector<8x128xi1>, vector<8x128xf32>
    %347 = vector.extract_strided_slice %346 {offsets = [0, 0], sizes = [8, 32], strides = [1, 1]} : vector<8x128xf32> to vector<8x32xf32>
    %348 = vector.extract_strided_slice %346 {offsets = [0, 32], sizes = [8, 32], strides = [1, 1]} : vector<8x128xf32> to vector<8x32xf32>
    %349 = vector.extract_strided_slice %346 {offsets = [0, 64], sizes = [8, 32], strides = [1, 1]} : vector<8x128xf32> to vector<8x32xf32>
    %350 = vector.extract_strided_slice %346 {offsets = [0, 96], sizes = [8, 32], strides = [1, 1]} : vector<8x128xf32> to vector<8x32xf32>
    %351 = arith.mulf %348, %336 : vector<8x32xf32>
    %352 = arith.mulf %347, %349 : vector<8x32xf32>
    %353 = arith.addf %351, %352 : vector<8x32xf32>
    %354 = math.tanh %353 : vector<8x32xf32>
    %355 = arith.mulf %350, %354 : vector<8x32xf32>
    %356 = vector.extract_strided_slice %334 {offsets = [8, 0], sizes = [8, 128], strides = [1, 1]} : vector<64x128xf32> to vector<8x128xf32>
    %cst_61 = arith.constant dense<0.000000e+00> : vector<8x128xf32>
    %357 = tpu.matmul %355, %330, %cst_61 {dimension_numbers = #tpu.dot_dimension_numbers<[1], [0], [0], [1], [0, 0, 1, 1], [], []>} : vector<8x32xf32>, vector<32x128xf32>, vector<8x128xf32> -> vector<8x128xf32>
    %358 = arith.addf %356, %357 : vector<8x128xf32>
    %359 = arith.negf %358 : vector<8x128xf32>
    %360 = math.exp %359 : vector<8x128xf32>
    %cst_62 = arith.constant 1.000000e+00 : f32
    %361 = vector.broadcast %cst_62 : f32 to vector<8x128xf32>
    %362 = arith.addf %361, %360 : vector<8x128xf32>
    %363 = arith.divf %361, %362 : vector<8x128xf32>
    %364 = math.tanh %358 : vector<8x128xf32>
    %365 = arith.select %5, %364, %363 : vector<8x128xi1>, vector<8x128xf32>
    %366 = vector.extract_strided_slice %365 {offsets = [0, 0], sizes = [8, 32], strides = [1, 1]} : vector<8x128xf32> to vector<8x32xf32>
    %367 = vector.extract_strided_slice %365 {offsets = [0, 32], sizes = [8, 32], strides = [1, 1]} : vector<8x128xf32> to vector<8x32xf32>
    %368 = vector.extract_strided_slice %365 {offsets = [0, 64], sizes = [8, 32], strides = [1, 1]} : vector<8x128xf32> to vector<8x32xf32>
    %369 = vector.extract_strided_slice %365 {offsets = [0, 96], sizes = [8, 32], strides = [1, 1]} : vector<8x128xf32> to vector<8x32xf32>
    %370 = arith.mulf %367, %353 : vector<8x32xf32>
    %371 = arith.mulf %366, %368 : vector<8x32xf32>
    %372 = arith.addf %370, %371 : vector<8x32xf32>
    %373 = math.tanh %372 : vector<8x32xf32>
    %374 = arith.mulf %369, %373 : vector<8x32xf32>
    %375 = vector.extract_strided_slice %334 {offsets = [16, 0], sizes = [8, 128], strides = [1, 1]} : vector<64x128xf32> to vector<8x128xf32>
    %cst_63 = arith.constant dense<0.000000e+00> : vector<8x128xf32>
    %376 = tpu.matmul %374, %330, %cst_63 {dimension_numbers = #tpu.dot_dimension_numbers<[1], [0], [0], [1], [0, 0, 1, 1], [], []>} : vector<8x32xf32>, vector<32x128xf32>, vector<8x128xf32> -> vector<8x128xf32>
    %377 = arith.addf %375, %376 : vector<8x128xf32>
    %378 = arith.negf %377 : vector<8x128xf32>
    %379 = math.exp %378 : vector<8x128xf32>
    %cst_64 = arith.constant 1.000000e+00 : f32
    %380 = vector.broadcast %cst_64 : f32 to vector<8x128xf32>
    %381 = arith.addf %380, %379 : vector<8x128xf32>
    %382 = arith.divf %380, %381 : vector<8x128xf32>
    %383 = math.tanh %377 : vector<8x128xf32>
    %384 = arith.select %5, %383, %382 : vector<8x128xi1>, vector<8x128xf32>
    %385 = vector.extract_strided_slice %384 {offsets = [0, 0], sizes = [8, 32], strides = [1, 1]} : vector<8x128xf32> to vector<8x32xf32>
    %386 = vector.extract_strided_slice %384 {offsets = [0, 32], sizes = [8, 32], strides = [1, 1]} : vector<8x128xf32> to vector<8x32xf32>
    %387 = vector.extract_strided_slice %384 {offsets = [0, 64], sizes = [8, 32], strides = [1, 1]} : vector<8x128xf32> to vector<8x32xf32>
    %388 = vector.extract_strided_slice %384 {offsets = [0, 96], sizes = [8, 32], strides = [1, 1]} : vector<8x128xf32> to vector<8x32xf32>
    %389 = arith.mulf %386, %372 : vector<8x32xf32>
    %390 = arith.mulf %385, %387 : vector<8x32xf32>
    %391 = arith.addf %389, %390 : vector<8x32xf32>
    %392 = math.tanh %391 : vector<8x32xf32>
    %393 = arith.mulf %388, %392 : vector<8x32xf32>
    %394 = vector.extract_strided_slice %334 {offsets = [24, 0], sizes = [8, 128], strides = [1, 1]} : vector<64x128xf32> to vector<8x128xf32>
    %cst_65 = arith.constant dense<0.000000e+00> : vector<8x128xf32>
    %395 = tpu.matmul %393, %330, %cst_65 {dimension_numbers = #tpu.dot_dimension_numbers<[1], [0], [0], [1], [0, 0, 1, 1], [], []>} : vector<8x32xf32>, vector<32x128xf32>, vector<8x128xf32> -> vector<8x128xf32>
    %396 = arith.addf %394, %395 : vector<8x128xf32>
    %397 = arith.negf %396 : vector<8x128xf32>
    %398 = math.exp %397 : vector<8x128xf32>
    %cst_66 = arith.constant 1.000000e+00 : f32
    %399 = vector.broadcast %cst_66 : f32 to vector<8x128xf32>
    %400 = arith.addf %399, %398 : vector<8x128xf32>
    %401 = arith.divf %399, %400 : vector<8x128xf32>
    %402 = math.tanh %396 : vector<8x128xf32>
    %403 = arith.select %5, %402, %401 : vector<8x128xi1>, vector<8x128xf32>
    %404 = vector.extract_strided_slice %403 {offsets = [0, 0], sizes = [8, 32], strides = [1, 1]} : vector<8x128xf32> to vector<8x32xf32>
    %405 = vector.extract_strided_slice %403 {offsets = [0, 32], sizes = [8, 32], strides = [1, 1]} : vector<8x128xf32> to vector<8x32xf32>
    %406 = vector.extract_strided_slice %403 {offsets = [0, 64], sizes = [8, 32], strides = [1, 1]} : vector<8x128xf32> to vector<8x32xf32>
    %407 = vector.extract_strided_slice %403 {offsets = [0, 96], sizes = [8, 32], strides = [1, 1]} : vector<8x128xf32> to vector<8x32xf32>
    %408 = arith.mulf %405, %391 : vector<8x32xf32>
    %409 = arith.mulf %404, %406 : vector<8x32xf32>
    %410 = arith.addf %408, %409 : vector<8x32xf32>
    %411 = math.tanh %410 : vector<8x32xf32>
    %412 = arith.mulf %407, %411 : vector<8x32xf32>
    %413 = vector.extract_strided_slice %334 {offsets = [32, 0], sizes = [8, 128], strides = [1, 1]} : vector<64x128xf32> to vector<8x128xf32>
    %cst_67 = arith.constant dense<0.000000e+00> : vector<8x128xf32>
    %414 = tpu.matmul %412, %330, %cst_67 {dimension_numbers = #tpu.dot_dimension_numbers<[1], [0], [0], [1], [0, 0, 1, 1], [], []>} : vector<8x32xf32>, vector<32x128xf32>, vector<8x128xf32> -> vector<8x128xf32>
    %415 = arith.addf %413, %414 : vector<8x128xf32>
    %416 = arith.negf %415 : vector<8x128xf32>
    %417 = math.exp %416 : vector<8x128xf32>
    %cst_68 = arith.constant 1.000000e+00 : f32
    %418 = vector.broadcast %cst_68 : f32 to vector<8x128xf32>
    %419 = arith.addf %418, %417 : vector<8x128xf32>
    %420 = arith.divf %418, %419 : vector<8x128xf32>
    %421 = math.tanh %415 : vector<8x128xf32>
    %422 = arith.select %5, %421, %420 : vector<8x128xi1>, vector<8x128xf32>
    %423 = vector.extract_strided_slice %422 {offsets = [0, 0], sizes = [8, 32], strides = [1, 1]} : vector<8x128xf32> to vector<8x32xf32>
    %424 = vector.extract_strided_slice %422 {offsets = [0, 32], sizes = [8, 32], strides = [1, 1]} : vector<8x128xf32> to vector<8x32xf32>
    %425 = vector.extract_strided_slice %422 {offsets = [0, 64], sizes = [8, 32], strides = [1, 1]} : vector<8x128xf32> to vector<8x32xf32>
    %426 = vector.extract_strided_slice %422 {offsets = [0, 96], sizes = [8, 32], strides = [1, 1]} : vector<8x128xf32> to vector<8x32xf32>
    %427 = arith.mulf %424, %410 : vector<8x32xf32>
    %428 = arith.mulf %423, %425 : vector<8x32xf32>
    %429 = arith.addf %427, %428 : vector<8x32xf32>
    %430 = math.tanh %429 : vector<8x32xf32>
    %431 = arith.mulf %426, %430 : vector<8x32xf32>
    %432 = vector.extract_strided_slice %334 {offsets = [40, 0], sizes = [8, 128], strides = [1, 1]} : vector<64x128xf32> to vector<8x128xf32>
    %cst_69 = arith.constant dense<0.000000e+00> : vector<8x128xf32>
    %433 = tpu.matmul %431, %330, %cst_69 {dimension_numbers = #tpu.dot_dimension_numbers<[1], [0], [0], [1], [0, 0, 1, 1], [], []>} : vector<8x32xf32>, vector<32x128xf32>, vector<8x128xf32> -> vector<8x128xf32>
    %434 = arith.addf %432, %433 : vector<8x128xf32>
    %435 = arith.negf %434 : vector<8x128xf32>
    %436 = math.exp %435 : vector<8x128xf32>
    %cst_70 = arith.constant 1.000000e+00 : f32
    %437 = vector.broadcast %cst_70 : f32 to vector<8x128xf32>
    %438 = arith.addf %437, %436 : vector<8x128xf32>
    %439 = arith.divf %437, %438 : vector<8x128xf32>
    %440 = math.tanh %434 : vector<8x128xf32>
    %441 = arith.select %5, %440, %439 : vector<8x128xi1>, vector<8x128xf32>
    %442 = vector.extract_strided_slice %441 {offsets = [0, 0], sizes = [8, 32], strides = [1, 1]} : vector<8x128xf32> to vector<8x32xf32>
    %443 = vector.extract_strided_slice %441 {offsets = [0, 32], sizes = [8, 32], strides = [1, 1]} : vector<8x128xf32> to vector<8x32xf32>
    %444 = vector.extract_strided_slice %441 {offsets = [0, 64], sizes = [8, 32], strides = [1, 1]} : vector<8x128xf32> to vector<8x32xf32>
    %445 = vector.extract_strided_slice %441 {offsets = [0, 96], sizes = [8, 32], strides = [1, 1]} : vector<8x128xf32> to vector<8x32xf32>
    %446 = arith.mulf %443, %429 : vector<8x32xf32>
    %447 = arith.mulf %442, %444 : vector<8x32xf32>
    %448 = arith.addf %446, %447 : vector<8x32xf32>
    %449 = math.tanh %448 : vector<8x32xf32>
    %450 = arith.mulf %445, %449 : vector<8x32xf32>
    %451 = vector.extract_strided_slice %334 {offsets = [48, 0], sizes = [8, 128], strides = [1, 1]} : vector<64x128xf32> to vector<8x128xf32>
    %cst_71 = arith.constant dense<0.000000e+00> : vector<8x128xf32>
    %452 = tpu.matmul %450, %330, %cst_71 {dimension_numbers = #tpu.dot_dimension_numbers<[1], [0], [0], [1], [0, 0, 1, 1], [], []>} : vector<8x32xf32>, vector<32x128xf32>, vector<8x128xf32> -> vector<8x128xf32>
    %453 = arith.addf %451, %452 : vector<8x128xf32>
    %454 = arith.negf %453 : vector<8x128xf32>
    %455 = math.exp %454 : vector<8x128xf32>
    %cst_72 = arith.constant 1.000000e+00 : f32
    %456 = vector.broadcast %cst_72 : f32 to vector<8x128xf32>
    %457 = arith.addf %456, %455 : vector<8x128xf32>
    %458 = arith.divf %456, %457 : vector<8x128xf32>
    %459 = math.tanh %453 : vector<8x128xf32>
    %460 = arith.select %5, %459, %458 : vector<8x128xi1>, vector<8x128xf32>
    %461 = vector.extract_strided_slice %460 {offsets = [0, 0], sizes = [8, 32], strides = [1, 1]} : vector<8x128xf32> to vector<8x32xf32>
    %462 = vector.extract_strided_slice %460 {offsets = [0, 32], sizes = [8, 32], strides = [1, 1]} : vector<8x128xf32> to vector<8x32xf32>
    %463 = vector.extract_strided_slice %460 {offsets = [0, 64], sizes = [8, 32], strides = [1, 1]} : vector<8x128xf32> to vector<8x32xf32>
    %464 = vector.extract_strided_slice %460 {offsets = [0, 96], sizes = [8, 32], strides = [1, 1]} : vector<8x128xf32> to vector<8x32xf32>
    %465 = arith.mulf %462, %448 : vector<8x32xf32>
    %466 = arith.mulf %461, %463 : vector<8x32xf32>
    %467 = arith.addf %465, %466 : vector<8x32xf32>
    %468 = math.tanh %467 : vector<8x32xf32>
    %469 = arith.mulf %464, %468 : vector<8x32xf32>
    %470 = vector.extract_strided_slice %334 {offsets = [56, 0], sizes = [8, 128], strides = [1, 1]} : vector<64x128xf32> to vector<8x128xf32>
    %cst_73 = arith.constant dense<0.000000e+00> : vector<8x128xf32>
    %471 = tpu.matmul %469, %330, %cst_73 {dimension_numbers = #tpu.dot_dimension_numbers<[1], [0], [0], [1], [0, 0, 1, 1], [], []>} : vector<8x32xf32>, vector<32x128xf32>, vector<8x128xf32> -> vector<8x128xf32>
    %472 = arith.addf %470, %471 : vector<8x128xf32>
    %473 = arith.negf %472 : vector<8x128xf32>
    %474 = math.exp %473 : vector<8x128xf32>
    %cst_74 = arith.constant 1.000000e+00 : f32
    %475 = vector.broadcast %cst_74 : f32 to vector<8x128xf32>
    %476 = arith.addf %475, %474 : vector<8x128xf32>
    %477 = arith.divf %475, %476 : vector<8x128xf32>
    %478 = math.tanh %472 : vector<8x128xf32>
    %479 = arith.select %5, %478, %477 : vector<8x128xi1>, vector<8x128xf32>
    %480 = vector.extract_strided_slice %479 {offsets = [0, 0], sizes = [8, 32], strides = [1, 1]} : vector<8x128xf32> to vector<8x32xf32>
    %481 = vector.extract_strided_slice %479 {offsets = [0, 32], sizes = [8, 32], strides = [1, 1]} : vector<8x128xf32> to vector<8x32xf32>
    %482 = vector.extract_strided_slice %479 {offsets = [0, 64], sizes = [8, 32], strides = [1, 1]} : vector<8x128xf32> to vector<8x32xf32>
    %483 = vector.extract_strided_slice %479 {offsets = [0, 96], sizes = [8, 32], strides = [1, 1]} : vector<8x128xf32> to vector<8x32xf32>
    %484 = arith.mulf %481, %467 : vector<8x32xf32>
    %485 = arith.mulf %480, %482 : vector<8x32xf32>
    %486 = arith.addf %484, %485 : vector<8x32xf32>
    %487 = math.tanh %486 : vector<8x32xf32>
    %488 = arith.mulf %483, %487 : vector<8x32xf32>
    %c0_75 = arith.constant 0 : index
    %c0_76 = arith.constant 0 : index
    %489 = vector.load %arg10[%c0_75, %c0_76] : memref<32x4xf32, #tpu.memory_space<vmem>>, vector<32x4xf32>
    %cst_77 = arith.constant dense<0.000000e+00> : vector<8x4xf32>
    %490 = tpu.matmul %488, %489, %cst_77 {dimension_numbers = #tpu.dot_dimension_numbers<[1], [0], [0], [1], [0, 0, 1, 1], [], []>} : vector<8x32xf32>, vector<32x4xf32>, vector<8x4xf32> -> vector<8x4xf32>
    %c0_78 = arith.constant 0 : index
    %c0_79 = arith.constant 0 : index
    %491 = vector.load %arg11[%c0_78, %c0_79] : memref<1x4xf32, #tpu.memory_space<vmem>>, vector<1x4xf32>
    %492 = vector.broadcast %491 : vector<1x4xf32> to vector<8x4xf32>
    %493 = arith.addf %490, %492 : vector<8x4xf32>
    %c0_80 = arith.constant 0 : index
    %c0_81 = arith.constant 0 : index
    %494 = vector.load %arg12[%c0_80, %c0_81] : memref<8x4xf32, #tpu.memory_space<vmem>>, vector<8x4xf32>
    tpu.vector_store %arg12[%c0_80, %c0_81], %493 {strides = array<i32>} : memref<8x4xf32, #tpu.memory_space<vmem>>, vector<8x4xf32>,
    return
  }
}

</mosaic_0001>

<llo_original>
// kernel: sequence_model_forward.1
$region0: #{sequence_model_forward.1}
  #allocation0 [shape = 'u32[]', space=smem, size = 0x4, offset = 0x4, fixed_abs, tag = 'smem constant byte address 0x4 - core index']
  #allocation1 [shape = 'u32[144,128]{1,0:T(1,128)}', space=vmem, size = 0x12000, scoped, tag = 'internal scratch']
  %s0 = inlined_call_operand.vmem [shape: f32[64,16], index: 0, kind: input, shape index: {}]
  %s1 = inlined_call_operand.vmem [shape: f32[16,128], index: 1, kind: input, shape index: {}]
  %s2 = inlined_call_operand.vmem [shape: f32[32,128], index: 2, kind: input, shape index: {}]
  %s3 = inlined_call_operand.vmem [shape: f32[1,128], index: 3, kind: input, shape index: {}]
  %s4 = inlined_call_operand.vmem [shape: f32[32,128], index: 4, kind: input, shape index: {}]
  %s5 = inlined_call_operand.vmem [shape: f32[32,128], index: 5, kind: input, shape index: {}]
  %s6 = inlined_call_operand.vmem [shape: f32[1,128], index: 6, kind: input, shape index: {}]
  %s7 = inlined_call_operand.vmem [shape: f32[32,128], index: 7, kind: input, shape index: {}]
  %s8 = inlined_call_operand.vmem [shape: f32[32,128], index: 8, kind: input, shape index: {}]
  %s9 = inlined_call_operand.vmem [shape: f32[1,128], index: 9, kind: input, shape index: {}]
  %s10 = inlined_call_operand.vmem [shape: f32[32,4], index: 10, kind: input, shape index: {}]
  %s11 = inlined_call_operand.vmem [shape: f32[1,4], index: 11, kind: input, shape index: {}]
  %s12 = inlined_call_operand.vmem [shape: f32[8,4], index: 12, kind: output, shape index: {}]
  %s13 = sld [smem:[#allocation0]]
  $region58: #{sequence_model_forward.1} parent=0
    _
  %s15 = ssub.s32 1, %s13
  %s16 = scalar_select 0, %s15, %s13
  // Predicated region
  $region2: #{sequence_model_forward.1} parent=0 // pred_check
    _
  $region3: #{sequence_model_forward.1} parent=0 // pred_check_branch
    %18 = sbr.rel (0) target = $region5
  $region4: #{sequence_model_forward.1} parent=0 // pred_region
    _
  $region5: #{sequence_model_forward.1} parent=0 // pred_fallthru
    _
  // Predicated region
  $region6: #{sequence_model_forward.1} parent=0 // pred_check
    _
  $region7: #{sequence_model_forward.1} parent=0 // pred_check_branch
    %20 = sbr.rel (0) target = $region9
  $region8: #{sequence_model_forward.1} parent=0 // pred_region
    _
  $region9: #{sequence_model_forward.1} parent=0 // pred_fallthru
    _
  // Predicated region
  $region10: #{sequence_model_forward.1} parent=0 // pred_check
    _
  $region11: #{sequence_model_forward.1} parent=0 // pred_check_branch
    %22 = sbr.rel (0) target = $region13
  $region12: #{sequence_model_forward.1} parent=0 // pred_region
    _
  $region13: #{sequence_model_forward.1} parent=0 // pred_fallthru
    _
  // Predicated region
  $region14: #{sequence_model_forward.1} parent=0 // pred_check
    _
  $region15: #{sequence_model_forward.1} parent=0 // pred_check_branch
    %24 = sbr.rel (0) target = $region17
  $region16: #{sequence_model_forward.1} parent=0 // pred_region
    _
  $region17: #{sequence_model_forward.1} parent=0 // pred_fallthru
    _
  // Predicated region
  $region18: #{sequence_model_forward.1} parent=0 // pred_check
    _
  $region19: #{sequence_model_forward.1} parent=0 // pred_check_branch
    %26 = sbr.rel (0) target = $region21
  $region20: #{sequence_model_forward.1} parent=0 // pred_region
    _
  $region21: #{sequence_model_forward.1} parent=0 // pred_fallthru
    _
  // Predicated region
  $region22: #{sequence_model_forward.1} parent=0 // pred_check
    _
  $region23: #{sequence_model_forward.1} parent=0 // pred_check_branch
    %28 = sbr.rel (0) target = $region25
  $region24: #{sequence_model_forward.1} parent=0 // pred_region
    _
  $region25: #{sequence_model_forward.1} parent=0 // pred_fallthru
    _
  // Predicated region
  $region26: #{sequence_model_forward.1} parent=0 // pred_check
    _
  $region27: #{sequence_model_forward.1} parent=0 // pred_check_branch
    %30 = sbr.rel (0) target = $region29
  $region28: #{sequence_model_forward.1} parent=0 // pred_region
    _
  $region29: #{sequence_model_forward.1} parent=0 // pred_fallthru
    _
  // Predicated region
  $region30: #{sequence_model_forward.1} parent=0 // pred_check
    _
  $region31: #{sequence_model_forward.1} parent=0 // pred_check_branch
    %32 = sbr.rel (0) target = $region33
  $region32: #{sequence_model_forward.1} parent=0 // pred_region
    _
  $region33: #{sequence_model_forward.1} parent=0 // pred_fallthru
    _
  // Predicated region
  $region34: #{sequence_model_forward.1} parent=0 // pred_check
    _
  $region35: #{sequence_model_forward.1} parent=0 // pred_check_branch
    %34 = sbr.rel (0) target = $region37
  $region36: #{sequence_model_forward.1} parent=0 // pred_region
    _
  $region37: #{sequence_model_forward.1} parent=0 // pred_fallthru
    _
  // Predicated region
  $region38: #{sequence_model_forward.1} parent=0 // pred_check
    _
  $region39: #{sequence_model_forward.1} parent=0 // pred_check_branch
    %36 = sbr.rel (0) target = $region41
  $region40: #{sequence_model_forward.1} parent=0 // pred_region
    _
  $region41: #{sequence_model_forward.1} parent=0 // pred_fallthru
    _
  // Predicated region
  $region42: #{sequence_model_forward.1} parent=0 // pred_check
    _
  $region43: #{sequence_model_forward.1} parent=0 // pred_check_branch
    %38 = sbr.rel (0) target = $region45
  $region44: #{sequence_model_forward.1} parent=0 // pred_region
    _
  $region45: #{sequence_model_forward.1} parent=0 // pred_fallthru
    _
  // Predicated region
  $region46: #{sequence_model_forward.1} parent=0 // pred_check
    _
  $region47: #{sequence_model_forward.1} parent=0 // pred_check_branch
    %40 = sbr.rel (0) target = $region49
  $region48: #{sequence_model_forward.1} parent=0 // pred_region
    _
  $region49: #{sequence_model_forward.1} parent=0 // pred_fallthru
    _
  %v41 = vlaneseq
  %v42 = vand.u32 %v41, 127
  %vm43 = vcmp.ge.s32.totalorder %v42, 64
  %vm44 = vcmp.lt.s32.totalorder %v42, 96
  %vm45 = vmand %vm43, %vm44
  %v46 = vld [vmem:[%s0] sm:$0xff]
  %v47 = vld [vmem:[%s0 + $0x8] sm:$0xff]
  %v48 = vld [vmem:[%s0 + $0x10] sm:$0xff]
  %v49 = vld [vmem:[%s0 + $0x18] sm:$0xff]
  %v50 = vld [vmem:[%s0 + $0x20] sm:$0xff]
  %v51 = vld [vmem:[%s0 + $0x28] sm:$0xff]
  %v52 = vld [vmem:[%s0 + $0x30] sm:$0xff]
  %v53 = vld [vmem:[%s0 + $0x38] sm:$0xff]
  %v54 = vld [vmem:[%s1] sm:$0xff]
  %v55 = vld [vmem:[%s1 + $0x8] sm:$0xff]
  %v56 = vld [vmem:[%s2] sm:$0xff]
  %v57 = vld [vmem:[%s2 + $0x8] sm:$0xff]
  %v58 = vld [vmem:[%s2 + $0x10] sm:$0xff]
  %v59 = vld [vmem:[%s2 + $0x18] sm:$0xff]
  %v60 = vld [vmem:[%s3] sm:$0x1]
  %v62 = vlaneseq
  %v63 = vshrl.u32 %v62, 7
  %v64 = vsub.s32 0, %v63
  %v65 = vrot.slane %v60, %v64
  %vm67 = vcmask 130048
  %v69 = vsel %vm67, %v46, 0
  %v72 = vsel %vm67, %v47, 0
  %v75 = vsel %vm67, %v48, 0
  %v78 = vsel %vm67, %v49, 0
  %v81 = vsel %vm67, %v50, 0
  %v84 = vsel %vm67, %v51, 0
  %v87 = vsel %vm67, %v52, 0
  %v90 = vsel %vm67, %v53, 0
  %92 = vmatprep.subr.mxu0 0.0
  %93 = vmatpush1.msra.mxu0 %v54
  %94 = vmatprep.subr.mxu0 0.0
  %95 = vmatpush1.msra.mxu0 %v55
  %96 = vmatprep.subr.mxu0 0.0
  %97 = vmatpush1.msra.mxu0 0.0
  %98 = vmatprep.subr.mxu0 0.0
  %99 = vmatpush1.msra.mxu0 0.0
  %100 = vmatprep.subr.mxu0 0.0
  %101 = vmatpush1.msra.mxu0 0.0
  %102 = vmatprep.subr.mxu0 0.0
  %103 = vmatpush1.msra.mxu0 0.0
  %104 = vmatprep.subr.mxu0 0.0
  %105 = vmatpush1.msra.mxu0 0.0
  %106 = vmatprep.subr.mxu0 0.0
  %107 = vmatpush1.msra.mxu0 0.0
  %108 = vmatprep.subr.mxu0 0.0
  %109 = vmatpush1.msra.mxu0 0.0
  %110 = vmatprep.subr.mxu0 0.0
  %111 = vmatpush1.msra.mxu0 0.0
  %112 = vmatprep.subr.mxu0 0.0
  %113 = vmatpush1.msra.mxu0 0.0
  %114 = vmatprep.subr.mxu0 0.0
  %115 = vmatpush1.msra.mxu0 0.0
  %116 = vmatprep.subr.mxu0 0.0
  %117 = vmatpush1.msra.mxu0 0.0
  %118 = vmatprep.subr.mxu0 0.0
  %119 = vmatpush1.msra.mxu0 0.0
  %120 = vmatprep.subr.mxu0 0.0
  %121 = vmatpush1.msra.mxu0 0.0
  %122 = vmatprep.subr.mxu0 0.0
  %123 = vmatpush1.msra.mxu0 0.0
  %124 = vmatprep.subr.mxu0 0.0
  %125 = vmatpush1.msra.mxu0 0.0
  %126 = vmatprep.subr.mxu0 0.0
  %127 = vmatpush1.msra.mxu0 0.0
  %128 = vmatprep.subr.mxu0 0.0
  %129 = vmatpush1.msra.mxu0 0.0
  %130 = vmatprep.subr.mxu0 0.0
  %131 = vmatpush1.msra.mxu0 0.0
  %132 = vmatprep.subr.mxu0 0.0
  %133 = vmatpush1.msra.mxu0 0.0
  %134 = vmatprep.subr.mxu0 0.0
  %135 = vmatpush1.msra.mxu0 0.0
  %136 = vmatprep.subr.mxu0 0.0
  %137 = vmatpush1.msra.mxu0 0.0
  %138 = vmatprep.subr.mxu0 0.0
  %139 = vmatpush1.msra.mxu0 0.0
  %140 = vmatprep.subr.mxu0 0.0
  %141 = vmatpush1.msra.mxu0 0.0
  %142 = vmatprep.subr.mxu0 0.0
  %143 = vmatpush1.msra.mxu0 0.0
  %144 = vmatprep.subr.mxu0 0.0
  %145 = vmatpush1.msra.mxu0 0.0
  %146 = vmatprep.subr.mxu0 0.0
  %147 = vmatpush1.msra.mxu0 0.0
  %148 = vmatprep.subr.mxu0 0.0
  %149 = vmatpush1.msra.mxu0 0.0
  %150 = vmatprep.subr.mxu0 0.0
  %151 = vmatpush1.msra.mxu0 0.0
  %152 = vmatprep.subr.mxu0 0.0
  %153 = vmatpush1.msra.mxu0 0.0
  %154 = vmatprep.subr.mxu0 0.0
  %155 = vmatpush1.msra.mxu0 0.0
  %156 = vmatprep.mubr.f32.mxu0 0.0
  %157 = vmatmul.mubr.f32.gmra.mrb[0].mxu0 %v69
  %v158 = vpop.f32.mrb[0].mxu0
  %v159 = vadd.f32 %v65, %v158
  %v160 = vpop.f32.mrb[0].mxu0
  %161 = vmatprep.mubr.f32.mxu0 0.0
  %162 = vmatmul.mubr.f32.gmra.mrb[0].mxu0 %v72
  %v163 = vpop.f32.mrb[0].mxu0
  %v164 = vadd.f32 %v65, %v163
  %v165 = vpop.f32.mrb[0].mxu0
  %166 = vmatprep.mubr.f32.mxu0 0.0
  %167 = vmatmul.mubr.f32.gmra.mrb[0].mxu0 %v75
  %v168 = vpop.f32.mrb[0].mxu0
  %v169 = vadd.f32 %v65, %v168
  %v170 = vpop.f32.mrb[0].mxu0
  %171 = vmatprep.mubr.f32.mxu0 0.0
  %172 = vmatmul.mubr.f32.gmra.mrb[0].mxu0 %v78
  %v173 = vpop.f32.mrb[0].mxu0
  %v174 = vadd.f32 %v65, %v173
  %v175 = vpop.f32.mrb[0].mxu0
  %176 = vmatprep.mubr.f32.mxu0 0.0
  %177 = vmatmul.mubr.f32.gmra.mrb[0].mxu0 %v81
  %v178 = vpop.f32.mrb[0].mxu0
  %v179 = vadd.f32 %v65, %v178
  %v180 = vpop.f32.mrb[0].mxu0
  %181 = vmatprep.mubr.f32.mxu0 0.0
  %182 = vmatmul.mubr.f32.gmra.mrb[0].mxu0 %v84
  %v183 = vpop.f32.mrb[0].mxu0
  %v184 = vadd.f32 %v65, %v183
  %v185 = vpop.f32.mrb[0].mxu0
  %186 = vmatprep.mubr.f32.mxu0 0.0
  %187 = vmatmul.mubr.f32.gmra.mrb[0].mxu0 %v87
  %v188 = vpop.f32.mrb[0].mxu0
  %v189 = vadd.f32 %v65, %v188
  %v190 = vpop.f32.mrb[0].mxu0
  %191 = vmatprep.mubr.f32.mxu0 0.0
  %192 = vmatmul.mubr.f32.gmra.mrb[0].mxu0 %v90
  %v193 = vpop.f32.mrb[0].mxu0
  %v194 = vadd.f32 %v65, %v193
  %v195 = vpop.f32.mrb[0].mxu0
  %196 = vdwg.mxu0
  %vm197 = vcmask 261120
  %v199 = vsel %vm197, 0.0, 0
  %201 = vmatprep.subr.mxu0 0.0
  %202 = vmatpush1.msra.mxu0 %v56
  %203 = vmatprep.subr.mxu0 0.0
  %204 = vmatpush1.msra.mxu0 %v57
  %205 = vmatprep.subr.mxu0 0.0
  %206 = vmatpush1.msra.mxu0 %v58
  %207 = vmatprep.subr.mxu0 0.0
  %208 = vmatpush1.msra.mxu0 %v59
  %209 = vmatprep.subr.mxu0 0.0
  %210 = vmatpush1.msra.mxu0 0.0
  %211 = vmatprep.subr.mxu0 0.0
  %212 = vmatpush1.msra.mxu0 0.0
  %213 = vmatprep.subr.mxu0 0.0
  %214 = vmatpush1.msra.mxu0 0.0
  %215 = vmatprep.subr.mxu0 0.0
  %216 = vmatpush1.msra.mxu0 0.0
  %217 = vmatprep.subr.mxu0 0.0
  %218 = vmatpush1.msra.mxu0 0.0
  %219 = vmatprep.subr.mxu0 0.0
  %220 = vmatpush1.msra.mxu0 0.0
  %221 = vmatprep.subr.mxu0 0.0
  %222 = vmatpush1.msra.mxu0 0.0
  %223 = vmatprep.subr.mxu0 0.0
  %224 = vmatpush1.msra.mxu0 0.0
  %225 = vmatprep.subr.mxu0 0.0
  %226 = vmatpush1.msra.mxu0 0.0
  %227 = vmatprep.subr.mxu0 0.0
  %228 = vmatpush1.msra.mxu0 0.0
  %229 = vmatprep.subr.mxu0 0.0
  %230 = vmatpush1.msra.mxu0 0.0
  %231 = vmatprep.subr.mxu0 0.0
  %232 = vmatpush1.msra.mxu0 0.0
  %233 = vmatprep.subr.mxu0 0.0
  %234 = vmatpush1.msra.mxu0 0.0
  %235 = vmatprep.subr.mxu0 0.0
  %236 = vmatpush1.msra.mxu0 0.0
  %237 = vmatprep.subr.mxu0 0.0
  %238 = vmatpush1.msra.mxu0 0.0
  %239 = vmatprep.subr.mxu0 0.0
  %240 = vmatpush1.msra.mxu0 0.0
  %241 = vmatprep.subr.mxu0 0.0
  %242 = vmatpush1.msra.mxu0 0.0
  %243 = vmatprep.subr.mxu0 0.0
  %244 = vmatpush1.msra.mxu0 0.0
  %245 = vmatprep.subr.mxu0 0.0
  %246 = vmatpush1.msra.mxu0 0.0
  %247 = vmatprep.subr.mxu0 0.0
  %248 = vmatpush1.msra.mxu0 0.0
  %249 = vmatprep.subr.mxu0 0.0
  %250 = vmatpush1.msra.mxu0 0.0
  %251 = vmatprep.subr.mxu0 0.0
  %252 = vmatpush1.msra.mxu0 0.0
  %253 = vmatprep.subr.mxu0 0.0
  %254 = vmatpush1.msra.mxu0 0.0
  %255 = vmatprep.subr.mxu0 0.0
  %256 = vmatpush1.msra.mxu0 0.0
  %257 = vmatprep.subr.mxu0 0.0
  %258 = vmatpush1.msra.mxu0 0.0
  %259 = vmatprep.subr.mxu0 0.0
  %260 = vmatpush1.msra.mxu0 0.0
  %261 = vmatprep.subr.mxu0 0.0
  %262 = vmatpush1.msra.mxu0 0.0
  %263 = vmatprep.subr.mxu0 0.0
  %264 = vmatpush1.msra.mxu0 0.0
  %265 = vmatprep.mubr.f32.mxu0 0.0
  %266 = vmatmul.mubr.f32.gmra.mrb[0].mxu0 %v199
  %v267 = vpop.f32.mrb[0].mxu0
  %v268 = vadd.f32 0.0, %v267
  %v269 = vpop.f32.mrb[0].mxu0
  %270 = vdwg.mxu0
  %v271 = vadd.f32 %v159, %v268
  %v272 = vxor.u32 %v271, 2147483648
  %v273 = vmul.f32 %v272, 1.442695
  %v274 = vpow.pop %v273
  %v275 = vadd.f32 %v274, 1.0
  %v276 = vrcp.pop %v275
  %v277 = vmul.f32 1.0, %v276
  %v278 = vtanh.pop %v271
  %v279 = vsel %vm45, %v278, %v277
  %v280 = vmul.f32 %v279, 0.0
  %282 = vrot.lane.b32.xlu0 %v279, 64
  %v283 = vpop.permute.xlu0 %282
  %v285 = vmul.f32 %v279, %v283
  %287 = vrot.lane.b32.xlu0 %v285, 32
  %v288 = vpop.permute.xlu0 %287
  %v290 = vadd.f32 %v280, %v288
  %v291 = vtanh.pop %v290
  %293 = vrot.lane.b32.xlu0 %v291, 64
  %v294 = vpop.permute.xlu0 %293
  %v296 = vmul.f32 %v279, %v294
  %298 = vrot.lane.b32.xlu0 %v296, 32
  %v299 = vpop.permute.xlu0 %298
  %v300 = vsel %vm197, %v299, 0
  %302 = vmatprep.subr.mxu0 0.0
  %303 = vmatpush1.msra.mxu0 %v56
  %304 = vmatprep.subr.mxu0 0.0
  %305 = vmatpush1.msra.mxu0 %v57
  %306 = vmatprep.subr.mxu0 0.0
  %307 = vmatpush1.msra.mxu0 %v58
  %308 = vmatprep.subr.mxu0 0.0
  %309 = vmatpush1.msra.mxu0 %v59
  %310 = vmatprep.subr.mxu0 0.0
  %311 = vmatpush1.msra.mxu0 0.0
  %312 = vmatprep.subr.mxu0 0.0
  %313 = vmatpush1.msra.mxu0 0.0
  %314 = vmatprep.subr.mxu0 0.0
  %315 = vmatpush1.msra.mxu0 0.0
  %316 = vmatprep.subr.mxu0 0.0
  %317 = vmatpush1.msra.mxu0 0.0
  %318 = vmatprep.subr.mxu0 0.0
  %319 = vmatpush1.msra.mxu0 0.0
  %320 = vmatprep.subr.mxu0 0.0
  %321 = vmatpush1.msra.mxu0 0.0
  %322 = vmatprep.subr.mxu0 0.0
  %323 = vmatpush1.msra.mxu0 0.0
  %324 = vmatprep.subr.mxu0 0.0
  %325 = vmatpush1.msra.mxu0 0.0
  %326 = vmatprep.subr.mxu0 0.0
  %327 = vmatpush1.msra.mxu0 0.0
  %328 = vmatprep.subr.mxu0 0.0
  %329 = vmatpush1.msra.mxu0 0.0
  %330 = vmatprep.subr.mxu0 0.0
  %331 = vmatpush1.msra.mxu0 0.0
  %332 = vmatprep.subr.mxu0 0.0
  %333 = vmatpush1.msra.mxu0 0.0
  %334 = vmatprep.subr.mxu0 0.0
  %335 = vmatpush1.msra.mxu0 0.0
  %336 = vmatprep.subr.mxu0 0.0
  %337 = vmatpush1.msra.mxu0 0.0
  %338 = vmatprep.subr.mxu0 0.0
  %339 = vmatpush1.msra.mxu0 0.0
  %340 = vmatprep.subr.mxu0 0.0
  %341 = vmatpush1.msra.mxu0 0.0
  %342 = vmatprep.subr.mxu0 0.0
  %343 = vmatpush1.msra.mxu0 0.0
  %344 = vmatprep.subr.mxu0 0.0
  %345 = vmatpush1.msra.mxu0 0.0
  %346 = vmatprep.subr.mxu0 0.0
  %347 = vmatpush1.msra.mxu0 0.0
  %348 = vmatprep.subr.mxu0 0.0
  %349 = vmatpush1.msra.mxu0 0.0
  %350 = vmatprep.subr.mxu0 0.0
  %351 = vmatpush1.msra.mxu0 0.0
  %352 = vmatprep.subr.mxu0 0.0
  %353 = vmatpush1.msra.mxu0 0.0
  %354 = vmatprep.subr.mxu0 0.0
  %355 = vmatpush1.msra.mxu0 0.0
  %356 = vmatprep.subr.mxu0 0.0
  %357 = vmatpush1.msra.mxu0 0.0
  %358 = vmatprep.subr.mxu0 0.0
  %359 = vmatpush1.msra.mxu0 0.0
  %360 = vmatprep.subr.mxu0 0.0
  %361 = vmatpush1.msra.mxu0 0.0
  %362 = vmatprep.subr.mxu0 0.0
  %363 = vmatpush1.msra.mxu0 0.0
  %364 = vmatprep.subr.mxu0 0.0
  %365 = vmatpush1.msra.mxu0 0.0
  %366 = vmatprep.mubr.f32.mxu0 0.0
  %367 = vmatmul.mubr.f32.gmra.mrb[0].mxu0 %v300
  %v368 = vpop.f32.mrb[0].mxu0
  %v369 = vadd.f32 0.0, %v368
  %v370 = vpop.f32.mrb[0].mxu0
  %371 = vdwg.mxu0
  %v372 = vadd.f32 %v164, %v369
  %v373 = vxor.u32 %v372, 2147483648
  %v374 = vmul.f32 %v373, 1.442695
  %v375 = vpow.pop %v374
  %v376 = vadd.f32 %v375, 1.0
  %v377 = vrcp.pop %v376
  %v378 = vmul.f32 1.0, %v377
  %v379 = vtanh.pop %v372
  %v380 = vsel %vm45, %v379, %v378
  %v381 = vmul.f32 %v380, %v290
  %383 = vrot.lane.b32.xlu0 %v380, 64
  %v384 = vpop.permute.xlu0 %383
  %v386 = vmul.f32 %v380, %v384
  %388 = vrot.lane.b32.xlu0 %v386, 32
  %v389 = vpop.permute.xlu0 %388
  %v391 = vadd.f32 %v381, %v389
  %v392 = vtanh.pop %v391
  %394 = vrot.lane.b32.xlu0 %v392, 64
  %v395 = vpop.permute.xlu0 %394
  %v397 = vmul.f32 %v380, %v395
  %399 = vrot.lane.b32.xlu0 %v397, 32
  %v400 = vpop.permute.xlu0 %399
  %v401 = vsel %vm197, %v400, 0
  %403 = vmatprep.subr.mxu0 0.0
  %404 = vmatpush1.msra.mxu0 %v56
  %405 = vmatprep.subr.mxu0 0.0
  %406 = vmatpush1.msra.mxu0 %v57
  %407 = vmatprep.subr.mxu0 0.0
  %408 = vmatpush1.msra.mxu0 %v58
  %409 = vmatprep.subr.mxu0 0.0
  %410 = vmatpush1.msra.mxu0 %v59
  %411 = vmatprep.subr.mxu0 0.0
  %412 = vmatpush1.msra.mxu0 0.0
  %413 = vmatprep.subr.mxu0 0.0
  %414 = vmatpush1.msra.mxu0 0.0
  %415 = vmatprep.subr.mxu0 0.0
  %416 = vmatpush1.msra.mxu0 0.0
  %417 = vmatprep.subr.mxu0 0.0
  %418 = vmatpush1.msra.mxu0 0.0
  %419 = vmatprep.subr.mxu0 0.0
  %420 = vmatpush1.msra.mxu0 0.0
  %421 = vmatprep.subr.mxu0 0.0
  %422 = vmatpush1.msra.mxu0 0.0
  %423 = vmatprep.subr.mxu0 0.0
  %424 = vmatpush1.msra.mxu0 0.0
  %425 = vmatprep.subr.mxu0 0.0
  %426 = vmatpush1.msra.mxu0 0.0
  %427 = vmatprep.subr.mxu0 0.0
  %428 = vmatpush1.msra.mxu0 0.0
  %429 = vmatprep.subr.mxu0 0.0
  %430 = vmatpush1.msra.mxu0 0.0
  %431 = vmatprep.subr.mxu0 0.0
  %432 = vmatpush1.msra.mxu0 0.0
  %433 = vmatprep.subr.mxu0 0.0
  %434 = vmatpush1.msra.mxu0 0.0
  %435 = vmatprep.subr.mxu0 0.0
  %436 = vmatpush1.msra.mxu0 0.0
  %437 = vmatprep.subr.mxu0 0.0
  %438 = vmatpush1.msra.mxu0 0.0
  %439 = vmatprep.subr.mxu0 0.0
  %440 = vmatpush1.msra.mxu0 0.0
  %441 = vmatprep.subr.mxu0 0.0
  %442 = vmatpush1.msra.mxu0 0.0
  %443 = vmatprep.subr.mxu0 0.0
  %444 = vmatpush1.msra.mxu0 0.0
  %445 = vmatprep.subr.mxu0 0.0
  %446 = vmatpush1.msra.mxu0 0.0
  %447 = vmatprep.subr.mxu0 0.0
  %448 = vmatpush1.msra.mxu0 0.0
  %449 = vmatprep.subr.mxu0 0.0
  %450 = vmatpush1.msra.mxu0 0.0
  %451 = vmatprep.subr.mxu0 0.0
  %452 = vmatpush1.msra.mxu0 0.0
  %453 = vmatprep.subr.mxu0 0.0
  %454 = vmatpush1.msra.mxu0 0.0
  %455 = vmatprep.subr.mxu0 0.0
  %456 = vmatpush1.msra.mxu0 0.0
  %457 = vmatprep.subr.mxu0 0.0
  %458 = vmatpush1.msra.mxu0 0.0
  %459 = vmatprep.subr.mxu0 0.0
  %460 = vmatpush1.msra.mxu0 0.0
  %461 = vmatprep.subr.mxu0 0.0
  %462 = vmatpush1.msra.mxu0 0.0
  %463 = vmatprep.subr.mxu0 0.0
  %464 = vmatpush1.msra.mxu0 0.0
  %465 = vmatprep.subr.mxu0 0.0
  %466 = vmatpush1.msra.mxu0 0.0
  %467 = vmatprep.mubr.f32.mxu0 0.0
  %468 = vmatmul.mubr.f32.gmra.mrb[0].mxu0 %v401
  %v469 = vpop.f32.mrb[0].mxu0
  %v470 = vadd.f32 0.0, %v469
  %v471 = vpop.f32.mrb[0].mxu0
  %472 = vdwg.mxu0
  %v473 = vadd.f32 %v169, %v470
  %v474 = vxor.u32 %v473, 2147483648
  %v475 = vmul.f32 %v474, 1.442695
  %v476 = vpow.pop %v475
  %v477 = vadd.f32 %v476, 1.0
  %v478 = vrcp.pop %v477
  %v479 = vmul.f32 1.0, %v478
  %v480 = vtanh.pop %v473
  %v481 = vsel %vm45, %v480, %v479
  %v482 = vmul.f32 %v481, %v391
  %484 = vrot.lane.b32.xlu0 %v481, 64
  %v485 = vpop.permute.xlu0 %484
  %v487 = vmul.f32 %v481, %v485
  %489 = vrot.lane.b32.xlu0 %v487, 32
  %v490 = vpop.permute.xlu0 %489
  %v492 = vadd.f32 %v482, %v490
  %v493 = vtanh.pop %v492
  %495 = vrot.lane.b32.xlu0 %v493, 64
  %v496 = vpop.permute.xlu0 %495
  %v498 = vmul.f32 %v481, %v496
  %500 = vrot.lane.b32.xlu0 %v498, 32
  %v501 = vpop.permute.xlu0 %500
  %v502 = vsel %vm197, %v501, 0
  %504 = vmatprep.subr.mxu0 0.0
  %505 = vmatpush1.msra.mxu0 %v56
  %506 = vmatprep.subr.mxu0 0.0
  %507 = vmatpush1.msra.mxu0 %v57
  %508 = vmatprep.subr.mxu0 0.0
  %509 = vmatpush1.msra.mxu0 %v58
  %510 = vmatprep.subr.mxu0 0.0
  %511 = vmatpush1.msra.mxu0 %v59
  %512 = vmatprep.subr.mxu0 0.0
  %513 = vmatpush1.msra.mxu0 0.0
  %514 = vmatprep.subr.mxu0 0.0
  %515 = vmatpush1.msra.mxu0 0.0
  %516 = vmatprep.subr.mxu0 0.0
  %517 = vmatpush1.msra.mxu0 0.0
  %518 = vmatprep.subr.mxu0 0.0
  %519 = vmatpush1.msra.mxu0 0.0
  %520 = vmatprep.subr.mxu0 0.0
  %521 = vmatpush1.msra.mxu0 0.0
  %522 = vmatprep.subr.mxu0 0.0
  %523 = vmatpush1.msra.mxu0 0.0
  %524 = vmatprep.subr.mxu0 0.0
  %525 = vmatpush1.msra.mxu0 0.0
  %526 = vmatprep.subr.mxu0 0.0
  %527 = vmatpush1.msra.mxu0 0.0
  %528 = vmatprep.subr.mxu0 0.0
  %529 = vmatpush1.msra.mxu0 0.0
  %530 = vmatprep.subr.mxu0 0.0
  %531 = vmatpush1.msra.mxu0 0.0
  %532 = vmatprep.subr.mxu0 0.0
  %533 = vmatpush1.msra.mxu0 0.0
  %534 = vmatprep.subr.mxu0 0.0
  %535 = vmatpush1.msra.mxu0 0.0
  %536 = vmatprep.subr.mxu0 0.0
  %537 = vmatpush1.msra.mxu0 0.0
  %538 = vmatprep.subr.mxu0 0.0
  %539 = vmatpush1.msra.mxu0 0.0
  %540 = vmatprep.subr.mxu0 0.0
  %541 = vmatpush1.msra.mxu0 0.0
  %542 = vmatprep.subr.mxu0 0.0
  %543 = vmatpush1.msra.mxu0 0.0
  %544 = vmatprep.subr.mxu0 0.0
  %545 = vmatpush1.msra.mxu0 0.0
  %546 = vmatprep.subr.mxu0 0.0
  %547 = vmatpush1.msra.mxu0 0.0
  %548 = vmatprep.subr.mxu0 0.0
  %549 = vmatpush1.msra.mxu0 0.0
  %550 = vmatprep.subr.mxu0 0.0
  %551 = vmatpush1.msra.mxu0 0.0
  %552 = vmatprep.subr.mxu0 0.0
  %553 = vmatpush1.msra.mxu0 0.0
  %554 = vmatprep.subr.mxu0 0.0
  %555 = vmatpush1.msra.mxu0 0.0
  %556 = vmatprep.subr.mxu0 0.0
  %557 = vmatpush1.msra.mxu0 0.0
  %558 = vmatprep.subr.mxu0 0.0
  %559 = vmatpush1.msra.mxu0 0.0
  %560 = vmatprep.subr.mxu0 0.0
  %561 = vmatpush1.msra.mxu0 0.0
  %562 = vmatprep.subr.mxu0 0.0
  %563 = vmatpush1.msra.mxu0 0.0
  %564 = vmatprep.subr.mxu0 0.0
  %565 = vmatpush1.msra.mxu0 0.0
  %566 = vmatprep.subr.mxu0 0.0
  %567 = vmatpush1.msra.mxu0 0.0
  %568 = vmatprep.mubr.f32.mxu0 0.0
  %569 = vmatmul.mubr.f32.gmra.mrb[0].mxu0 %v502
  %v570 = vpop.f32.mrb[0].mxu0
  %v571 = vadd.f32 0.0, %v570
  %v572 = vpop.f32.mrb[0].mxu0
  %573 = vdwg.mxu0
  %v574 = vadd.f32 %v174, %v571
  %v575 = vxor.u32 %v574, 2147483648
  %v576 = vmul.f32 %v575, 1.442695
  %v577 = vpow.pop %v576
  %v578 = vadd.f32 %v577, 1.0
  %v579 = vrcp.pop %v578
  %v580 = vmul.f32 1.0, %v579
  %v581 = vtanh.pop %v574
  %v582 = vsel %vm45, %v581, %v580
  %v583 = vmul.f32 %v582, %v492
  %585 = vrot.lane.b32.xlu0 %v582, 64
  %v586 = vpop.permute.xlu0 %585
  %v588 = vmul.f32 %v582, %v586
  %590 = vrot.lane.b32.xlu0 %v588, 32
  %v591 = vpop.permute.xlu0 %590
  %v593 = vadd.f32 %v583, %v591
  %v594 = vtanh.pop %v593
  %596 = vrot.lane.b32.xlu0 %v594, 64
  %v597 = vpop.permute.xlu0 %596
  %v599 = vmul.f32 %v582, %v597
  %601 = vrot.lane.b32.xlu0 %v599, 32
  %v602 = vpop.permute.xlu0 %601
  %v603 = vsel %vm197, %v602, 0
  %605 = vmatprep.subr.mxu0 0.0
  %606 = vmatpush1.msra.mxu0 %v56
  %607 = vmatprep.subr.mxu0 0.0
  %608 = vmatpush1.msra.mxu0 %v57
  %609 = vmatprep.subr.mxu0 0.0
  %610 = vmatpush1.msra.mxu0 %v58
  %611 = vmatprep.subr.mxu0 0.0
  %612 = vmatpush1.msra.mxu0 %v59
  %613 = vmatprep.subr.mxu0 0.0
  %614 = vmatpush1.msra.mxu0 0.0
  %615 = vmatprep.subr.mxu0 0.0
  %616 = vmatpush1.msra.mxu0 0.0
  %617 = vmatprep.subr.mxu0 0.0
  %618 = vmatpush1.msra.mxu0 0.0
  %619 = vmatprep.subr.mxu0 0.0
  %620 = vmatpush1.msra.mxu0 0.0
  %621 = vmatprep.subr.mxu0 0.0
  %622 = vmatpush1.msra.mxu0 0.0
  %623 = vmatprep.subr.mxu0 0.0
  %624 = vmatpush1.msra.mxu0 0.0
  %625 = vmatprep.subr.mxu0 0.0
  %626 = vmatpush1.msra.mxu0 0.0
  %627 = vmatprep.subr.mxu0 0.0
  %628 = vmatpush1.msra.mxu0 0.0
  %629 = vmatprep.subr.mxu0 0.0
  %630 = vmatpush1.msra.mxu0 0.0
  %631 = vmatprep.subr.mxu0 0.0
  %632 = vmatpush1.msra.mxu0 0.0
  %633 = vmatprep.subr.mxu0 0.0
  %634 = vmatpush1.msra.mxu0 0.0
  %635 = vmatprep.subr.mxu0 0.0
  %636 = vmatpush1.msra.mxu0 0.0
  %637 = vmatprep.subr.mxu0 0.0
  %638 = vmatpush1.msra.mxu0 0.0
  %639 = vmatprep.subr.mxu0 0.0
  %640 = vmatpush1.msra.mxu0 0.0
  %641 = vmatprep.subr.mxu0 0.0
  %642 = vmatpush1.msra.mxu0 0.0
  %643 = vmatprep.subr.mxu0 0.0
  %644 = vmatpush1.msra.mxu0 0.0
  %645 = vmatprep.subr.mxu0 0.0
  %646 = vmatpush1.msra.mxu0 0.0
  %647 = vmatprep.subr.mxu0 0.0
  %648 = vmatpush1.msra.mxu0 0.0
  %649 = vmatprep.subr.mxu0 0.0
  %650 = vmatpush1.msra.mxu0 0.0
  %651 = vmatprep.subr.mxu0 0.0
  %652 = vmatpush1.msra.mxu0 0.0
  %653 = vmatprep.subr.mxu0 0.0
  %654 = vmatpush1.msra.mxu0 0.0
  %655 = vmatprep.subr.mxu0 0.0
  %656 = vmatpush1.msra.mxu0 0.0
  %657 = vmatprep.subr.mxu0 0.0
  %658 = vmatpush1.msra.mxu0 0.0
  %659 = vmatprep.subr.mxu0 0.0
  %660 = vmatpush1.msra.mxu0 0.0
  %661 = vmatprep.subr.mxu0 0.0
  %662 = vmatpush1.msra.mxu0 0.0
  %663 = vmatprep.subr.mxu0 0.0
  %664 = vmatpush1.msra.mxu0 0.0
  %665 = vmatprep.subr.mxu0 0.0
  %666 = vmatpush1.msra.mxu0 0.0
  %667 = vmatprep.subr.mxu0 0.0
  %668 = vmatpush1.msra.mxu0 0.0
  %669 = vmatprep.mubr.f32.mxu0 0.0
  %670 = vmatmul.mubr.f32.gmra.mrb[0].mxu0 %v603
  %v671 = vpop.f32.mrb[0].mxu0
  %v672 = vadd.f32 0.0, %v671
  %v673 = vpop.f32.mrb[0].mxu0
  %674 = vdwg.mxu0
  %v675 = vadd.f32 %v179, %v672
  %v676 = vxor.u32 %v675, 2147483648
  %v677 = vmul.f32 %v676, 1.442695
  %v678 = vpow.pop %v677
  %v679 = vadd.f32 %v678, 1.0
  %v680 = vrcp.pop %v679
  %v681 = vmul.f32 1.0, %v680
  %v682 = vtanh.pop %v675
  %v683 = vsel %vm45, %v682, %v681
  %v684 = vmul.f32 %v683, %v593
  %686 = vrot.lane.b32.xlu0 %v683, 64
  %v687 = vpop.permute.xlu0 %686
  %v689 = vmul.f32 %v683, %v687
  %691 = vrot.lane.b32.xlu0 %v689, 32
  %v692 = vpop.permute.xlu0 %691
  %v694 = vadd.f32 %v684, %v692
  %v695 = vtanh.pop %v694
  %697 = vrot.lane.b32.xlu0 %v695, 64
  %v698 = vpop.permute.xlu0 %697
  %v700 = vmul.f32 %v683, %v698
  %702 = vrot.lane.b32.xlu0 %v700, 32
  %v703 = vpop.permute.xlu0 %702
  %v704 = vsel %vm197, %v703, 0
  %706 = vmatprep.subr.mxu0 0.0
  %707 = vmatpush1.msra.mxu0 %v56
  %708 = vmatprep.subr.mxu0 0.0
  %709 = vmatpush1.msra.mxu0 %v57
  %710 = vmatprep.subr.mxu0 0.0
  %711 = vmatpush1.msra.mxu0 %v58
  %712 = vmatprep.subr.mxu0 0.0
  %713 = vmatpush1.msra.mxu0 %v59
  %714 = vmatprep.subr.mxu0 0.0
  %715 = vmatpush1.msra.mxu0 0.0
  %716 = vmatprep.subr.mxu0 0.0
  %717 = vmatpush1.msra.mxu0 0.0
  %718 = vmatprep.subr.mxu0 0.0
  %719 = vmatpush1.msra.mxu0 0.0
  %720 = vmatprep.subr.mxu0 0.0
  %721 = vmatpush1.msra.mxu0 0.0
  %722 = vmatprep.subr.mxu0 0.0
  %723 = vmatpush1.msra.mxu0 0.0
  %724 = vmatprep.subr.mxu0 0.0
  %725 = vmatpush1.msra.mxu0 0.0
  %726 = vmatprep.subr.mxu0 0.0
  %727 = vmatpush1.msra.mxu0 0.0
  %728 = vmatprep.subr.mxu0 0.0
  %729 = vmatpush1.msra.mxu0 0.0
  %730 = vmatprep.subr.mxu0 0.0
  %731 = vmatpush1.msra.mxu0 0.0
  %732 = vmatprep.subr.mxu0 0.0
  %733 = vmatpush1.msra.mxu0 0.0
  %734 = vmatprep.subr.mxu0 0.0
  %735 = vmatpush1.msra.mxu0 0.0
  %736 = vmatprep.subr.mxu0 0.0
  %737 = vmatpush1.msra.mxu0 0.0
  %738 = vmatprep.subr.mxu0 0.0
  %739 = vmatpush1.msra.mxu0 0.0
  %740 = vmatprep.subr.mxu0 0.0
  %741 = vmatpush1.msra.mxu0 0.0
  %742 = vmatprep.subr.mxu0 0.0
  %743 = vmatpush1.msra.mxu0 0.0
  %744 = vmatprep.subr.mxu0 0.0
  %745 = vmatpush1.msra.mxu0 0.0
  %746 = vmatprep.subr.mxu0 0.0
  %747 = vmatpush1.msra.mxu0 0.0
  %748 = vmatprep.subr.mxu0 0.0
  %749 = vmatpush1.msra.mxu0 0.0
  %750 = vmatprep.subr.mxu0 0.0
  %751 = vmatpush1.msra.mxu0 0.0
  %752 = vmatprep.subr.mxu0 0.0
  %753 = vmatpush1.msra.mxu0 0.0
  %754 = vmatprep.subr.mxu0 0.0
  %755 = vmatpush1.msra.mxu0 0.0
  %756 = vmatprep.subr.mxu0 0.0
  %757 = vmatpush1.msra.mxu0 0.0
  %758 = vmatprep.subr.mxu0 0.0
  %759 = vmatpush1.msra.mxu0 0.0
  %760 = vmatprep.subr.mxu0 0.0
  %761 = vmatpush1.msra.mxu0 0.0
  %762 = vmatprep.subr.mxu0 0.0
  %763 = vmatpush1.msra.mxu0 0.0
  %764 = vmatprep.subr.mxu0 0.0
  %765 = vmatpush1.msra.mxu0 0.0
  %766 = vmatprep.subr.mxu0 0.0
  %767 = vmatpush1.msra.mxu0 0.0
  %768 = vmatprep.subr.mxu0 0.0
  %769 = vmatpush1.msra.mxu0 0.0
  %770 = vmatprep.mubr.f32.mxu0 0.0
  %771 = vmatmul.mubr.f32.gmra.mrb[0].mxu0 %v704
  %v772 = vpop.f32.mrb[0].mxu0
  %v773 = vadd.f32 0.0, %v772
  %v774 = vpop.f32.mrb[0].mxu0
  %775 = vdwg.mxu0
  %v776 = vadd.f32 %v184, %v773
  %v777 = vxor.u32 %v776, 2147483648
  %v778 = vmul.f32 %v777, 1.442695
  %v779 = vpow.pop %v778
  %v780 = vadd.f32 %v779, 1.0
  %v781 = vrcp.pop %v780
  %v782 = vmul.f32 1.0, %v781
  %v783 = vtanh.pop %v776
  %v784 = vsel %vm45, %v783, %v782
  %v785 = vmul.f32 %v784, %v694
  %787 = vrot.lane.b32.xlu0 %v784, 64
  %v788 = vpop.permute.xlu0 %787
  %v790 = vmul.f32 %v784, %v788
  %792 = vrot.lane.b32.xlu0 %v790, 32
  %v793 = vpop.permute.xlu0 %792
  %v795 = vadd.f32 %v785, %v793
  %v796 = vtanh.pop %v795
  %798 = vrot.lane.b32.xlu0 %v796, 64
  %v799 = vpop.permute.xlu0 %798
  %v801 = vmul.f32 %v784, %v799
  %803 = vrot.lane.b32.xlu0 %v801, 32
  %v804 = vpop.permute.xlu0 %803
  %v805 = vsel %vm197, %v804, 0
  %807 = vmatprep.subr.mxu0 0.0
  %808 = vmatpush1.msra.mxu0 %v56
  %809 = vmatprep.subr.mxu0 0.0
  %810 = vmatpush1.msra.mxu0 %v57
  %811 = vmatprep.subr.mxu0 0.0
  %812 = vmatpush1.msra.mxu0 %v58
  %813 = vmatprep.subr.mxu0 0.0
  %814 = vmatpush1.msra.mxu0 %v59
  %815 = vmatprep.subr.mxu0 0.0
  %816 = vmatpush1.msra.mxu0 0.0
  %817 = vmatprep.subr.mxu0 0.0
  %818 = vmatpush1.msra.mxu0 0.0
  %819 = vmatprep.subr.mxu0 0.0
  %820 = vmatpush1.msra.mxu0 0.0
  %821 = vmatprep.subr.mxu0 0.0
  %822 = vmatpush1.msra.mxu0 0.0
  %823 = vmatprep.subr.mxu0 0.0
  %824 = vmatpush1.msra.mxu0 0.0
  %825 = vmatprep.subr.mxu0 0.0
  %826 = vmatpush1.msra.mxu0 0.0
  %827 = vmatprep.subr.mxu0 0.0
  %828 = vmatpush1.msra.mxu0 0.0
  %829 = vmatprep.subr.mxu0 0.0
  %830 = vmatpush1.msra.mxu0 0.0
  %831 = vmatprep.subr.mxu0 0.0
  %832 = vmatpush1.msra.mxu0 0.0
  %833 = vmatprep.subr.mxu0 0.0
  %834 = vmatpush1.msra.mxu0 0.0
  %835 = vmatprep.subr.mxu0 0.0
  %836 = vmatpush1.msra.mxu0 0.0
  %837 = vmatprep.subr.mxu0 0.0
  %838 = vmatpush1.msra.mxu0 0.0
  %839 = vmatprep.subr.mxu0 0.0
  %840 = vmatpush1.msra.mxu0 0.0
  %841 = vmatprep.subr.mxu0 0.0
  %842 = vmatpush1.msra.mxu0 0.0
  %843 = vmatprep.subr.mxu0 0.0
  %844 = vmatpush1.msra.mxu0 0.0
  %845 = vmatprep.subr.mxu0 0.0
  %846 = vmatpush1.msra.mxu0 0.0
  %847 = vmatprep.subr.mxu0 0.0
  %848 = vmatpush1.msra.mxu0 0.0
  %849 = vmatprep.subr.mxu0 0.0
  %850 = vmatpush1.msra.mxu0 0.0
  %851 = vmatprep.subr.mxu0 0.0
  %852 = vmatpush1.msra.mxu0 0.0
  %853 = vmatprep.subr.mxu0 0.0
  %854 = vmatpush1.msra.mxu0 0.0
  %855 = vmatprep.subr.mxu0 0.0
  %856 = vmatpush1.msra.mxu0 0.0
  %857 = vmatprep.subr.mxu0 0.0
  %858 = vmatpush1.msra.mxu0 0.0
  %859 = vmatprep.subr.mxu0 0.0
  %860 = vmatpush1.msra.mxu0 0.0
  %861 = vmatprep.subr.mxu0 0.0
  %862 = vmatpush1.msra.mxu0 0.0
  %863 = vmatprep.subr.mxu0 0.0
  %864 = vmatpush1.msra.mxu0 0.0
  %865 = vmatprep.subr.mxu0 0.0
  %866 = vmatpush1.msra.mxu0 0.0
  %867 = vmatprep.subr.mxu0 0.0
  %868 = vmatpush1.msra.mxu0 0.0
  %869 = vmatprep.subr.mxu0 0.0
  %870 = vmatpush1.msra.mxu0 0.0
  %871 = vmatprep.mubr.f32.mxu0 0.0
  %872 = vmatmul.mubr.f32.gmra.mrb[0].mxu0 %v805
  %v873 = vpop.f32.mrb[0].mxu0
  %v874 = vadd.f32 0.0, %v873
  %v875 = vpop.f32.mrb[0].mxu0
  %876 = vdwg.mxu0
  %v877 = vadd.f32 %v189, %v874
  %v878 = vxor.u32 %v877, 2147483648
  %v879 = vmul.f32 %v878, 1.442695
  %v880 = vpow.pop %v879
  %v881 = vadd.f32 %v880, 1.0
  %v882 = vrcp.pop %v881
  %v883 = vmul.f32 1.0, %v882
  %v884 = vtanh.pop %v877
  %v885 = vsel %vm45, %v884, %v883
  %v886 = vmul.f32 %v885, %v795
  %888 = vrot.lane.b32.xlu0 %v885, 64
  %v889 = vpop.permute.xlu0 %888
  %v891 = vmul.f32 %v885, %v889
  %893 = vrot.lane.b32.xlu0 %v891, 32
  %v894 = vpop.permute.xlu0 %893
  %v896 = vadd.f32 %v886, %v894
  %v897 = vtanh.pop %v896
  %899 = vrot.lane.b32.xlu0 %v897, 64
  %v900 = vpop.permute.xlu0 %899
  %v902 = vmul.f32 %v885, %v900
  %904 = vrot.lane.b32.xlu0 %v902, 32
  %v905 = vpop.permute.xlu0 %904
  %v906 = vsel %vm197, %v905, 0
  %908 = vmatprep.subr.mxu0 0.0
  %909 = vmatpush1.msra.mxu0 %v56
  %910 = vmatprep.subr.mxu0 0.0
  %911 = vmatpush1.msra.mxu0 %v57
  %912 = vmatprep.subr.mxu0 0.0
  %913 = vmatpush1.msra.mxu0 %v58
  %914 = vmatprep.subr.mxu0 0.0
  %915 = vmatpush1.msra.mxu0 %v59
  %916 = vmatprep.subr.mxu0 0.0
  %917 = vmatpush1.msra.mxu0 0.0
  %918 = vmatprep.subr.mxu0 0.0
  %919 = vmatpush1.msra.mxu0 0.0
  %920 = vmatprep.subr.mxu0 0.0
  %921 = vmatpush1.msra.mxu0 0.0
  %922 = vmatprep.subr.mxu0 0.0
  %923 = vmatpush1.msra.mxu0 0.0
  %924 = vmatprep.subr.mxu0 0.0
  %925 = vmatpush1.msra.mxu0 0.0
  %926 = vmatprep.subr.mxu0 0.0
  %927 = vmatpush1.msra.mxu0 0.0
  %928 = vmatprep.subr.mxu0 0.0
  %929 = vmatpush1.msra.mxu0 0.0
  %930 = vmatprep.subr.mxu0 0.0
  %931 = vmatpush1.msra.mxu0 0.0
  %932 = vmatprep.subr.mxu0 0.0
  %933 = vmatpush1.msra.mxu0 0.0
  %934 = vmatprep.subr.mxu0 0.0
  %935 = vmatpush1.msra.mxu0 0.0
  %936 = vmatprep.subr.mxu0 0.0
  %937 = vmatpush1.msra.mxu0 0.0
  %938 = vmatprep.subr.mxu0 0.0
  %939 = vmatpush1.msra.mxu0 0.0
  %940 = vmatprep.subr.mxu0 0.0
  %941 = vmatpush1.msra.mxu0 0.0
  %942 = vmatprep.subr.mxu0 0.0
  %943 = vmatpush1.msra.mxu0 0.0
  %944 = vmatprep.subr.mxu0 0.0
  %945 = vmatpush1.msra.mxu0 0.0
  %946 = vmatprep.subr.mxu0 0.0
  %947 = vmatpush1.msra.mxu0 0.0
  %948 = vmatprep.subr.mxu0 0.0
  %949 = vmatpush1.msra.mxu0 0.0
  %950 = vmatprep.subr.mxu0 0.0
  %951 = vmatpush1.msra.mxu0 0.0
  %952 = vmatprep.subr.mxu0 0.0
  %953 = vmatpush1.msra.mxu0 0.0
  %954 = vmatprep.subr.mxu0 0.0
  %955 = vmatpush1.msra.mxu0 0.0
  %956 = vmatprep.subr.mxu0 0.0
  %957 = vmatpush1.msra.mxu0 0.0
  %958 = vmatprep.subr.mxu0 0.0
  %959 = vmatpush1.msra.mxu0 0.0
  %960 = vmatprep.subr.mxu0 0.0
  %961 = vmatpush1.msra.mxu0 0.0
  %962 = vmatprep.subr.mxu0 0.0
  %963 = vmatpush1.msra.mxu0 0.0
  %964 = vmatprep.subr.mxu0 0.0
  %965 = vmatpush1.msra.mxu0 0.0
  %966 = vmatprep.subr.mxu0 0.0
  %967 = vmatpush1.msra.mxu0 0.0
  %968 = vmatprep.subr.mxu0 0.0
  %969 = vmatpush1.msra.mxu0 0.0
  %970 = vmatprep.subr.mxu0 0.0
  %971 = vmatpush1.msra.mxu0 0.0
  %972 = vmatprep.mubr.f32.mxu0 0.0
  %973 = vmatmul.mubr.f32.gmra.mrb[0].mxu0 %v906
  %v974 = vpop.f32.mrb[0].mxu0
  %v975 = vadd.f32 0.0, %v974
  %v976 = vpop.f32.mrb[0].mxu0
  %977 = vdwg.mxu0
  %v978 = vadd.f32 %v194, %v975
  %v979 = vxor.u32 %v978, 2147483648
  %v980 = vmul.f32 %v979, 1.442695
  %v981 = vpow.pop %v980
  %v982 = vadd.f32 %v981, 1.0
  %v983 = vrcp.pop %v982
  %v984 = vmul.f32 1.0, %v983
  %v985 = vtanh.pop %v978
  %v986 = vsel %vm45, %v985, %v984
  %v987 = vmul.f32 %v986, %v896
  %989 = vrot.lane.b32.xlu0 %v986, 64
  %v990 = vpop.permute.xlu0 %989
  %v992 = vmul.f32 %v986, %v990
  %994 = vrot.lane.b32.xlu0 %v992, 32
  %v995 = vpop.permute.xlu0 %994
  %v997 = vadd.f32 %v987, %v995
  %v998 = vtanh.pop %v997
  %1000 = vrot.lane.b32.xlu0 %v998, 64
  %v1001 = vpop.permute.xlu0 %1000
  %v1003 = vmul.f32 %v986, %v1001
  %v1004 = vld [vmem:[%s4] sm:$0xff]
  %v1005 = vld [vmem:[%s4 + $0x8] sm:$0xff]
  %v1006 = vld [vmem:[%s4 + $0x10] sm:$0xff]
  %v1007 = vld [vmem:[%s4 + $0x18] sm:$0xff]
  %v1008 = vld [vmem:[%s5] sm:$0xff]
  %v1009 = vld [vmem:[%s5 + $0x8] sm:$0xff]
  %v1010 = vld [vmem:[%s5 + $0x10] sm:$0xff]
  %v1011 = vld [vmem:[%s5 + $0x18] sm:$0xff]
  %v1012 = vld [vmem:[%s6] sm:$0x1]
  %v1014 = vlaneseq
  %v1015 = vshrl.u32 %v1014, 7
  %v1016 = vsub.s32 0, %v1015
  %v1017 = vrot.slane %v1012, %v1016
  %1020 = vrot.lane.b32.xlu0 %v1003, 32
  %v1021 = vpop.permute.xlu0 %1020
  %v1022 = vsel %vm197, %v1021, 0
  %1024 = vmatprep.subr.mxu0 0.0
  %1025 = vmatpush1.msra.mxu0 %v1004
  %1026 = vmatprep.subr.mxu0 0.0
  %1027 = vmatpush1.msra.mxu0 %v1005
  %1028 = vmatprep.subr.mxu0 0.0
  %1029 = vmatpush1.msra.mxu0 %v1006
  %1030 = vmatprep.subr.mxu0 0.0
  %1031 = vmatpush1.msra.mxu0 %v1007
  %1032 = vmatprep.subr.mxu0 0.0
  %1033 = vmatpush1.msra.mxu0 0.0
  %1034 = vmatprep.subr.mxu0 0.0
  %1035 = vmatpush1.msra.mxu0 0.0
  %1036 = vmatprep.subr.mxu0 0.0
  %1037 = vmatpush1.msra.mxu0 0.0
  %1038 = vmatprep.subr.mxu0 0.0
  %1039 = vmatpush1.msra.mxu0 0.0
  %1040 = vmatprep.subr.mxu0 0.0
  %1041 = vmatpush1.msra.mxu0 0.0
  %1042 = vmatprep.subr.mxu0 0.0
  %1043 = vmatpush1.msra.mxu0 0.0
  %1044 = vmatprep.subr.mxu0 0.0
  %1045 = vmatpush1.msra.mxu0 0.0
  %1046 = vmatprep.subr.mxu0 0.0
  %1047 = vmatpush1.msra.mxu0 0.0
  %1048 = vmatprep.subr.mxu0 0.0
  %1049 = vmatpush1.msra.mxu0 0.0
  %1050 = vmatprep.subr.mxu0 0.0
  %1051 = vmatpush1.msra.mxu0 0.0
  %1052 = vmatprep.subr.mxu0 0.0
  %1053 = vmatpush1.msra.mxu0 0.0
  %1054 = vmatprep.subr.mxu0 0.0
  %1055 = vmatpush1.msra.mxu0 0.0
  %1056 = vmatprep.subr.mxu0 0.0
  %1057 = vmatpush1.msra.mxu0 0.0
  %1058 = vmatprep.subr.mxu0 0.0
  %1059 = vmatpush1.msra.mxu0 0.0
  %1060 = vmatprep.subr.mxu0 0.0
  %1061 = vmatpush1.msra.mxu0 0.0
  %1062 = vmatprep.subr.mxu0 0.0
  %1063 = vmatpush1.msra.mxu0 0.0
  %1064 = vmatprep.subr.mxu0 0.0
  %1065 = vmatpush1.msra.mxu0 0.0
  %1066 = vmatprep.subr.mxu0 0.0
  %1067 = vmatpush1.msra.mxu0 0.0
  %1068 = vmatprep.subr.mxu0 0.0
  %1069 = vmatpush1.msra.mxu0 0.0
  %1070 = vmatprep.subr.mxu0 0.0
  %1071 = vmatpush1.msra.mxu0 0.0
  %1072 = vmatprep.subr.mxu0 0.0
  %1073 = vmatpush1.msra.mxu0 0.0
  %1074 = vmatprep.subr.mxu0 0.0
  %1075 = vmatpush1.msra.mxu0 0.0
  %1076 = vmatprep.subr.mxu0 0.0
  %1077 = vmatpush1.msra.mxu0 0.0
  %1078 = vmatprep.subr.mxu0 0.0
  %1079 = vmatpush1.msra.mxu0 0.0
  %1080 = vmatprep.subr.mxu0 0.0
  %1081 = vmatpush1.msra.mxu0 0.0
  %1082 = vmatprep.subr.mxu0 0.0
  %1083 = vmatpush1.msra.mxu0 0.0
  %1084 = vmatprep.subr.mxu0 0.0
  %1085 = vmatpush1.msra.mxu0 0.0
  %1086 = vmatprep.subr.mxu0 0.0
  %1087 = vmatpush1.msra.mxu0 0.0
  %1088 = vmatprep.mubr.f32.mxu0 0.0
  %1089 = vmatmul.mubr.f32.gmra.mrb[0].mxu0 %v300
  %v1090 = vpop.f32.mrb[0].mxu0
  %v1091 = vadd.f32 %v1017, %v1090
  %v1092 = vpop.f32.mrb[0].mxu0
  %1093 = vmatprep.mubr.f32.mxu0 0.0
  %1094 = vmatmul.mubr.f32.gmra.mrb[0].mxu0 %v401
  %v1095 = vpop.f32.mrb[0].mxu0
  %v1096 = vadd.f32 %v1017, %v1095
  %v1097 = vpop.f32.mrb[0].mxu0
  %1098 = vmatprep.mubr.f32.mxu0 0.0
  %1099 = vmatmul.mubr.f32.gmra.mrb[0].mxu0 %v502
  %v1100 = vpop.f32.mrb[0].mxu0
  %v1101 = vadd.f32 %v1017, %v1100
  %v1102 = vpop.f32.mrb[0].mxu0
  %1103 = vmatprep.mubr.f32.mxu0 0.0
  %1104 = vmatmul.mubr.f32.gmra.mrb[0].mxu0 %v603
  %v1105 = vpop.f32.mrb[0].mxu0
  %v1106 = vadd.f32 %v1017, %v1105
  %v1107 = vpop.f32.mrb[0].mxu0
  %1108 = vmatprep.mubr.f32.mxu0 0.0
  %1109 = vmatmul.mubr.f32.gmra.mrb[0].mxu0 %v704
  %v1110 = vpop.f32.mrb[0].mxu0
  %v1111 = vadd.f32 %v1017, %v1110
  %v1112 = vpop.f32.mrb[0].mxu0
  %1113 = vmatprep.mubr.f32.mxu0 0.0
  %1114 = vmatmul.mubr.f32.gmra.mrb[0].mxu0 %v805
  %v1115 = vpop.f32.mrb[0].mxu0
  %v1116 = vadd.f32 %v1017, %v1115
  %v1117 = vpop.f32.mrb[0].mxu0
  %1118 = vmatprep.mubr.f32.mxu0 0.0
  %1119 = vmatmul.mubr.f32.gmra.mrb[0].mxu0 %v906
  %v1120 = vpop.f32.mrb[0].mxu0
  %v1121 = vadd.f32 %v1017, %v1120
  %v1122 = vpop.f32.mrb[0].mxu0
  %1123 = vmatprep.mubr.f32.mxu0 0.0
  %1124 = vmatmul.mubr.f32.gmra.mrb[0].mxu0 %v1022
  %v1125 = vpop.f32.mrb[0].mxu0
  %v1126 = vadd.f32 %v1017, %v1125
  %v1127 = vpop.f32.mrb[0].mxu0
  %1128 = vdwg.mxu0
  %1129 = vmatprep.subr.mxu0 0.0
  %1130 = vmatpush1.msra.mxu0 %v1008
  %1131 = vmatprep.subr.mxu0 0.0
  %1132 = vmatpush1.msra.mxu0 %v1009
  %1133 = vmatprep.subr.mxu0 0.0
  %1134 = vmatpush1.msra.mxu0 %v1010
  %1135 = vmatprep.subr.mxu0 0.0
  %1136 = vmatpush1.msra.mxu0 %v1011
  %1137 = vmatprep.subr.mxu0 0.0
  %1138 = vmatpush1.msra.mxu0 0.0
  %1139 = vmatprep.subr.mxu0 0.0
  %1140 = vmatpush1.msra.mxu0 0.0
  %1141 = vmatprep.subr.mxu0 0.0
  %1142 = vmatpush1.msra.mxu0 0.0
  %1143 = vmatprep.subr.mxu0 0.0
  %1144 = vmatpush1.msra.mxu0 0.0
  %1145 = vmatprep.subr.mxu0 0.0
  %1146 = vmatpush1.msra.mxu0 0.0
  %1147 = vmatprep.subr.mxu0 0.0
  %1148 = vmatpush1.msra.mxu0 0.0
  %1149 = vmatprep.subr.mxu0 0.0
  %1150 = vmatpush1.msra.mxu0 0.0
  %1151 = vmatprep.subr.mxu0 0.0
  %1152 = vmatpush1.msra.mxu0 0.0
  %1153 = vmatprep.subr.mxu0 0.0
  %1154 = vmatpush1.msra.mxu0 0.0
  %1155 = vmatprep.subr.mxu0 0.0
  %1156 = vmatpush1.msra.mxu0 0.0
  %1157 = vmatprep.subr.mxu0 0.0
  %1158 = vmatpush1.msra.mxu0 0.0
  %1159 = vmatprep.subr.mxu0 0.0
  %1160 = vmatpush1.msra.mxu0 0.0
  %1161 = vmatprep.subr.mxu0 0.0
  %1162 = vmatpush1.msra.mxu0 0.0
  %1163 = vmatprep.subr.mxu0 0.0
  %1164 = vmatpush1.msra.mxu0 0.0
  %1165 = vmatprep.subr.mxu0 0.0
  %1166 = vmatpush1.msra.mxu0 0.0
  %1167 = vmatprep.subr.mxu0 0.0
  %1168 = vmatpush1.msra.mxu0 0.0
  %1169 = vmatprep.subr.mxu0 0.0
  %1170 = vmatpush1.msra.mxu0 0.0
  %1171 = vmatprep.subr.mxu0 0.0
  %1172 = vmatpush1.msra.mxu0 0.0
  %1173 = vmatprep.subr.mxu0 0.0
  %1174 = vmatpush1.msra.mxu0 0.0
  %1175 = vmatprep.subr.mxu0 0.0
  %1176 = vmatpush1.msra.mxu0 0.0
  %1177 = vmatprep.subr.mxu0 0.0
  %1178 = vmatpush1.msra.mxu0 0.0
  %1179 = vmatprep.subr.mxu0 0.0
  %1180 = vmatpush1.msra.mxu0 0.0
  %1181 = vmatprep.subr.mxu0 0.0
  %1182 = vmatpush1.msra.mxu0 0.0
  %1183 = vmatprep.subr.mxu0 0.0
  %1184 = vmatpush1.msra.mxu0 0.0
  %1185 = vmatprep.subr.mxu0 0.0
  %1186 = vmatpush1.msra.mxu0 0.0
  %1187 = vmatprep.subr.mxu0 0.0
  %1188 = vmatpush1.msra.mxu0 0.0
  %1189 = vmatprep.subr.mxu0 0.0
  %1190 = vmatpush1.msra.mxu0 0.0
  %1191 = vmatprep.subr.mxu0 0.0
  %1192 = vmatpush1.msra.mxu0 0.0
  %1193 = vmatprep.mubr.f32.mxu0 0.0
  %1194 = vmatmul.mubr.f32.gmra.mrb[0].mxu0 %v199
  %v1195 = vpop.f32.mrb[0].mxu0
  %v1196 = vadd.f32 0.0, %v1195
  %v1197 = vpop.f32.mrb[0].mxu0
  %1198 = vdwg.mxu0
  %v1199 = vadd.f32 %v1091, %v1196
  %v1200 = vxor.u32 %v1199, 2147483648
  %v1201 = vmul.f32 %v1200, 1.442695
  %v1202 = vpow.pop %v1201
  %v1203 = vadd.f32 %v1202, 1.0
  %v1204 = vrcp.pop %v1203
  %v1205 = vmul.f32 1.0, %v1204
  %v1206 = vtanh.pop %v1199
  %v1207 = vsel %vm45, %v1206, %v1205
  %v1208 = vmul.f32 %v1207, 0.0
  %1210 = vrot.lane.b32.xlu0 %v1207, 64
  %v1211 = vpop.permute.xlu0 %1210
  %v1213 = vmul.f32 %v1207, %v1211
  %1215 = vrot.lane.b32.xlu0 %v1213, 32
  %v1216 = vpop.permute.xlu0 %1215
  %v1218 = vadd.f32 %v1208, %v1216
  %v1219 = vtanh.pop %v1218
  %1221 = vrot.lane.b32.xlu0 %v1219, 64
  %v1222 = vpop.permute.xlu0 %1221
  %v1224 = vmul.f32 %v1207, %v1222
  %1226 = vrot.lane.b32.xlu0 %v1224, 32
  %v1227 = vpop.permute.xlu0 %1226
  %v1228 = vsel %vm197, %v1227, 0
  %1230 = vmatprep.subr.mxu0 0.0
  %1231 = vmatpush1.msra.mxu0 %v1008
  %1232 = vmatprep.subr.mxu0 0.0
  %1233 = vmatpush1.msra.mxu0 %v1009
  %1234 = vmatprep.subr.mxu0 0.0
  %1235 = vmatpush1.msra.mxu0 %v1010
  %1236 = vmatprep.subr.mxu0 0.0
  %1237 = vmatpush1.msra.mxu0 %v1011
  %1238 = vmatprep.subr.mxu0 0.0
  %1239 = vmatpush1.msra.mxu0 0.0
  %1240 = vmatprep.subr.mxu0 0.0
  %1241 = vmatpush1.msra.mxu0 0.0
  %1242 = vmatprep.subr.mxu0 0.0
  %1243 = vmatpush1.msra.mxu0 0.0
  %1244 = vmatprep.subr.mxu0 0.0
  %1245 = vmatpush1.msra.mxu0 0.0
  %1246 = vmatprep.subr.mxu0 0.0
  %1247 = vmatpush1.msra.mxu0 0.0
  %1248 = vmatprep.subr.mxu0 0.0
  %1249 = vmatpush1.msra.mxu0 0.0
  %1250 = vmatprep.subr.mxu0 0.0
  %1251 = vmatpush1.msra.mxu0 0.0
  %1252 = vmatprep.subr.mxu0 0.0
  %1253 = vmatpush1.msra.mxu0 0.0
  %1254 = vmatprep.subr.mxu0 0.0
  %1255 = vmatpush1.msra.mxu0 0.0
  %1256 = vmatprep.subr.mxu0 0.0
  %1257 = vmatpush1.msra.mxu0 0.0
  %1258 = vmatprep.subr.mxu0 0.0
  %1259 = vmatpush1.msra.mxu0 0.0
  %1260 = vmatprep.subr.mxu0 0.0
  %1261 = vmatpush1.msra.mxu0 0.0
  %1262 = vmatprep.subr.mxu0 0.0
  %1263 = vmatpush1.msra.mxu0 0.0
  %1264 = vmatprep.subr.mxu0 0.0
  %1265 = vmatpush1.msra.mxu0 0.0
  %1266 = vmatprep.subr.mxu0 0.0
  %1267 = vmatpush1.msra.mxu0 0.0
  %1268 = vmatprep.subr.mxu0 0.0
  %1269 = vmatpush1.msra.mxu0 0.0
  %1270 = vmatprep.subr.mxu0 0.0
  %1271 = vmatpush1.msra.mxu0 0.0
  %1272 = vmatprep.subr.mxu0 0.0
  %1273 = vmatpush1.msra.mxu0 0.0
  %1274 = vmatprep.subr.mxu0 0.0
  %1275 = vmatpush1.msra.mxu0 0.0
  %1276 = vmatprep.subr.mxu0 0.0
  %1277 = vmatpush1.msra.mxu0 0.0
  %1278 = vmatprep.subr.mxu0 0.0
  %1279 = vmatpush1.msra.mxu0 0.0
  %1280 = vmatprep.subr.mxu0 0.0
  %1281 = vmatpush1.msra.mxu0 0.0
  %1282 = vmatprep.subr.mxu0 0.0
  %1283 = vmatpush1.msra.mxu0 0.0
  %1284 = vmatprep.subr.mxu0 0.0
  %1285 = vmatpush1.msra.mxu0 0.0
  %1286 = vmatprep.subr.mxu0 0.0
  %1287 = vmatpush1.msra.mxu0 0.0
  %1288 = vmatprep.subr.mxu0 0.0
  %1289 = vmatpush1.msra.mxu0 0.0
  %1290 = vmatprep.subr.mxu0 0.0
  %1291 = vmatpush1.msra.mxu0 0.0
  %1292 = vmatprep.subr.mxu0 0.0
  %1293 = vmatpush1.msra.mxu0 0.0
  %1294 = vmatprep.mubr.f32.mxu0 0.0
  %1295 = vmatmul.mubr.f32.gmra.mrb[0].mxu0 %v1228
  %v1296 = vpop.f32.mrb[0].mxu0
  %v1297 = vadd.f32 0.0, %v1296
  %v1298 = vpop.f32.mrb[0].mxu0
  %1299 = vdwg.mxu0
  %v1300 = vadd.f32 %v1096, %v1297
  %v1301 = vxor.u32 %v1300, 2147483648
  %v1302 = vmul.f32 %v1301, 1.442695
  %v1303 = vpow.pop %v1302
  %v1304 = vadd.f32 %v1303, 1.0
  %v1305 = vrcp.pop %v1304
  %v1306 = vmul.f32 1.0, %v1305
  %v1307 = vtanh.pop %v1300
  %v1308 = vsel %vm45, %v1307, %v1306
  %v1309 = vmul.f32 %v1308, %v1218
  %1311 = vrot.lane.b32.xlu0 %v1308, 64
  %v1312 = vpop.permute.xlu0 %1311
  %v1314 = vmul.f32 %v1308, %v1312
  %1316 = vrot.lane.b32.xlu0 %v1314, 32
  %v1317 = vpop.permute.xlu0 %1316
  %v1319 = vadd.f32 %v1309, %v1317
  %v1320 = vtanh.pop %v1319
  %1322 = vrot.lane.b32.xlu0 %v1320, 64
  %v1323 = vpop.permute.xlu0 %1322
  %v1325 = vmul.f32 %v1308, %v1323
  %1327 = vrot.lane.b32.xlu0 %v1325, 32
  %v1328 = vpop.permute.xlu0 %1327
  %v1329 = vsel %vm197, %v1328, 0
  %1331 = vmatprep.subr.mxu0 0.0
  %1332 = vmatpush1.msra.mxu0 %v1008
  %1333 = vmatprep.subr.mxu0 0.0
  %1334 = vmatpush1.msra.mxu0 %v1009
  %1335 = vmatprep.subr.mxu0 0.0
  %1336 = vmatpush1.msra.mxu0 %v1010
  %1337 = vmatprep.subr.mxu0 0.0
  %1338 = vmatpush1.msra.mxu0 %v1011
  %1339 = vmatprep.subr.mxu0 0.0
  %1340 = vmatpush1.msra.mxu0 0.0
  %1341 = vmatprep.subr.mxu0 0.0
  %1342 = vmatpush1.msra.mxu0 0.0
  %1343 = vmatprep.subr.mxu0 0.0
  %1344 = vmatpush1.msra.mxu0 0.0
  %1345 = vmatprep.subr.mxu0 0.0
  %1346 = vmatpush1.msra.mxu0 0.0
  %1347 = vmatprep.subr.mxu0 0.0
  %1348 = vmatpush1.msra.mxu0 0.0
  %1349 = vmatprep.subr.mxu0 0.0
  %1350 = vmatpush1.msra.mxu0 0.0
  %1351 = vmatprep.subr.mxu0 0.0
  %1352 = vmatpush1.msra.mxu0 0.0
  %1353 = vmatprep.subr.mxu0 0.0
  %1354 = vmatpush1.msra.mxu0 0.0
  %1355 = vmatprep.subr.mxu0 0.0
  %1356 = vmatpush1.msra.mxu0 0.0
  %1357 = vmatprep.subr.mxu0 0.0
  %1358 = vmatpush1.msra.mxu0 0.0
  %1359 = vmatprep.subr.mxu0 0.0
  %1360 = vmatpush1.msra.mxu0 0.0
  %1361 = vmatprep.subr.mxu0 0.0
  %1362 = vmatpush1.msra.mxu0 0.0
  %1363 = vmatprep.subr.mxu0 0.0
  %1364 = vmatpush1.msra.mxu0 0.0
  %1365 = vmatprep.subr.mxu0 0.0
  %1366 = vmatpush1.msra.mxu0 0.0
  %1367 = vmatprep.subr.mxu0 0.0
  %1368 = vmatpush1.msra.mxu0 0.0
  %1369 = vmatprep.subr.mxu0 0.0
  %1370 = vmatpush1.msra.mxu0 0.0
  %1371 = vmatprep.subr.mxu0 0.0
  %1372 = vmatpush1.msra.mxu0 0.0
  %1373 = vmatprep.subr.mxu0 0.0
  %1374 = vmatpush1.msra.mxu0 0.0
  %1375 = vmatprep.subr.mxu0 0.0
  %1376 = vmatpush1.msra.mxu0 0.0
  %1377 = vmatprep.subr.mxu0 0.0
  %1378 = vmatpush1.msra.mxu0 0.0
  %1379 = vmatprep.subr.mxu0 0.0
  %1380 = vmatpush1.msra.mxu0 0.0
  %1381 = vmatprep.subr.mxu0 0.0
  %1382 = vmatpush1.msra.mxu0 0.0
  %1383 = vmatprep.subr.mxu0 0.0
  %1384 = vmatpush1.msra.mxu0 0.0
  %1385 = vmatprep.subr.mxu0 0.0
  %1386 = vmatpush1.msra.mxu0 0.0
  %1387 = vmatprep.subr.mxu0 0.0
  %1388 = vmatpush1.msra.mxu0 0.0
  %1389 = vmatprep.subr.mxu0 0.0
  %1390 = vmatpush1.msra.mxu0 0.0
  %1391 = vmatprep.subr.mxu0 0.0
  %1392 = vmatpush1.msra.mxu0 0.0
  %1393 = vmatprep.subr.mxu0 0.0
  %1394 = vmatpush1.msra.mxu0 0.0
  %1395 = vmatprep.mubr.f32.mxu0 0.0
  %1396 = vmatmul.mubr.f32.gmra.mrb[0].mxu0 %v1329
  %v1397 = vpop.f32.mrb[0].mxu0
  %v1398 = vadd.f32 0.0, %v1397
  %v1399 = vpop.f32.mrb[0].mxu0
  %1400 = vdwg.mxu0
  %v1401 = vadd.f32 %v1101, %v1398
  %v1402 = vxor.u32 %v1401, 2147483648
  %v1403 = vmul.f32 %v1402, 1.442695
  %v1404 = vpow.pop %v1403
  %v1405 = vadd.f32 %v1404, 1.0
  %v1406 = vrcp.pop %v1405
  %v1407 = vmul.f32 1.0, %v1406
  %v1408 = vtanh.pop %v1401
  %v1409 = vsel %vm45, %v1408, %v1407
  %v1410 = vmul.f32 %v1409, %v1319
  %1412 = vrot.lane.b32.xlu0 %v1409, 64
  %v1413 = vpop.permute.xlu0 %1412
  %v1415 = vmul.f32 %v1409, %v1413
  %1417 = vrot.lane.b32.xlu0 %v1415, 32
  %v1418 = vpop.permute.xlu0 %1417
  %v1420 = vadd.f32 %v1410, %v1418
  %v1421 = vtanh.pop %v1420
  %1423 = vrot.lane.b32.xlu0 %v1421, 64
  %v1424 = vpop.permute.xlu0 %1423
  %v1426 = vmul.f32 %v1409, %v1424
  %1428 = vrot.lane.b32.xlu0 %v1426, 32
  %v1429 = vpop.permute.xlu0 %1428
  %v1430 = vsel %vm197, %v1429, 0
  %1432 = vmatprep.subr.mxu0 0.0
  %1433 = vmatpush1.msra.mxu0 %v1008
  %1434 = vmatprep.subr.mxu0 0.0
  %1435 = vmatpush1.msra.mxu0 %v1009
  %1436 = vmatprep.subr.mxu0 0.0
  %1437 = vmatpush1.msra.mxu0 %v1010
  %1438 = vmatprep.subr.mxu0 0.0
  %1439 = vmatpush1.msra.mxu0 %v1011
  %1440 = vmatprep.subr.mxu0 0.0
  %1441 = vmatpush1.msra.mxu0 0.0
  %1442 = vmatprep.subr.mxu0 0.0
  %1443 = vmatpush1.msra.mxu0 0.0
  %1444 = vmatprep.subr.mxu0 0.0
  %1445 = vmatpush1.msra.mxu0 0.0
  %1446 = vmatprep.subr.mxu0 0.0
  %1447 = vmatpush1.msra.mxu0 0.0
  %1448 = vmatprep.subr.mxu0 0.0
  %1449 = vmatpush1.msra.mxu0 0.0
  %1450 = vmatprep.subr.mxu0 0.0
  %1451 = vmatpush1.msra.mxu0 0.0
  %1452 = vmatprep.subr.mxu0 0.0
  %1453 = vmatpush1.msra.mxu0 0.0
  %1454 = vmatprep.subr.mxu0 0.0
  %1455 = vmatpush1.msra.mxu0 0.0
  %1456 = vmatprep.subr.mxu0 0.0
  %1457 = vmatpush1.msra.mxu0 0.0
  %1458 = vmatprep.subr.mxu0 0.0
  %1459 = vmatpush1.msra.mxu0 0.0
  %1460 = vmatprep.subr.mxu0 0.0
  %1461 = vmatpush1.msra.mxu0 0.0
  %1462 = vmatprep.subr.mxu0 0.0
  %1463 = vmatpush1.msra.mxu0 0.0
  %1464 = vmatprep.subr.mxu0 0.0
  %1465 = vmatpush1.msra.mxu0 0.0
  %1466 = vmatprep.subr.mxu0 0.0
  %1467 = vmatpush1.msra.mxu0 0.0
  %1468 = vmatprep.subr.mxu0 0.0
  %1469 = vmatpush1.msra.mxu0 0.0
  %1470 = vmatprep.subr.mxu0 0.0
  %1471 = vmatpush1.msra.mxu0 0.0
  %1472 = vmatprep.subr.mxu0 0.0
  %1473 = vmatpush1.msra.mxu0 0.0
  %1474 = vmatprep.subr.mxu0 0.0
  %1475 = vmatpush1.msra.mxu0 0.0
  %1476 = vmatprep.subr.mxu0 0.0
  %1477 = vmatpush1.msra.mxu0 0.0
  %1478 = vmatprep.subr.mxu0 0.0
  %1479 = vmatpush1.msra.mxu0 0.0
  %1480 = vmatprep.subr.mxu0 0.0
  %1481 = vmatpush1.msra.mxu0 0.0
  %1482 = vmatprep.subr.mxu0 0.0
  %1483 = vmatpush1.msra.mxu0 0.0
  %1484 = vmatprep.subr.mxu0 0.0
  %1485 = vmatpush1.msra.mxu0 0.0
  %1486 = vmatprep.subr.mxu0 0.0
  %1487 = vmatpush1.msra.mxu0 0.0
  %1488 = vmatprep.subr.mxu0 0.0
  %1489 = vmatpush1.msra.mxu0 0.0
  %1490 = vmatprep.subr.mxu0 0.0
  %1491 = vmatpush1.msra.mxu0 0.0
  %1492 = vmatprep.subr.mxu0 0.0
  %1493 = vmatpush1.msra.mxu0 0.0
  %1494 = vmatprep.subr.mxu0 0.0
  %1495 = vmatpush1.msra.mxu0 0.0
  %1496 = vmatprep.mubr.f32.mxu0 0.0
  %1497 = vmatmul.mubr.f32.gmra.mrb[0].mxu0 %v1430
  %v1498 = vpop.f32.mrb[0].mxu0
  %v1499 = vadd.f32 0.0, %v1498
  %v1500 = vpop.f32.mrb[0].mxu0
  %1501 = vdwg.mxu0
  %v1502 = vadd.f32 %v1106, %v1499
  %v1503 = vxor.u32 %v1502, 2147483648
  %v1504 = vmul.f32 %v1503, 1.442695
  %v1505 = vpow.pop %v1504
  %v1506 = vadd.f32 %v1505, 1.0
  %v1507 = vrcp.pop %v1506
  %v1508 = vmul.f32 1.0, %v1507
  %v1509 = vtanh.pop %v1502
  %v1510 = vsel %vm45, %v1509, %v1508
  %v1511 = vmul.f32 %v1510, %v1420
  %1513 = vrot.lane.b32.xlu0 %v1510, 64
  %v1514 = vpop.permute.xlu0 %1513
  %v1516 = vmul.f32 %v1510, %v1514
  %1518 = vrot.lane.b32.xlu0 %v1516, 32
  %v1519 = vpop.permute.xlu0 %1518
  %v1521 = vadd.f32 %v1511, %v1519
  %v1522 = vtanh.pop %v1521
  %1524 = vrot.lane.b32.xlu0 %v1522, 64
  %v1525 = vpop.permute.xlu0 %1524
  %v1527 = vmul.f32 %v1510, %v1525
  %1529 = vrot.lane.b32.xlu0 %v1527, 32
  %v1530 = vpop.permute.xlu0 %1529
  %v1531 = vsel %vm197, %v1530, 0
  %1533 = vmatprep.subr.mxu0 0.0
  %1534 = vmatpush1.msra.mxu0 %v1008
  %1535 = vmatprep.subr.mxu0 0.0
  %1536 = vmatpush1.msra.mxu0 %v1009
  %1537 = vmatprep.subr.mxu0 0.0
  %1538 = vmatpush1.msra.mxu0 %v1010
  %1539 = vmatprep.subr.mxu0 0.0
  %1540 = vmatpush1.msra.mxu0 %v1011
  %1541 = vmatprep.subr.mxu0 0.0
  %1542 = vmatpush1.msra.mxu0 0.0
  %1543 = vmatprep.subr.mxu0 0.0
  %1544 = vmatpush1.msra.mxu0 0.0
  %1545 = vmatprep.subr.mxu0 0.0
  %1546 = vmatpush1.msra.mxu0 0.0
  %1547 = vmatprep.subr.mxu0 0.0
  %1548 = vmatpush1.msra.mxu0 0.0
  %1549 = vmatprep.subr.mxu0 0.0
  %1550 = vmatpush1.msra.mxu0 0.0
  %1551 = vmatprep.subr.mxu0 0.0
  %1552 = vmatpush1.msra.mxu0 0.0
  %1553 = vmatprep.subr.mxu0 0.0
  %1554 = vmatpush1.msra.mxu0 0.0
  %1555 = vmatprep.subr.mxu0 0.0
  %1556 = vmatpush1.msra.mxu0 0.0
  %1557 = vmatprep.subr.mxu0 0.0
  %1558 = vmatpush1.msra.mxu0 0.0
  %1559 = vmatprep.subr.mxu0 0.0
  %1560 = vmatpush1.msra.mxu0 0.0
  %1561 = vmatprep.subr.mxu0 0.0
  %1562 = vmatpush1.msra.mxu0 0.0
  %1563 = vmatprep.subr.mxu0 0.0
  %1564 = vmatpush1.msra.mxu0 0.0
  %1565 = vmatprep.subr.mxu0 0.0
  %1566 = vmatpush1.msra.mxu0 0.0
  %1567 = vmatprep.subr.mxu0 0.0
  %1568 = vmatpush1.msra.mxu0 0.0
  %1569 = vmatprep.subr.mxu0 0.0
  %1570 = vmatpush1.msra.mxu0 0.0
  %1571 = vmatprep.subr.mxu0 0.0
  %1572 = vmatpush1.msra.mxu0 0.0
  %1573 = vmatprep.subr.mxu0 0.0
  %1574 = vmatpush1.msra.mxu0 0.0
  %1575 = vmatprep.subr.mxu0 0.0
  %1576 = vmatpush1.msra.mxu0 0.0
  %1577 = vmatprep.subr.mxu0 0.0
  %1578 = vmatpush1.msra.mxu0 0.0
  %1579 = vmatprep.subr.mxu0 0.0
  %1580 = vmatpush1.msra.mxu0 0.0
  %1581 = vmatprep.subr.mxu0 0.0
  %1582 = vmatpush1.msra.mxu0 0.0
  %1583 = vmatprep.subr.mxu0 0.0
  %1584 = vmatpush1.msra.mxu0 0.0
  %1585 = vmatprep.subr.mxu0 0.0
  %1586 = vmatpush1.msra.mxu0 0.0
  %1587 = vmatprep.subr.mxu0 0.0
  %1588 = vmatpush1.msra.mxu0 0.0
  %1589 = vmatprep.subr.mxu0 0.0
  %1590 = vmatpush1.msra.mxu0 0.0
  %1591 = vmatprep.subr.mxu0 0.0
  %1592 = vmatpush1.msra.mxu0 0.0
  %1593 = vmatprep.subr.mxu0 0.0
  %1594 = vmatpush1.msra.mxu0 0.0
  %1595 = vmatprep.subr.mxu0 0.0
  %1596 = vmatpush1.msra.mxu0 0.0
  %1597 = vmatprep.mubr.f32.mxu0 0.0
  %1598 = vmatmul.mubr.f32.gmra.mrb[0].mxu0 %v1531
  %v1599 = vpop.f32.mrb[0].mxu0
  %v1600 = vadd.f32 0.0, %v1599
  %v1601 = vpop.f32.mrb[0].mxu0
  %1602 = vdwg.mxu0
  %v1603 = vadd.f32 %v1111, %v1600
  %v1604 = vxor.u32 %v1603, 2147483648
  %v1605 = vmul.f32 %v1604, 1.442695
  %v1606 = vpow.pop %v1605
  %v1607 = vadd.f32 %v1606, 1.0
  %v1608 = vrcp.pop %v1607
  %v1609 = vmul.f32 1.0, %v1608
  %v1610 = vtanh.pop %v1603
  %v1611 = vsel %vm45, %v1610, %v1609
  %v1612 = vmul.f32 %v1611, %v1521
  %1614 = vrot.lane.b32.xlu0 %v1611, 64
  %v1615 = vpop.permute.xlu0 %1614
  %v1617 = vmul.f32 %v1611, %v1615
  %1619 = vrot.lane.b32.xlu0 %v1617, 32
  %v1620 = vpop.permute.xlu0 %1619
  %v1622 = vadd.f32 %v1612, %v1620
  %v1623 = vtanh.pop %v1622
  %1625 = vrot.lane.b32.xlu0 %v1623, 64
  %v1626 = vpop.permute.xlu0 %1625
  %v1628 = vmul.f32 %v1611, %v1626
  %1630 = vrot.lane.b32.xlu0 %v1628, 32
  %v1631 = vpop.permute.xlu0 %1630
  %v1632 = vsel %vm197, %v1631, 0
  %1634 = vmatprep.subr.mxu0 0.0
  %1635 = vmatpush1.msra.mxu0 %v1008
  %1636 = vmatprep.subr.mxu0 0.0
  %1637 = vmatpush1.msra.mxu0 %v1009
  %1638 = vmatprep.subr.mxu0 0.0
  %1639 = vmatpush1.msra.mxu0 %v1010
  %1640 = vmatprep.subr.mxu0 0.0
  %1641 = vmatpush1.msra.mxu0 %v1011
  %1642 = vmatprep.subr.mxu0 0.0
  %1643 = vmatpush1.msra.mxu0 0.0
  %1644 = vmatprep.subr.mxu0 0.0
  %1645 = vmatpush1.msra.mxu0 0.0
  %1646 = vmatprep.subr.mxu0 0.0
  %1647 = vmatpush1.msra.mxu0 0.0
  %1648 = vmatprep.subr.mxu0 0.0
  %1649 = vmatpush1.msra.mxu0 0.0
  %1650 = vmatprep.subr.mxu0 0.0
  %1651 = vmatpush1.msra.mxu0 0.0
  %1652 = vmatprep.subr.mxu0 0.0
  %1653 = vmatpush1.msra.mxu0 0.0
  %1654 = vmatprep.subr.mxu0 0.0
  %1655 = vmatpush1.msra.mxu0 0.0
  %1656 = vmatprep.subr.mxu0 0.0
  %1657 = vmatpush1.msra.mxu0 0.0
  %1658 = vmatprep.subr.mxu0 0.0
  %1659 = vmatpush1.msra.mxu0 0.0
  %1660 = vmatprep.subr.mxu0 0.0
  %1661 = vmatpush1.msra.mxu0 0.0
  %1662 = vmatprep.subr.mxu0 0.0
  %1663 = vmatpush1.msra.mxu0 0.0
  %1664 = vmatprep.subr.mxu0 0.0
  %1665 = vmatpush1.msra.mxu0 0.0
  %1666 = vmatprep.subr.mxu0 0.0
  %1667 = vmatpush1.msra.mxu0 0.0
  %1668 = vmatprep.subr.mxu0 0.0
  %1669 = vmatpush1.msra.mxu0 0.0
  %1670 = vmatprep.subr.mxu0 0.0
  %1671 = vmatpush1.msra.mxu0 0.0
  %1672 = vmatprep.subr.mxu0 0.0
  %1673 = vmatpush1.msra.mxu0 0.0
  %1674 = vmatprep.subr.mxu0 0.0
  %1675 = vmatpush1.msra.mxu0 0.0
  %1676 = vmatprep.subr.mxu0 0.0
  %1677 = vmatpush1.msra.mxu0 0.0
  %1678 = vmatprep.subr.mxu0 0.0
  %1679 = vmatpush1.msra.mxu0 0.0
  %1680 = vmatprep.subr.mxu0 0.0
  %1681 = vmatpush1.msra.mxu0 0.0
  %1682 = vmatprep.subr.mxu0 0.0
  %1683 = vmatpush1.msra.mxu0 0.0
  %1684 = vmatprep.subr.mxu0 0.0
  %1685 = vmatpush1.msra.mxu0 0.0
  %1686 = vmatprep.subr.mxu0 0.0
  %1687 = vmatpush1.msra.mxu0 0.0
  %1688 = vmatprep.subr.mxu0 0.0
  %1689 = vmatpush1.msra.mxu0 0.0
  %1690 = vmatprep.subr.mxu0 0.0
  %1691 = vmatpush1.msra.mxu0 0.0
  %1692 = vmatprep.subr.mxu0 0.0
  %1693 = vmatpush1.msra.mxu0 0.0
  %1694 = vmatprep.subr.mxu0 0.0
  %1695 = vmatpush1.msra.mxu0 0.0
  %1696 = vmatprep.subr.mxu0 0.0
  %1697 = vmatpush1.msra.mxu0 0.0
  %1698 = vmatprep.mubr.f32.mxu0 0.0
  %1699 = vmatmul.mubr.f32.gmra.mrb[0].mxu0 %v1632
  %v1700 = vpop.f32.mrb[0].mxu0
  %v1701 = vadd.f32 0.0, %v1700
  %v1702 = vpop.f32.mrb[0].mxu0
  %1703 = vdwg.mxu0
  %v1704 = vadd.f32 %v1116, %v1701
  %v1705 = vxor.u32 %v1704, 2147483648
  %v1706 = vmul.f32 %v1705, 1.442695
  %v1707 = vpow.pop %v1706
  %v1708 = vadd.f32 %v1707, 1.0
  %v1709 = vrcp.pop %v1708
  %v1710 = vmul.f32 1.0, %v1709
  %v1711 = vtanh.pop %v1704
  %v1712 = vsel %vm45, %v1711, %v1710
  %v1713 = vmul.f32 %v1712, %v1622
  %1715 = vrot.lane.b32.xlu0 %v1712, 64
  %v1716 = vpop.permute.xlu0 %1715
  %v1718 = vmul.f32 %v1712, %v1716
  %1720 = vrot.lane.b32.xlu0 %v1718, 32
  %v1721 = vpop.permute.xlu0 %1720
  %v1723 = vadd.f32 %v1713, %v1721
  %v1724 = vtanh.pop %v1723
  %1726 = vrot.lane.b32.xlu0 %v1724, 64
  %v1727 = vpop.permute.xlu0 %1726
  %v1729 = vmul.f32 %v1712, %v1727
  %1731 = vrot.lane.b32.xlu0 %v1729, 32
  %v1732 = vpop.permute.xlu0 %1731
  %v1733 = vsel %vm197, %v1732, 0
  %1735 = vmatprep.subr.mxu0 0.0
  %1736 = vmatpush1.msra.mxu0 %v1008
  %1737 = vmatprep.subr.mxu0 0.0
  %1738 = vmatpush1.msra.mxu0 %v1009
  %1739 = vmatprep.subr.mxu0 0.0
  %1740 = vmatpush1.msra.mxu0 %v1010
  %1741 = vmatprep.subr.mxu0 0.0
  %1742 = vmatpush1.msra.mxu0 %v1011
  %1743 = vmatprep.subr.mxu0 0.0
  %1744 = vmatpush1.msra.mxu0 0.0
  %1745 = vmatprep.subr.mxu0 0.0
  %1746 = vmatpush1.msra.mxu0 0.0
  %1747 = vmatprep.subr.mxu0 0.0
  %1748 = vmatpush1.msra.mxu0 0.0
  %1749 = vmatprep.subr.mxu0 0.0
  %1750 = vmatpush1.msra.mxu0 0.0
  %1751 = vmatprep.subr.mxu0 0.0
  %1752 = vmatpush1.msra.mxu0 0.0
  %1753 = vmatprep.subr.mxu0 0.0
  %1754 = vmatpush1.msra.mxu0 0.0
  %1755 = vmatprep.subr.mxu0 0.0
  %1756 = vmatpush1.msra.mxu0 0.0
  %1757 = vmatprep.subr.mxu0 0.0
  %1758 = vmatpush1.msra.mxu0 0.0
  %1759 = vmatprep.subr.mxu0 0.0
  %1760 = vmatpush1.msra.mxu0 0.0
  %1761 = vmatprep.subr.mxu0 0.0
  %1762 = vmatpush1.msra.mxu0 0.0
  %1763 = vmatprep.subr.mxu0 0.0
  %1764 = vmatpush1.msra.mxu0 0.0
  %1765 = vmatprep.subr.mxu0 0.0
  %1766 = vmatpush1.msra.mxu0 0.0
  %1767 = vmatprep.subr.mxu0 0.0
  %1768 = vmatpush1.msra.mxu0 0.0
  %1769 = vmatprep.subr.mxu0 0.0
  %1770 = vmatpush1.msra.mxu0 0.0
  %1771 = vmatprep.subr.mxu0 0.0
  %1772 = vmatpush1.msra.mxu0 0.0
  %1773 = vmatprep.subr.mxu0 0.0
  %1774 = vmatpush1.msra.mxu0 0.0
  %1775 = vmatprep.subr.mxu0 0.0
  %1776 = vmatpush1.msra.mxu0 0.0
  %1777 = vmatprep.subr.mxu0 0.0
  %1778 = vmatpush1.msra.mxu0 0.0
  %1779 = vmatprep.subr.mxu0 0.0
  %1780 = vmatpush1.msra.mxu0 0.0
  %1781 = vmatprep.subr.mxu0 0.0
  %1782 = vmatpush1.msra.mxu0 0.0
  %1783 = vmatprep.subr.mxu0 0.0
  %1784 = vmatpush1.msra.mxu0 0.0
  %1785 = vmatprep.subr.mxu0 0.0
  %1786 = vmatpush1.msra.mxu0 0.0
  %1787 = vmatprep.subr.mxu0 0.0
  %1788 = vmatpush1.msra.mxu0 0.0
  %1789 = vmatprep.subr.mxu0 0.0
  %1790 = vmatpush1.msra.mxu0 0.0
  %1791 = vmatprep.subr.mxu0 0.0
  %1792 = vmatpush1.msra.mxu0 0.0
  %1793 = vmatprep.subr.mxu0 0.0
  %1794 = vmatpush1.msra.mxu0 0.0
  %1795 = vmatprep.subr.mxu0 0.0
  %1796 = vmatpush1.msra.mxu0 0.0
  %1797 = vmatprep.subr.mxu0 0.0
  %1798 = vmatpush1.msra.mxu0 0.0
  %1799 = vmatprep.mubr.f32.mxu0 0.0
  %1800 = vmatmul.mubr.f32.gmra.mrb[0].mxu0 %v1733
  %v1801 = vpop.f32.mrb[0].mxu0
  %v1802 = vadd.f32 0.0, %v1801
  %v1803 = vpop.f32.mrb[0].mxu0
  %1804 = vdwg.mxu0
  %v1805 = vadd.f32 %v1121, %v1802
  %v1806 = vxor.u32 %v1805, 2147483648
  %v1807 = vmul.f32 %v1806, 1.442695
  %v1808 = vpow.pop %v1807
  %v1809 = vadd.f32 %v1808, 1.0
  %v1810 = vrcp.pop %v1809
  %v1811 = vmul.f32 1.0, %v1810
  %v1812 = vtanh.pop %v1805
  %v1813 = vsel %vm45, %v1812, %v1811
  %v1814 = vmul.f32 %v1813, %v1723
  %1816 = vrot.lane.b32.xlu0 %v1813, 64
  %v1817 = vpop.permute.xlu0 %1816
  %v1819 = vmul.f32 %v1813, %v1817
  %1821 = vrot.lane.b32.xlu0 %v1819, 32
  %v1822 = vpop.permute.xlu0 %1821
  %v1824 = vadd.f32 %v1814, %v1822
  %v1825 = vtanh.pop %v1824
  %1827 = vrot.lane.b32.xlu0 %v1825, 64
  %v1828 = vpop.permute.xlu0 %1827
  %v1830 = vmul.f32 %v1813, %v1828
  %1832 = vrot.lane.b32.xlu0 %v1830, 32
  %v1833 = vpop.permute.xlu0 %1832
  %v1834 = vsel %vm197, %v1833, 0
  %1836 = vmatprep.subr.mxu0 0.0
  %1837 = vmatpush1.msra.mxu0 %v1008
  %1838 = vmatprep.subr.mxu0 0.0
  %1839 = vmatpush1.msra.mxu0 %v1009
  %1840 = vmatprep.subr.mxu0 0.0
  %1841 = vmatpush1.msra.mxu0 %v1010
  %1842 = vmatprep.subr.mxu0 0.0
  %1843 = vmatpush1.msra.mxu0 %v1011
  %1844 = vmatprep.subr.mxu0 0.0
  %1845 = vmatpush1.msra.mxu0 0.0
  %1846 = vmatprep.subr.mxu0 0.0
  %1847 = vmatpush1.msra.mxu0 0.0
  %1848 = vmatprep.subr.mxu0 0.0
  %1849 = vmatpush1.msra.mxu0 0.0
  %1850 = vmatprep.subr.mxu0 0.0
  %1851 = vmatpush1.msra.mxu0 0.0
  %1852 = vmatprep.subr.mxu0 0.0
  %1853 = vmatpush1.msra.mxu0 0.0
  %1854 = vmatprep.subr.mxu0 0.0
  %1855 = vmatpush1.msra.mxu0 0.0
  %1856 = vmatprep.subr.mxu0 0.0
  %1857 = vmatpush1.msra.mxu0 0.0
  %1858 = vmatprep.subr.mxu0 0.0
  %1859 = vmatpush1.msra.mxu0 0.0
  %1860 = vmatprep.subr.mxu0 0.0
  %1861 = vmatpush1.msra.mxu0 0.0
  %1862 = vmatprep.subr.mxu0 0.0
  %1863 = vmatpush1.msra.mxu0 0.0
  %1864 = vmatprep.subr.mxu0 0.0
  %1865 = vmatpush1.msra.mxu0 0.0
  %1866 = vmatprep.subr.mxu0 0.0
  %1867 = vmatpush1.msra.mxu0 0.0
  %1868 = vmatprep.subr.mxu0 0.0
  %1869 = vmatpush1.msra.mxu0 0.0
  %1870 = vmatprep.subr.mxu0 0.0
  %1871 = vmatpush1.msra.mxu0 0.0
  %1872 = vmatprep.subr.mxu0 0.0
  %1873 = vmatpush1.msra.mxu0 0.0
  %1874 = vmatprep.subr.mxu0 0.0
  %1875 = vmatpush1.msra.mxu0 0.0
  %1876 = vmatprep.subr.mxu0 0.0
  %1877 = vmatpush1.msra.mxu0 0.0
  %1878 = vmatprep.subr.mxu0 0.0
  %1879 = vmatpush1.msra.mxu0 0.0
  %1880 = vmatprep.subr.mxu0 0.0
  %1881 = vmatpush1.msra.mxu0 0.0
  %1882 = vmatprep.subr.mxu0 0.0
  %1883 = vmatpush1.msra.mxu0 0.0
  %1884 = vmatprep.subr.mxu0 0.0
  %1885 = vmatpush1.msra.mxu0 0.0
  %1886 = vmatprep.subr.mxu0 0.0
  %1887 = vmatpush1.msra.mxu0 0.0
  %1888 = vmatprep.subr.mxu0 0.0
  %1889 = vmatpush1.msra.mxu0 0.0
  %1890 = vmatprep.subr.mxu0 0.0
  %1891 = vmatpush1.msra.mxu0 0.0
  %1892 = vmatprep.subr.mxu0 0.0
  %1893 = vmatpush1.msra.mxu0 0.0
  %1894 = vmatprep.subr.mxu0 0.0
  %1895 = vmatpush1.msra.mxu0 0.0
  %1896 = vmatprep.subr.mxu0 0.0
  %1897 = vmatpush1.msra.mxu0 0.0
  %1898 = vmatprep.subr.mxu0 0.0
  %1899 = vmatpush1.msra.mxu0 0.0
  %1900 = vmatprep.mubr.f32.mxu0 0.0
  %1901 = vmatmul.mubr.f32.gmra.mrb[0].mxu0 %v1834
  %v1902 = vpop.f32.mrb[0].mxu0
  %v1903 = vadd.f32 0.0, %v1902
  %v1904 = vpop.f32.mrb[0].mxu0
  %1905 = vdwg.mxu0
  %v1906 = vadd.f32 %v1126, %v1903
  %v1907 = vxor.u32 %v1906, 2147483648
  %v1908 = vmul.f32 %v1907, 1.442695
  %v1909 = vpow.pop %v1908
  %v1910 = vadd.f32 %v1909, 1.0
  %v1911 = vrcp.pop %v1910
  %v1912 = vmul.f32 1.0, %v1911
  %v1913 = vtanh.pop %v1906
  %v1914 = vsel %vm45, %v1913, %v1912
  %v1915 = vmul.f32 %v1914, %v1824
  %1917 = vrot.lane.b32.xlu0 %v1914, 64
  %v1918 = vpop.permute.xlu0 %1917
  %v1920 = vmul.f32 %v1914, %v1918
  %1922 = vrot.lane.b32.xlu0 %v1920, 32
  %v1923 = vpop.permute.xlu0 %1922
  %v1925 = vadd.f32 %v1915, %v1923
  %v1926 = vtanh.pop %v1925
  %1928 = vrot.lane.b32.xlu0 %v1926, 64
  %v1929 = vpop.permute.xlu0 %1928
  %v1931 = vmul.f32 %v1914, %v1929
  %v1932 = vld [vmem:[%s7] sm:$0xff]
  %v1933 = vld [vmem:[%s7 + $0x8] sm:$0xff]
  %v1934 = vld [vmem:[%s7 + $0x10] sm:$0xff]
  %v1935 = vld [vmem:[%s7 + $0x18] sm:$0xff]
  %v1936 = vld [vmem:[%s8] sm:$0xff]
  %v1937 = vld [vmem:[%s8 + $0x8] sm:$0xff]
  %v1938 = vld [vmem:[%s8 + $0x10] sm:$0xff]
  %v1939 = vld [vmem:[%s8 + $0x18] sm:$0xff]
  %v1940 = vld [vmem:[%s9] sm:$0x1]
  %v1942 = vlaneseq
  %v1943 = vshrl.u32 %v1942, 7
  %v1944 = vsub.s32 0, %v1943
  %v1945 = vrot.slane %v1940, %v1944
  %1948 = vrot.lane.b32.xlu0 %v1931, 32
  %v1949 = vpop.permute.xlu0 %1948
  %v1950 = vsel %vm197, %v1949, 0
  %1952 = vmatprep.subr.mxu0 0.0
  %1953 = vmatpush1.msra.mxu0 %v1932
  %1954 = vmatprep.subr.mxu0 0.0
  %1955 = vmatpush1.msra.mxu0 %v1933
  %1956 = vmatprep.subr.mxu0 0.0
  %1957 = vmatpush1.msra.mxu0 %v1934
  %1958 = vmatprep.subr.mxu0 0.0
  %1959 = vmatpush1.msra.mxu0 %v1935
  %1960 = vmatprep.subr.mxu0 0.0
  %1961 = vmatpush1.msra.mxu0 0.0
  %1962 = vmatprep.subr.mxu0 0.0
  %1963 = vmatpush1.msra.mxu0 0.0
  %1964 = vmatprep.subr.mxu0 0.0
  %1965 = vmatpush1.msra.mxu0 0.0
  %1966 = vmatprep.subr.mxu0 0.0
  %1967 = vmatpush1.msra.mxu0 0.0
  %1968 = vmatprep.subr.mxu0 0.0
  %1969 = vmatpush1.msra.mxu0 0.0
  %1970 = vmatprep.subr.mxu0 0.0
  %1971 = vmatpush1.msra.mxu0 0.0
  %1972 = vmatprep.subr.mxu0 0.0
  %1973 = vmatpush1.msra.mxu0 0.0
  %1974 = vmatprep.subr.mxu0 0.0
  %1975 = vmatpush1.msra.mxu0 0.0
  %1976 = vmatprep.subr.mxu0 0.0
  %1977 = vmatpush1.msra.mxu0 0.0
  %1978 = vmatprep.subr.mxu0 0.0
  %1979 = vmatpush1.msra.mxu0 0.0
  %1980 = vmatprep.subr.mxu0 0.0
  %1981 = vmatpush1.msra.mxu0 0.0
  %1982 = vmatprep.subr.mxu0 0.0
  %1983 = vmatpush1.msra.mxu0 0.0
  %1984 = vmatprep.subr.mxu0 0.0
  %1985 = vmatpush1.msra.mxu0 0.0
  %1986 = vmatprep.subr.mxu0 0.0
  %1987 = vmatpush1.msra.mxu0 0.0
  %1988 = vmatprep.subr.mxu0 0.0
  %1989 = vmatpush1.msra.mxu0 0.0
  %1990 = vmatprep.subr.mxu0 0.0
  %1991 = vmatpush1.msra.mxu0 0.0
  %1992 = vmatprep.subr.mxu0 0.0
  %1993 = vmatpush1.msra.mxu0 0.0
  %1994 = vmatprep.subr.mxu0 0.0
  %1995 = vmatpush1.msra.mxu0 0.0
  %1996 = vmatprep.subr.mxu0 0.0
  %1997 = vmatpush1.msra.mxu0 0.0
  %1998 = vmatprep.subr.mxu0 0.0
  %1999 = vmatpush1.msra.mxu0 0.0
  %2000 = vmatprep.subr.mxu0 0.0
  %2001 = vmatpush1.msra.mxu0 0.0
  %2002 = vmatprep.subr.mxu0 0.0
  %2003 = vmatpush1.msra.mxu0 0.0
  %2004 = vmatprep.subr.mxu0 0.0
  %2005 = vmatpush1.msra.mxu0 0.0
  %2006 = vmatprep.subr.mxu0 0.0
  %2007 = vmatpush1.msra.mxu0 0.0
  %2008 = vmatprep.subr.mxu0 0.0
  %2009 = vmatpush1.msra.mxu0 0.0
  %2010 = vmatprep.subr.mxu0 0.0
  %2011 = vmatpush1.msra.mxu0 0.0
  %2012 = vmatprep.subr.mxu0 0.0
  %2013 = vmatpush1.msra.mxu0 0.0
  %2014 = vmatprep.subr.mxu0 0.0
  %2015 = vmatpush1.msra.mxu0 0.0
  %2016 = vmatprep.mubr.f32.mxu0 0.0
  %2017 = vmatmul.mubr.f32.gmra.mrb[0].mxu0 %v1228
  %v2018 = vpop.f32.mrb[0].mxu0
  %v2019 = vadd.f32 %v1945, %v2018
  %v2020 = vpop.f32.mrb[0].mxu0
  %2021 = vmatprep.mubr.f32.mxu0 0.0
  %2022 = vmatmul.mubr.f32.gmra.mrb[0].mxu0 %v1329
  %v2023 = vpop.f32.mrb[0].mxu0
  %v2024 = vadd.f32 %v1945, %v2023
  %v2025 = vpop.f32.mrb[0].mxu0
  %2026 = vmatprep.mubr.f32.mxu0 0.0
  %2027 = vmatmul.mubr.f32.gmra.mrb[0].mxu0 %v1430
  %v2028 = vpop.f32.mrb[0].mxu0
  %v2029 = vadd.f32 %v1945, %v2028
  %v2030 = vpop.f32.mrb[0].mxu0
  %2031 = vmatprep.mubr.f32.mxu0 0.0
  %2032 = vmatmul.mubr.f32.gmra.mrb[0].mxu0 %v1531
  %v2033 = vpop.f32.mrb[0].mxu0
  %v2034 = vadd.f32 %v1945, %v2033
  %v2035 = vpop.f32.mrb[0].mxu0
  %2036 = vmatprep.mubr.f32.mxu0 0.0
  %2037 = vmatmul.mubr.f32.gmra.mrb[0].mxu0 %v1632
  %v2038 = vpop.f32.mrb[0].mxu0
  %v2039 = vadd.f32 %v1945, %v2038
  %v2040 = vpop.f32.mrb[0].mxu0
  %2041 = vmatprep.mubr.f32.mxu0 0.0
  %2042 = vmatmul.mubr.f32.gmra.mrb[0].mxu0 %v1733
  %v2043 = vpop.f32.mrb[0].mxu0
  %v2044 = vadd.f32 %v1945, %v2043
  %v2045 = vpop.f32.mrb[0].mxu0
  %2046 = vmatprep.mubr.f32.mxu0 0.0
  %2047 = vmatmul.mubr.f32.gmra.mrb[0].mxu0 %v1834
  %v2048 = vpop.f32.mrb[0].mxu0
  %v2049 = vadd.f32 %v1945, %v2048
  %v2050 = vpop.f32.mrb[0].mxu0
  %2051 = vmatprep.mubr.f32.mxu0 0.0
  %2052 = vmatmul.mubr.f32.gmra.mrb[0].mxu0 %v1950
  %v2053 = vpop.f32.mrb[0].mxu0
  %v2054 = vadd.f32 %v1945, %v2053
  %v2055 = vpop.f32.mrb[0].mxu0
  %2056 = vdwg.mxu0
  %2057 = vmatprep.subr.mxu0 0.0
  %2058 = vmatpush1.msra.mxu0 %v1936
  %2059 = vmatprep.subr.mxu0 0.0
  %2060 = vmatpush1.msra.mxu0 %v1937
  %2061 = vmatprep.subr.mxu0 0.0
  %2062 = vmatpush1.msra.mxu0 %v1938
  %2063 = vmatprep.subr.mxu0 0.0
  %2064 = vmatpush1.msra.mxu0 %v1939
  %2065 = vmatprep.subr.mxu0 0.0
  %2066 = vmatpush1.msra.mxu0 0.0
  %2067 = vmatprep.subr.mxu0 0.0
  %2068 = vmatpush1.msra.mxu0 0.0
  %2069 = vmatprep.subr.mxu0 0.0
  %2070 = vmatpush1.msra.mxu0 0.0
  %2071 = vmatprep.subr.mxu0 0.0
  %2072 = vmatpush1.msra.mxu0 0.0
  %2073 = vmatprep.subr.mxu0 0.0
  %2074 = vmatpush1.msra.mxu0 0.0
  %2075 = vmatprep.subr.mxu0 0.0
  %2076 = vmatpush1.msra.mxu0 0.0
  %2077 = vmatprep.subr.mxu0 0.0
  %2078 = vmatpush1.msra.mxu0 0.0
  %2079 = vmatprep.subr.mxu0 0.0
  %2080 = vmatpush1.msra.mxu0 0.0
  %2081 = vmatprep.subr.mxu0 0.0
  %2082 = vmatpush1.msra.mxu0 0.0
  %2083 = vmatprep.subr.mxu0 0.0
  %2084 = vmatpush1.msra.mxu0 0.0
  %2085 = vmatprep.subr.mxu0 0.0
  %2086 = vmatpush1.msra.mxu0 0.0
  %2087 = vmatprep.subr.mxu0 0.0
  %2088 = vmatpush1.msra.mxu0 0.0
  %2089 = vmatprep.subr.mxu0 0.0
  %2090 = vmatpush1.msra.mxu0 0.0
  %2091 = vmatprep.subr.mxu0 0.0
  %2092 = vmatpush1.msra.mxu0 0.0
  %2093 = vmatprep.subr.mxu0 0.0
  %2094 = vmatpush1.msra.mxu0 0.0
  %2095 = vmatprep.subr.mxu0 0.0
  %2096 = vmatpush1.msra.mxu0 0.0
  %2097 = vmatprep.subr.mxu0 0.0
  %2098 = vmatpush1.msra.mxu0 0.0
  %2099 = vmatprep.subr.mxu0 0.0
  %2100 = vmatpush1.msra.mxu0 0.0
  %2101 = vmatprep.subr.mxu0 0.0
  %2102 = vmatpush1.msra.mxu0 0.0
  %2103 = vmatprep.subr.mxu0 0.0
  %2104 = vmatpush1.msra.mxu0 0.0
  %2105 = vmatprep.subr.mxu0 0.0
  %2106 = vmatpush1.msra.mxu0 0.0
  %2107 = vmatprep.subr.mxu0 0.0
  %2108 = vmatpush1.msra.mxu0 0.0
  %2109 = vmatprep.subr.mxu0 0.0
  %2110 = vmatpush1.msra.mxu0 0.0
  %2111 = vmatprep.subr.mxu0 0.0
  %2112 = vmatpush1.msra.mxu0 0.0
  %2113 = vmatprep.subr.mxu0 0.0
  %2114 = vmatpush1.msra.mxu0 0.0
  %2115 = vmatprep.subr.mxu0 0.0
  %2116 = vmatpush1.msra.mxu0 0.0
  %2117 = vmatprep.subr.mxu0 0.0
  %2118 = vmatpush1.msra.mxu0 0.0
  %2119 = vmatprep.subr.mxu0 0.0
  %2120 = vmatpush1.msra.mxu0 0.0
  %2121 = vmatprep.mubr.f32.mxu0 0.0
  %2122 = vmatmul.mubr.f32.gmra.mrb[0].mxu0 %v199
  %v2123 = vpop.f32.mrb[0].mxu0
  %v2124 = vadd.f32 0.0, %v2123
  %v2125 = vpop.f32.mrb[0].mxu0
  %2126 = vdwg.mxu0
  %v2127 = vadd.f32 %v2019, %v2124
  %v2128 = vxor.u32 %v2127, 2147483648
  %v2129 = vmul.f32 %v2128, 1.442695
  %v2130 = vpow.pop %v2129
  %v2131 = vadd.f32 %v2130, 1.0
  %v2132 = vrcp.pop %v2131
  %v2133 = vmul.f32 1.0, %v2132
  %v2134 = vtanh.pop %v2127
  %v2135 = vsel %vm45, %v2134, %v2133
  %v2136 = vmul.f32 %v2135, 0.0
  %2138 = vrot.lane.b32.xlu0 %v2135, 64
  %v2139 = vpop.permute.xlu0 %2138
  %v2141 = vmul.f32 %v2135, %v2139
  %2143 = vrot.lane.b32.xlu0 %v2141, 32
  %v2144 = vpop.permute.xlu0 %2143
  %v2146 = vadd.f32 %v2136, %v2144
  %v2147 = vtanh.pop %v2146
  %2149 = vrot.lane.b32.xlu0 %v2147, 64
  %v2150 = vpop.permute.xlu0 %2149
  %v2152 = vmul.f32 %v2135, %v2150
  %2154 = vrot.lane.b32.xlu0 %v2152, 32
  %v2155 = vpop.permute.xlu0 %2154
  %v2156 = vsel %vm197, %v2155, 0
  %2158 = vmatprep.subr.mxu0 0.0
  %2159 = vmatpush1.msra.mxu0 %v1936
  %2160 = vmatprep.subr.mxu0 0.0
  %2161 = vmatpush1.msra.mxu0 %v1937
  %2162 = vmatprep.subr.mxu0 0.0
  %2163 = vmatpush1.msra.mxu0 %v1938
  %2164 = vmatprep.subr.mxu0 0.0
  %2165 = vmatpush1.msra.mxu0 %v1939
  %2166 = vmatprep.subr.mxu0 0.0
  %2167 = vmatpush1.msra.mxu0 0.0
  %2168 = vmatprep.subr.mxu0 0.0
  %2169 = vmatpush1.msra.mxu0 0.0
  %2170 = vmatprep.subr.mxu0 0.0
  %2171 = vmatpush1.msra.mxu0 0.0
  %2172 = vmatprep.subr.mxu0 0.0
  %2173 = vmatpush1.msra.mxu0 0.0
  %2174 = vmatprep.subr.mxu0 0.0
  %2175 = vmatpush1.msra.mxu0 0.0
  %2176 = vmatprep.subr.mxu0 0.0
  %2177 = vmatpush1.msra.mxu0 0.0
  %2178 = vmatprep.subr.mxu0 0.0
  %2179 = vmatpush1.msra.mxu0 0.0
  %2180 = vmatprep.subr.mxu0 0.0
  %2181 = vmatpush1.msra.mxu0 0.0
  %2182 = vmatprep.subr.mxu0 0.0
  %2183 = vmatpush1.msra.mxu0 0.0
  %2184 = vmatprep.subr.mxu0 0.0
  %2185 = vmatpush1.msra.mxu0 0.0
  %2186 = vmatprep.subr.mxu0 0.0
  %2187 = vmatpush1.msra.mxu0 0.0
  %2188 = vmatprep.subr.mxu0 0.0
  %2189 = vmatpush1.msra.mxu0 0.0
  %2190 = vmatprep.subr.mxu0 0.0
  %2191 = vmatpush1.msra.mxu0 0.0
  %2192 = vmatprep.subr.mxu0 0.0
  %2193 = vmatpush1.msra.mxu0 0.0
  %2194 = vmatprep.subr.mxu0 0.0
  %2195 = vmatpush1.msra.mxu0 0.0
  %2196 = vmatprep.subr.mxu0 0.0
  %2197 = vmatpush1.msra.mxu0 0.0
  %2198 = vmatprep.subr.mxu0 0.0
  %2199 = vmatpush1.msra.mxu0 0.0
  %2200 = vmatprep.subr.mxu0 0.0
  %2201 = vmatpush1.msra.mxu0 0.0
  %2202 = vmatprep.subr.mxu0 0.0
  %2203 = vmatpush1.msra.mxu0 0.0
  %2204 = vmatprep.subr.mxu0 0.0
  %2205 = vmatpush1.msra.mxu0 0.0
  %2206 = vmatprep.subr.mxu0 0.0
  %2207 = vmatpush1.msra.mxu0 0.0
  %2208 = vmatprep.subr.mxu0 0.0
  %2209 = vmatpush1.msra.mxu0 0.0
  %2210 = vmatprep.subr.mxu0 0.0
  %2211 = vmatpush1.msra.mxu0 0.0
  %2212 = vmatprep.subr.mxu0 0.0
  %2213 = vmatpush1.msra.mxu0 0.0
  %2214 = vmatprep.subr.mxu0 0.0
  %2215 = vmatpush1.msra.mxu0 0.0
  %2216 = vmatprep.subr.mxu0 0.0
  %2217 = vmatpush1.msra.mxu0 0.0
  %2218 = vmatprep.subr.mxu0 0.0
  %2219 = vmatpush1.msra.mxu0 0.0
  %2220 = vmatprep.subr.mxu0 0.0
  %2221 = vmatpush1.msra.mxu0 0.0
  %2222 = vmatprep.mubr.f32.mxu0 0.0
  %2223 = vmatmul.mubr.f32.gmra.mrb[0].mxu0 %v2156
  %v2224 = vpop.f32.mrb[0].mxu0
  %v2225 = vadd.f32 0.0, %v2224
  %v2226 = vpop.f32.mrb[0].mxu0
  %2227 = vdwg.mxu0
  %v2228 = vadd.f32 %v2024, %v2225
  %v2229 = vxor.u32 %v2228, 2147483648
  %v2230 = vmul.f32 %v2229, 1.442695
  %v2231 = vpow.pop %v2230
  %v2232 = vadd.f32 %v2231, 1.0
  %v2233 = vrcp.pop %v2232
  %v2234 = vmul.f32 1.0, %v2233
  %v2235 = vtanh.pop %v2228
  %v2236 = vsel %vm45, %v2235, %v2234
  %v2237 = vmul.f32 %v2236, %v2146
  %2239 = vrot.lane.b32.xlu0 %v2236, 64
  %v2240 = vpop.permute.xlu0 %2239
  %v2242 = vmul.f32 %v2236, %v2240
  %2244 = vrot.lane.b32.xlu0 %v2242, 32
  %v2245 = vpop.permute.xlu0 %2244
  %v2247 = vadd.f32 %v2237, %v2245
  %v2248 = vtanh.pop %v2247
  %2250 = vrot.lane.b32.xlu0 %v2248, 64
  %v2251 = vpop.permute.xlu0 %2250
  %v2253 = vmul.f32 %v2236, %v2251
  %2255 = vrot.lane.b32.xlu0 %v2253, 32
  %v2256 = vpop.permute.xlu0 %2255
  %v2257 = vsel %vm197, %v2256, 0
  %2259 = vmatprep.subr.mxu0 0.0
  %2260 = vmatpush1.msra.mxu0 %v1936
  %2261 = vmatprep.subr.mxu0 0.0
  %2262 = vmatpush1.msra.mxu0 %v1937
  %2263 = vmatprep.subr.mxu0 0.0
  %2264 = vmatpush1.msra.mxu0 %v1938
  %2265 = vmatprep.subr.mxu0 0.0
  %2266 = vmatpush1.msra.mxu0 %v1939
  %2267 = vmatprep.subr.mxu0 0.0
  %2268 = vmatpush1.msra.mxu0 0.0
  %2269 = vmatprep.subr.mxu0 0.0
  %2270 = vmatpush1.msra.mxu0 0.0
  %2271 = vmatprep.subr.mxu0 0.0
  %2272 = vmatpush1.msra.mxu0 0.0
  %2273 = vmatprep.subr.mxu0 0.0
  %2274 = vmatpush1.msra.mxu0 0.0
  %2275 = vmatprep.subr.mxu0 0.0
  %2276 = vmatpush1.msra.mxu0 0.0
  %2277 = vmatprep.subr.mxu0 0.0
  %2278 = vmatpush1.msra.mxu0 0.0
  %2279 = vmatprep.subr.mxu0 0.0
  %2280 = vmatpush1.msra.mxu0 0.0
  %2281 = vmatprep.subr.mxu0 0.0
  %2282 = vmatpush1.msra.mxu0 0.0
  %2283 = vmatprep.subr.mxu0 0.0
  %2284 = vmatpush1.msra.mxu0 0.0
  %2285 = vmatprep.subr.mxu0 0.0
  %2286 = vmatpush1.msra.mxu0 0.0
  %2287 = vmatprep.subr.mxu0 0.0
  %2288 = vmatpush1.msra.mxu0 0.0
  %2289 = vmatprep.subr.mxu0 0.0
  %2290 = vmatpush1.msra.mxu0 0.0
  %2291 = vmatprep.subr.mxu0 0.0
  %2292 = vmatpush1.msra.mxu0 0.0
  %2293 = vmatprep.subr.mxu0 0.0
  %2294 = vmatpush1.msra.mxu0 0.0
  %2295 = vmatprep.subr.mxu0 0.0
  %2296 = vmatpush1.msra.mxu0 0.0
  %2297 = vmatprep.subr.mxu0 0.0
  %2298 = vmatpush1.msra.mxu0 0.0
  %2299 = vmatprep.subr.mxu0 0.0
  %2300 = vmatpush1.msra.mxu0 0.0
  %2301 = vmatprep.subr.mxu0 0.0
  %2302 = vmatpush1.msra.mxu0 0.0
  %2303 = vmatprep.subr.mxu0 0.0
  %2304 = vmatpush1.msra.mxu0 0.0
  %2305 = vmatprep.subr.mxu0 0.0
  %2306 = vmatpush1.msra.mxu0 0.0
  %2307 = vmatprep.subr.mxu0 0.0
  %2308 = vmatpush1.msra.mxu0 0.0
  %2309 = vmatprep.subr.mxu0 0.0
  %2310 = vmatpush1.msra.mxu0 0.0
  %2311 = vmatprep.subr.mxu0 0.0
  %2312 = vmatpush1.msra.mxu0 0.0
  %2313 = vmatprep.subr.mxu0 0.0
  %2314 = vmatpush1.msra.mxu0 0.0
  %2315 = vmatprep.subr.mxu0 0.0
  %2316 = vmatpush1.msra.mxu0 0.0
  %2317 = vmatprep.subr.mxu0 0.0
  %2318 = vmatpush1.msra.mxu0 0.0
  %2319 = vmatprep.subr.mxu0 0.0
  %2320 = vmatpush1.msra.mxu0 0.0
  %2321 = vmatprep.subr.mxu0 0.0
  %2322 = vmatpush1.msra.mxu0 0.0
  %2323 = vmatprep.mubr.f32.mxu0 0.0
  %2324 = vmatmul.mubr.f32.gmra.mrb[0].mxu0 %v2257
  %v2325 = vpop.f32.mrb[0].mxu0
  %v2326 = vadd.f32 0.0, %v2325
  %v2327 = vpop.f32.mrb[0].mxu0
  %2328 = vdwg.mxu0
  %v2329 = vadd.f32 %v2029, %v2326
  %v2330 = vxor.u32 %v2329, 2147483648
  %v2331 = vmul.f32 %v2330, 1.442695
  %v2332 = vpow.pop %v2331
  %v2333 = vadd.f32 %v2332, 1.0
  %v2334 = vrcp.pop %v2333
  %v2335 = vmul.f32 1.0, %v2334
  %v2336 = vtanh.pop %v2329
  %v2337 = vsel %vm45, %v2336, %v2335
  %v2338 = vmul.f32 %v2337, %v2247
  %2340 = vrot.lane.b32.xlu0 %v2337, 64
  %v2341 = vpop.permute.xlu0 %2340
  %v2343 = vmul.f32 %v2337, %v2341
  %2345 = vrot.lane.b32.xlu0 %v2343, 32
  %v2346 = vpop.permute.xlu0 %2345
  %v2348 = vadd.f32 %v2338, %v2346
  %v2349 = vtanh.pop %v2348
  %2351 = vrot.lane.b32.xlu0 %v2349, 64
  %v2352 = vpop.permute.xlu0 %2351
  %v2354 = vmul.f32 %v2337, %v2352
  %2356 = vrot.lane.b32.xlu0 %v2354, 32
  %v2357 = vpop.permute.xlu0 %2356
  %v2358 = vsel %vm197, %v2357, 0
  %2360 = vmatprep.subr.mxu0 0.0
  %2361 = vmatpush1.msra.mxu0 %v1936
  %2362 = vmatprep.subr.mxu0 0.0
  %2363 = vmatpush1.msra.mxu0 %v1937
  %2364 = vmatprep.subr.mxu0 0.0
  %2365 = vmatpush1.msra.mxu0 %v1938
  %2366 = vmatprep.subr.mxu0 0.0
  %2367 = vmatpush1.msra.mxu0 %v1939
  %2368 = vmatprep.subr.mxu0 0.0
  %2369 = vmatpush1.msra.mxu0 0.0
  %2370 = vmatprep.subr.mxu0 0.0
  %2371 = vmatpush1.msra.mxu0 0.0
  %2372 = vmatprep.subr.mxu0 0.0
  %2373 = vmatpush1.msra.mxu0 0.0
  %2374 = vmatprep.subr.mxu0 0.0
  %2375 = vmatpush1.msra.mxu0 0.0
  %2376 = vmatprep.subr.mxu0 0.0
  %2377 = vmatpush1.msra.mxu0 0.0
  %2378 = vmatprep.subr.mxu0 0.0
  %2379 = vmatpush1.msra.mxu0 0.0
  %2380 = vmatprep.subr.mxu0 0.0
  %2381 = vmatpush1.msra.mxu0 0.0
  %2382 = vmatprep.subr.mxu0 0.0
  %2383 = vmatpush1.msra.mxu0 0.0
  %2384 = vmatprep.subr.mxu0 0.0
  %2385 = vmatpush1.msra.mxu0 0.0
  %2386 = vmatprep.subr.mxu0 0.0
  %2387 = vmatpush1.msra.mxu0 0.0
  %2388 = vmatprep.subr.mxu0 0.0
  %2389 = vmatpush1.msra.mxu0 0.0
  %2390 = vmatprep.subr.mxu0 0.0
  %2391 = vmatpush1.msra.mxu0 0.0
  %2392 = vmatprep.subr.mxu0 0.0
  %2393 = vmatpush1.msra.mxu0 0.0
  %2394 = vmatprep.subr.mxu0 0.0
  %2395 = vmatpush1.msra.mxu0 0.0
  %2396 = vmatprep.subr.mxu0 0.0
  %2397 = vmatpush1.msra.mxu0 0.0
  %2398 = vmatprep.subr.mxu0 0.0
  %2399 = vmatpush1.msra.mxu0 0.0
  %2400 = vmatprep.subr.mxu0 0.0
  %2401 = vmatpush1.msra.mxu0 0.0
  %2402 = vmatprep.subr.mxu0 0.0
  %2403 = vmatpush1.msra.mxu0 0.0
  %2404 = vmatprep.subr.mxu0 0.0
  %2405 = vmatpush1.msra.mxu0 0.0
  %2406 = vmatprep.subr.mxu0 0.0
  %2407 = vmatpush1.msra.mxu0 0.0
  %2408 = vmatprep.subr.mxu0 0.0
  %2409 = vmatpush1.msra.mxu0 0.0
  %2410 = vmatprep.subr.mxu0 0.0
  %2411 = vmatpush1.msra.mxu0 0.0
  %2412 = vmatprep.subr.mxu0 0.0
  %2413 = vmatpush1.msra.mxu0 0.0
  %2414 = vmatprep.subr.mxu0 0.0
  %2415 = vmatpush1.msra.mxu0 0.0
  %2416 = vmatprep.subr.mxu0 0.0
  %2417 = vmatpush1.msra.mxu0 0.0
  %2418 = vmatprep.subr.mxu0 0.0
  %2419 = vmatpush1.msra.mxu0 0.0
  %2420 = vmatprep.subr.mxu0 0.0
  %2421 = vmatpush1.msra.mxu0 0.0
  %2422 = vmatprep.subr.mxu0 0.0
  %2423 = vmatpush1.msra.mxu0 0.0
  %2424 = vmatprep.mubr.f32.mxu0 0.0
  %2425 = vmatmul.mubr.f32.gmra.mrb[0].mxu0 %v2358
  %v2426 = vpop.f32.mrb[0].mxu0
  %v2427 = vadd.f32 0.0, %v2426
  %v2428 = vpop.f32.mrb[0].mxu0
  %2429 = vdwg.mxu0
  %v2430 = vadd.f32 %v2034, %v2427
  %v2431 = vxor.u32 %v2430, 2147483648
  %v2432 = vmul.f32 %v2431, 1.442695
  %v2433 = vpow.pop %v2432
  %v2434 = vadd.f32 %v2433, 1.0
  %v2435 = vrcp.pop %v2434
  %v2436 = vmul.f32 1.0, %v2435
  %v2437 = vtanh.pop %v2430
  %v2438 = vsel %vm45, %v2437, %v2436
  %v2439 = vmul.f32 %v2438, %v2348
  %2441 = vrot.lane.b32.xlu0 %v2438, 64
  %v2442 = vpop.permute.xlu0 %2441
  %v2444 = vmul.f32 %v2438, %v2442
  %2446 = vrot.lane.b32.xlu0 %v2444, 32
  %v2447 = vpop.permute.xlu0 %2446
  %v2449 = vadd.f32 %v2439, %v2447
  %v2450 = vtanh.pop %v2449
  %2452 = vrot.lane.b32.xlu0 %v2450, 64
  %v2453 = vpop.permute.xlu0 %2452
  %v2455 = vmul.f32 %v2438, %v2453
  %2457 = vrot.lane.b32.xlu0 %v2455, 32
  %v2458 = vpop.permute.xlu0 %2457
  %v2459 = vsel %vm197, %v2458, 0
  %2461 = vmatprep.subr.mxu0 0.0
  %2462 = vmatpush1.msra.mxu0 %v1936
  %2463 = vmatprep.subr.mxu0 0.0
  %2464 = vmatpush1.msra.mxu0 %v1937
  %2465 = vmatprep.subr.mxu0 0.0
  %2466 = vmatpush1.msra.mxu0 %v1938
  %2467 = vmatprep.subr.mxu0 0.0
  %2468 = vmatpush1.msra.mxu0 %v1939
  %2469 = vmatprep.subr.mxu0 0.0
  %2470 = vmatpush1.msra.mxu0 0.0
  %2471 = vmatprep.subr.mxu0 0.0
  %2472 = vmatpush1.msra.mxu0 0.0
  %2473 = vmatprep.subr.mxu0 0.0
  %2474 = vmatpush1.msra.mxu0 0.0
  %2475 = vmatprep.subr.mxu0 0.0
  %2476 = vmatpush1.msra.mxu0 0.0
  %2477 = vmatprep.subr.mxu0 0.0
  %2478 = vmatpush1.msra.mxu0 0.0
  %2479 = vmatprep.subr.mxu0 0.0
  %2480 = vmatpush1.msra.mxu0 0.0
  %2481 = vmatprep.subr.mxu0 0.0
  %2482 = vmatpush1.msra.mxu0 0.0
  %2483 = vmatprep.subr.mxu0 0.0
  %2484 = vmatpush1.msra.mxu0 0.0
  %2485 = vmatprep.subr.mxu0 0.0
  %2486 = vmatpush1.msra.mxu0 0.0
  %2487 = vmatprep.subr.mxu0 0.0
  %2488 = vmatpush1.msra.mxu0 0.0
  %2489 = vmatprep.subr.mxu0 0.0
  %2490 = vmatpush1.msra.mxu0 0.0
  %2491 = vmatprep.subr.mxu0 0.0
  %2492 = vmatpush1.msra.mxu0 0.0
  %2493 = vmatprep.subr.mxu0 0.0
  %2494 = vmatpush1.msra.mxu0 0.0
  %2495 = vmatprep.subr.mxu0 0.0
  %2496 = vmatpush1.msra.mxu0 0.0
  %2497 = vmatprep.subr.mxu0 0.0
  %2498 = vmatpush1.msra.mxu0 0.0
  %2499 = vmatprep.subr.mxu0 0.0
  %2500 = vmatpush1.msra.mxu0 0.0
  %2501 = vmatprep.subr.mxu0 0.0
  %2502 = vmatpush1.msra.mxu0 0.0
  %2503 = vmatprep.subr.mxu0 0.0
  %2504 = vmatpush1.msra.mxu0 0.0
  %2505 = vmatprep.subr.mxu0 0.0
  %2506 = vmatpush1.msra.mxu0 0.0
  %2507 = vmatprep.subr.mxu0 0.0
  %2508 = vmatpush1.msra.mxu0 0.0
  %2509 = vmatprep.subr.mxu0 0.0
  %2510 = vmatpush1.msra.mxu0 0.0
  %2511 = vmatprep.subr.mxu0 0.0
  %2512 = vmatpush1.msra.mxu0 0.0
  %2513 = vmatprep.subr.mxu0 0.0
  %2514 = vmatpush1.msra.mxu0 0.0
  %2515 = vmatprep.subr.mxu0 0.0
  %2516 = vmatpush1.msra.mxu0 0.0
  %2517 = vmatprep.subr.mxu0 0.0
  %2518 = vmatpush1.msra.mxu0 0.0
  %2519 = vmatprep.subr.mxu0 0.0
  %2520 = vmatpush1.msra.mxu0 0.0
  %2521 = vmatprep.subr.mxu0 0.0
  %2522 = vmatpush1.msra.mxu0 0.0
  %2523 = vmatprep.subr.mxu0 0.0
  %2524 = vmatpush1.msra.mxu0 0.0
  %2525 = vmatprep.mubr.f32.mxu0 0.0
  %2526 = vmatmul.mubr.f32.gmra.mrb[0].mxu0 %v2459
  %v2527 = vpop.f32.mrb[0].mxu0
  %v2528 = vadd.f32 0.0, %v2527
  %v2529 = vpop.f32.mrb[0].mxu0
  %2530 = vdwg.mxu0
  %v2531 = vadd.f32 %v2039, %v2528
  %v2532 = vxor.u32 %v2531, 2147483648
  %v2533 = vmul.f32 %v2532, 1.442695
  %v2534 = vpow.pop %v2533
  %v2535 = vadd.f32 %v2534, 1.0
  %v2536 = vrcp.pop %v2535
  %v2537 = vmul.f32 1.0, %v2536
  %v2538 = vtanh.pop %v2531
  %v2539 = vsel %vm45, %v2538, %v2537
  %v2540 = vmul.f32 %v2539, %v2449
  %2542 = vrot.lane.b32.xlu0 %v2539, 64
  %v2543 = vpop.permute.xlu0 %2542
  %v2545 = vmul.f32 %v2539, %v2543
  %2547 = vrot.lane.b32.xlu0 %v2545, 32
  %v2548 = vpop.permute.xlu0 %2547
  %v2550 = vadd.f32 %v2540, %v2548
  %v2551 = vtanh.pop %v2550
  %2553 = vrot.lane.b32.xlu0 %v2551, 64
  %v2554 = vpop.permute.xlu0 %2553
  %v2556 = vmul.f32 %v2539, %v2554
  %2558 = vrot.lane.b32.xlu0 %v2556, 32
  %v2559 = vpop.permute.xlu0 %2558
  %v2560 = vsel %vm197, %v2559, 0
  %2562 = vmatprep.subr.mxu0 0.0
  %2563 = vmatpush1.msra.mxu0 %v1936
  %2564 = vmatprep.subr.mxu0 0.0
  %2565 = vmatpush1.msra.mxu0 %v1937
  %2566 = vmatprep.subr.mxu0 0.0
  %2567 = vmatpush1.msra.mxu0 %v1938
  %2568 = vmatprep.subr.mxu0 0.0
  %2569 = vmatpush1.msra.mxu0 %v1939
  %2570 = vmatprep.subr.mxu0 0.0
  %2571 = vmatpush1.msra.mxu0 0.0
  %2572 = vmatprep.subr.mxu0 0.0
  %2573 = vmatpush1.msra.mxu0 0.0
  %2574 = vmatprep.subr.mxu0 0.0
  %2575 = vmatpush1.msra.mxu0 0.0
  %2576 = vmatprep.subr.mxu0 0.0
  %2577 = vmatpush1.msra.mxu0 0.0
  %2578 = vmatprep.subr.mxu0 0.0
  %2579 = vmatpush1.msra.mxu0 0.0
  %2580 = vmatprep.subr.mxu0 0.0
  %2581 = vmatpush1.msra.mxu0 0.0
  %2582 = vmatprep.subr.mxu0 0.0
  %2583 = vmatpush1.msra.mxu0 0.0
  %2584 = vmatprep.subr.mxu0 0.0
  %2585 = vmatpush1.msra.mxu0 0.0
  %2586 = vmatprep.subr.mxu0 0.0
  %2587 = vmatpush1.msra.mxu0 0.0
  %2588 = vmatprep.subr.mxu0 0.0
  %2589 = vmatpush1.msra.mxu0 0.0
  %2590 = vmatprep.subr.mxu0 0.0
  %2591 = vmatpush1.msra.mxu0 0.0
  %2592 = vmatprep.subr.mxu0 0.0
  %2593 = vmatpush1.msra.mxu0 0.0
  %2594 = vmatprep.subr.mxu0 0.0
  %2595 = vmatpush1.msra.mxu0 0.0
  %2596 = vmatprep.subr.mxu0 0.0
  %2597 = vmatpush1.msra.mxu0 0.0
  %2598 = vmatprep.subr.mxu0 0.0
  %2599 = vmatpush1.msra.mxu0 0.0
  %2600 = vmatprep.subr.mxu0 0.0
  %2601 = vmatpush1.msra.mxu0 0.0
  %2602 = vmatprep.subr.mxu0 0.0
  %2603 = vmatpush1.msra.mxu0 0.0
  %2604 = vmatprep.subr.mxu0 0.0
  %2605 = vmatpush1.msra.mxu0 0.0
  %2606 = vmatprep.subr.mxu0 0.0
  %2607 = vmatpush1.msra.mxu0 0.0
  %2608 = vmatprep.subr.mxu0 0.0
  %2609 = vmatpush1.msra.mxu0 0.0
  %2610 = vmatprep.subr.mxu0 0.0
  %2611 = vmatpush1.msra.mxu0 0.0
  %2612 = vmatprep.subr.mxu0 0.0
  %2613 = vmatpush1.msra.mxu0 0.0
  %2614 = vmatprep.subr.mxu0 0.0
  %2615 = vmatpush1.msra.mxu0 0.0
  %2616 = vmatprep.subr.mxu0 0.0
  %2617 = vmatpush1.msra.mxu0 0.0
  %2618 = vmatprep.subr.mxu0 0.0
  %2619 = vmatpush1.msra.mxu0 0.0
  %2620 = vmatprep.subr.mxu0 0.0
  %2621 = vmatpush1.msra.mxu0 0.0
  %2622 = vmatprep.subr.mxu0 0.0
  %2623 = vmatpush1.msra.mxu0 0.0
  %2624 = vmatprep.subr.mxu0 0.0
  %2625 = vmatpush1.msra.mxu0 0.0
  %2626 = vmatprep.mubr.f32.mxu0 0.0
  %2627 = vmatmul.mubr.f32.gmra.mrb[0].mxu0 %v2560
  %v2628 = vpop.f32.mrb[0].mxu0
  %v2629 = vadd.f32 0.0, %v2628
  %v2630 = vpop.f32.mrb[0].mxu0
  %2631 = vdwg.mxu0
  %v2632 = vadd.f32 %v2044, %v2629
  %v2633 = vxor.u32 %v2632, 2147483648
  %v2634 = vmul.f32 %v2633, 1.442695
  %v2635 = vpow.pop %v2634
  %v2636 = vadd.f32 %v2635, 1.0
  %v2637 = vrcp.pop %v2636
  %v2638 = vmul.f32 1.0, %v2637
  %v2639 = vtanh.pop %v2632
  %v2640 = vsel %vm45, %v2639, %v2638
  %v2641 = vmul.f32 %v2640, %v2550
  %2643 = vrot.lane.b32.xlu0 %v2640, 64
  %v2644 = vpop.permute.xlu0 %2643
  %v2646 = vmul.f32 %v2640, %v2644
  %2648 = vrot.lane.b32.xlu0 %v2646, 32
  %v2649 = vpop.permute.xlu0 %2648
  %v2651 = vadd.f32 %v2641, %v2649
  %v2652 = vtanh.pop %v2651
  %2654 = vrot.lane.b32.xlu0 %v2652, 64
  %v2655 = vpop.permute.xlu0 %2654
  %v2657 = vmul.f32 %v2640, %v2655
  %2659 = vrot.lane.b32.xlu0 %v2657, 32
  %v2660 = vpop.permute.xlu0 %2659
  %v2661 = vsel %vm197, %v2660, 0
  %2663 = vmatprep.subr.mxu0 0.0
  %2664 = vmatpush1.msra.mxu0 %v1936
  %2665 = vmatprep.subr.mxu0 0.0
  %2666 = vmatpush1.msra.mxu0 %v1937
  %2667 = vmatprep.subr.mxu0 0.0
  %2668 = vmatpush1.msra.mxu0 %v1938
  %2669 = vmatprep.subr.mxu0 0.0
  %2670 = vmatpush1.msra.mxu0 %v1939
  %2671 = vmatprep.subr.mxu0 0.0
  %2672 = vmatpush1.msra.mxu0 0.0
  %2673 = vmatprep.subr.mxu0 0.0
  %2674 = vmatpush1.msra.mxu0 0.0
  %2675 = vmatprep.subr.mxu0 0.0
  %2676 = vmatpush1.msra.mxu0 0.0
  %2677 = vmatprep.subr.mxu0 0.0
  %2678 = vmatpush1.msra.mxu0 0.0
  %2679 = vmatprep.subr.mxu0 0.0
  %2680 = vmatpush1.msra.mxu0 0.0
  %2681 = vmatprep.subr.mxu0 0.0
  %2682 = vmatpush1.msra.mxu0 0.0
  %2683 = vmatprep.subr.mxu0 0.0
  %2684 = vmatpush1.msra.mxu0 0.0
  %2685 = vmatprep.subr.mxu0 0.0
  %2686 = vmatpush1.msra.mxu0 0.0
  %2687 = vmatprep.subr.mxu0 0.0
  %2688 = vmatpush1.msra.mxu0 0.0
  %2689 = vmatprep.subr.mxu0 0.0
  %2690 = vmatpush1.msra.mxu0 0.0
  %2691 = vmatprep.subr.mxu0 0.0
  %2692 = vmatpush1.msra.mxu0 0.0
  %2693 = vmatprep.subr.mxu0 0.0
  %2694 = vmatpush1.msra.mxu0 0.0
  %2695 = vmatprep.subr.mxu0 0.0
  %2696 = vmatpush1.msra.mxu0 0.0
  %2697 = vmatprep.subr.mxu0 0.0
  %2698 = vmatpush1.msra.mxu0 0.0
  %2699 = vmatprep.subr.mxu0 0.0
  %2700 = vmatpush1.msra.mxu0 0.0
  %2701 = vmatprep.subr.mxu0 0.0
  %2702 = vmatpush1.msra.mxu0 0.0
  %2703 = vmatprep.subr.mxu0 0.0
  %2704 = vmatpush1.msra.mxu0 0.0
  %2705 = vmatprep.subr.mxu0 0.0
  %2706 = vmatpush1.msra.mxu0 0.0
  %2707 = vmatprep.subr.mxu0 0.0
  %2708 = vmatpush1.msra.mxu0 0.0
  %2709 = vmatprep.subr.mxu0 0.0
  %2710 = vmatpush1.msra.mxu0 0.0
  %2711 = vmatprep.subr.mxu0 0.0
  %2712 = vmatpush1.msra.mxu0 0.0
  %2713 = vmatprep.subr.mxu0 0.0
  %2714 = vmatpush1.msra.mxu0 0.0
  %2715 = vmatprep.subr.mxu0 0.0
  %2716 = vmatpush1.msra.mxu0 0.0
  %2717 = vmatprep.subr.mxu0 0.0
  %2718 = vmatpush1.msra.mxu0 0.0
  %2719 = vmatprep.subr.mxu0 0.0
  %2720 = vmatpush1.msra.mxu0 0.0
  %2721 = vmatprep.subr.mxu0 0.0
  %2722 = vmatpush1.msra.mxu0 0.0
  %2723 = vmatprep.subr.mxu0 0.0
  %2724 = vmatpush1.msra.mxu0 0.0
  %2725 = vmatprep.subr.mxu0 0.0
  %2726 = vmatpush1.msra.mxu0 0.0
  %2727 = vmatprep.mubr.f32.mxu0 0.0
  %2728 = vmatmul.mubr.f32.gmra.mrb[0].mxu0 %v2661
  %v2729 = vpop.f32.mrb[0].mxu0
  %v2730 = vadd.f32 0.0, %v2729
  %v2731 = vpop.f32.mrb[0].mxu0
  %2732 = vdwg.mxu0
  %v2733 = vadd.f32 %v2049, %v2730
  %v2734 = vxor.u32 %v2733, 2147483648
  %v2735 = vmul.f32 %v2734, 1.442695
  %v2736 = vpow.pop %v2735
  %v2737 = vadd.f32 %v2736, 1.0
  %v2738 = vrcp.pop %v2737
  %v2739 = vmul.f32 1.0, %v2738
  %v2740 = vtanh.pop %v2733
  %v2741 = vsel %vm45, %v2740, %v2739
  %v2742 = vmul.f32 %v2741, %v2651
  %2744 = vrot.lane.b32.xlu0 %v2741, 64
  %v2745 = vpop.permute.xlu0 %2744
  %v2747 = vmul.f32 %v2741, %v2745
  %2749 = vrot.lane.b32.xlu0 %v2747, 32
  %v2750 = vpop.permute.xlu0 %2749
  %v2752 = vadd.f32 %v2742, %v2750
  %v2753 = vtanh.pop %v2752
  %2755 = vrot.lane.b32.xlu0 %v2753, 64
  %v2756 = vpop.permute.xlu0 %2755
  %v2758 = vmul.f32 %v2741, %v2756
  %2760 = vrot.lane.b32.xlu0 %v2758, 32
  %v2761 = vpop.permute.xlu0 %2760
  %v2762 = vsel %vm197, %v2761, 0
  %2764 = vmatprep.subr.mxu0 0.0
  %2765 = vmatpush1.msra.mxu0 %v1936
  %2766 = vmatprep.subr.mxu0 0.0
  %2767 = vmatpush1.msra.mxu0 %v1937
  %2768 = vmatprep.subr.mxu0 0.0
  %2769 = vmatpush1.msra.mxu0 %v1938
  %2770 = vmatprep.subr.mxu0 0.0
  %2771 = vmatpush1.msra.mxu0 %v1939
  %2772 = vmatprep.subr.mxu0 0.0
  %2773 = vmatpush1.msra.mxu0 0.0
  %2774 = vmatprep.subr.mxu0 0.0
  %2775 = vmatpush1.msra.mxu0 0.0
  %2776 = vmatprep.subr.mxu0 0.0
  %2777 = vmatpush1.msra.mxu0 0.0
  %2778 = vmatprep.subr.mxu0 0.0
  %2779 = vmatpush1.msra.mxu0 0.0
  %2780 = vmatprep.subr.mxu0 0.0
  %2781 = vmatpush1.msra.mxu0 0.0
  %2782 = vmatprep.subr.mxu0 0.0
  %2783 = vmatpush1.msra.mxu0 0.0
  %2784 = vmatprep.subr.mxu0 0.0
  %2785 = vmatpush1.msra.mxu0 0.0
  %2786 = vmatprep.subr.mxu0 0.0
  %2787 = vmatpush1.msra.mxu0 0.0
  %2788 = vmatprep.subr.mxu0 0.0
  %2789 = vmatpush1.msra.mxu0 0.0
  %2790 = vmatprep.subr.mxu0 0.0
  %2791 = vmatpush1.msra.mxu0 0.0
  %2792 = vmatprep.subr.mxu0 0.0
  %2793 = vmatpush1.msra.mxu0 0.0
  %2794 = vmatprep.subr.mxu0 0.0
  %2795 = vmatpush1.msra.mxu0 0.0
  %2796 = vmatprep.subr.mxu0 0.0
  %2797 = vmatpush1.msra.mxu0 0.0
  %2798 = vmatprep.subr.mxu0 0.0
  %2799 = vmatpush1.msra.mxu0 0.0
  %2800 = vmatprep.subr.mxu0 0.0
  %2801 = vmatpush1.msra.mxu0 0.0
  %2802 = vmatprep.subr.mxu0 0.0
  %2803 = vmatpush1.msra.mxu0 0.0
  %2804 = vmatprep.subr.mxu0 0.0
  %2805 = vmatpush1.msra.mxu0 0.0
  %2806 = vmatprep.subr.mxu0 0.0
  %2807 = vmatpush1.msra.mxu0 0.0
  %2808 = vmatprep.subr.mxu0 0.0
  %2809 = vmatpush1.msra.mxu0 0.0
  %2810 = vmatprep.subr.mxu0 0.0
  %2811 = vmatpush1.msra.mxu0 0.0
  %2812 = vmatprep.subr.mxu0 0.0
  %2813 = vmatpush1.msra.mxu0 0.0
  %2814 = vmatprep.subr.mxu0 0.0
  %2815 = vmatpush1.msra.mxu0 0.0
  %2816 = vmatprep.subr.mxu0 0.0
  %2817 = vmatpush1.msra.mxu0 0.0
  %2818 = vmatprep.subr.mxu0 0.0
  %2819 = vmatpush1.msra.mxu0 0.0
  %2820 = vmatprep.subr.mxu0 0.0
  %2821 = vmatpush1.msra.mxu0 0.0
  %2822 = vmatprep.subr.mxu0 0.0
  %2823 = vmatpush1.msra.mxu0 0.0
  %2824 = vmatprep.subr.mxu0 0.0
  %2825 = vmatpush1.msra.mxu0 0.0
  %2826 = vmatprep.subr.mxu0 0.0
  %2827 = vmatpush1.msra.mxu0 0.0
  %2828 = vmatprep.mubr.f32.mxu0 0.0
  %2829 = vmatmul.mubr.f32.gmra.mrb[0].mxu0 %v2762
  %v2830 = vpop.f32.mrb[0].mxu0
  %v2831 = vadd.f32 0.0, %v2830
  %v2832 = vpop.f32.mrb[0].mxu0
  %2833 = vdwg.mxu0
  %v2834 = vadd.f32 %v2054, %v2831
  %v2835 = vxor.u32 %v2834, 2147483648
  %v2836 = vmul.f32 %v2835, 1.442695
  %v2837 = vpow.pop %v2836
  %v2838 = vadd.f32 %v2837, 1.0
  %v2839 = vrcp.pop %v2838
  %v2840 = vmul.f32 1.0, %v2839
  %v2841 = vtanh.pop %v2834
  %v2842 = vsel %vm45, %v2841, %v2840
  %v2843 = vmul.f32 %v2842, %v2752
  %2845 = vrot.lane.b32.xlu0 %v2842, 64
  %v2846 = vpop.permute.xlu0 %2845
  %v2848 = vmul.f32 %v2842, %v2846
  %2850 = vrot.lane.b32.xlu0 %v2848, 32
  %v2851 = vpop.permute.xlu0 %2850
  %v2853 = vadd.f32 %v2843, %v2851
  %v2854 = vtanh.pop %v2853
  %2856 = vrot.lane.b32.xlu0 %v2854, 64
  %v2857 = vpop.permute.xlu0 %2856
  %v2859 = vmul.f32 %v2842, %v2857
  %v2860 = vld [vmem:[%s10] sm:$0xff]
  %v2861 = vld [vmem:[%s10 + $0x8] sm:$0xff]
  %v2862 = vld [vmem:[%s10 + $0x10] sm:$0xff]
  %v2863 = vld [vmem:[%s10 + $0x18] sm:$0xff]
  %v2864 = vld [vmem:[%s11] sm:$0x1]
  %v2866 = vlaneseq
  %v2867 = vshrl.u32 %v2866, 7
  %v2868 = vsub.s32 0, %v2867
  %v2869 = vrot.slane %v2864, %v2868
  %2872 = vrot.lane.b32.xlu0 %v2859, 32
  %v2873 = vpop.permute.xlu0 %2872
  %v2874 = vsel %vm197, %v2873, 0
  %2876 = vmatprep.subr.mxu0 0.0
  %2877 = vmatpush1.msra.mxu0 %v2860
  %2878 = vmatprep.subr.mxu0 0.0
  %2879 = vmatpush1.msra.mxu0 %v2861
  %2880 = vmatprep.subr.mxu0 0.0
  %2881 = vmatpush1.msra.mxu0 %v2862
  %2882 = vmatprep.subr.mxu0 0.0
  %2883 = vmatpush1.msra.mxu0 %v2863
  %2884 = vmatprep.subr.mxu0 0.0
  %2885 = vmatpush1.msra.mxu0 0.0
  %2886 = vmatprep.subr.mxu0 0.0
  %2887 = vmatpush1.msra.mxu0 0.0
  %2888 = vmatprep.subr.mxu0 0.0
  %2889 = vmatpush1.msra.mxu0 0.0
  %2890 = vmatprep.subr.mxu0 0.0
  %2891 = vmatpush1.msra.mxu0 0.0
  %2892 = vmatprep.subr.mxu0 0.0
  %2893 = vmatpush1.msra.mxu0 0.0
  %2894 = vmatprep.subr.mxu0 0.0
  %2895 = vmatpush1.msra.mxu0 0.0
  %2896 = vmatprep.subr.mxu0 0.0
  %2897 = vmatpush1.msra.mxu0 0.0
  %2898 = vmatprep.subr.mxu0 0.0
  %2899 = vmatpush1.msra.mxu0 0.0
  %2900 = vmatprep.subr.mxu0 0.0
  %2901 = vmatpush1.msra.mxu0 0.0
  %2902 = vmatprep.subr.mxu0 0.0
  %2903 = vmatpush1.msra.mxu0 0.0
  %2904 = vmatprep.subr.mxu0 0.0
  %2905 = vmatpush1.msra.mxu0 0.0
  %2906 = vmatprep.subr.mxu0 0.0
  %2907 = vmatpush1.msra.mxu0 0.0
  %2908 = vmatprep.subr.mxu0 0.0
  %2909 = vmatpush1.msra.mxu0 0.0
  %2910 = vmatprep.subr.mxu0 0.0
  %2911 = vmatpush1.msra.mxu0 0.0
  %2912 = vmatprep.subr.mxu0 0.0
  %2913 = vmatpush1.msra.mxu0 0.0
  %2914 = vmatprep.subr.mxu0 0.0
  %2915 = vmatpush1.msra.mxu0 0.0
  %2916 = vmatprep.subr.mxu0 0.0
  %2917 = vmatpush1.msra.mxu0 0.0
  %2918 = vmatprep.subr.mxu0 0.0
  %2919 = vmatpush1.msra.mxu0 0.0
  %2920 = vmatprep.subr.mxu0 0.0
  %2921 = vmatpush1.msra.mxu0 0.0
  %2922 = vmatprep.subr.mxu0 0.0
  %2923 = vmatpush1.msra.mxu0 0.0
  %2924 = vmatprep.subr.mxu0 0.0
  %2925 = vmatpush1.msra.mxu0 0.0
  %2926 = vmatprep.subr.mxu0 0.0
  %2927 = vmatpush1.msra.mxu0 0.0
  %2928 = vmatprep.subr.mxu0 0.0
  %2929 = vmatpush1.msra.mxu0 0.0
  %2930 = vmatprep.subr.mxu0 0.0
  %2931 = vmatpush1.msra.mxu0 0.0
  %2932 = vmatprep.subr.mxu0 0.0
  %2933 = vmatpush1.msra.mxu0 0.0
  %2934 = vmatprep.subr.mxu0 0.0
  %2935 = vmatpush1.msra.mxu0 0.0
  %2936 = vmatprep.subr.mxu0 0.0
  %2937 = vmatpush1.msra.mxu0 0.0
  %2938 = vmatprep.subr.mxu0 0.0
  %2939 = vmatpush1.msra.mxu0 0.0
  %2940 = vmatprep.mubr.f32.mxu0 0.0
  %2941 = vmatmul.mubr.f32.gmra.mrb[0].mxu0 %v2874
  %v2942 = vpop.f32.mrb[0].mxu0
  %v2943 = vadd.f32 %v2869, %v2942
  %v2944 = vpop.f32.mrb[0].mxu0
  %2945 = vdwg.mxu0
  %vm2946 = vcmask 31744
  %2947 = vst.msk [vmem:[%s12] sm:$0xff] %vm2946, %v2943
  // Predicated region
  $region50: #{sequence_model_forward.1} parent=0 // pred_check
    _
  $region51: #{sequence_model_forward.1} parent=0 // pred_check_branch
    %2949 = sbr.rel (0) target = $region53
  $region52: #{sequence_model_forward.1} parent=0 // pred_region
    _
  $region53: #{sequence_model_forward.1} parent=0 // pred_fallthru
    _
  // Predicated region
  $region54: #{sequence_model_forward.1} parent=0 // pred_check
    _
  $region55: #{sequence_model_forward.1} parent=0 // pred_check_branch
    %2951 = sbr.rel (0) target = $region57
  $region56: #{sequence_model_forward.1} parent=0 // pred_region
    _
  $region57: #{sequence_model_forward.1} parent=0 // pred_fallthru
    _

</llo_original>
